<compile_context>
chip_gen: v7x
topology: tpu7x:2x2x1
jax: 0.10.0
libtpu: 0.0.40
codegen_flags: <defaults>
</compile_context>

<pallas_src>
import jax
import jax.numpy as jnp
from jax import lax
from jax.experimental import pallas as pl
from jax.experimental.pallas import tpu as pltpu

EPS = 1e-5

# conv2 slab geometry (per image):
_P_ROWS = 272   # padded input slab rows: 8 lead zeros + 16x16 zero-padded grid + 8 tail zeros
_C_ROWS = 224   # pre-pool compute grid rows: 14 (h) x 16 (w, incl. fringe)
_P2_ROWS = 207  # rows of the doubly-maxed (2x2-pool candidate) slab


def _pick_tile(total, target, multiple):
    """Largest d <= target with total % d == 0 and d % multiple == 0, else total."""
    for d in range(min(total, target), 0, -1):
        if total % d == 0 and d % multiple == 0:
            return d
    return total


# ---------------------------------------------------------------------------
# Kernels
# ---------------------------------------------------------------------------
def _conv1_pool_kernel(a_ref, w_ref, b_ref, o_ref):
    # a_ref: (4, tile, 9) pool-quadrant im2col; w_ref: (9, 32); b_ref: (1, 32)
    t = o_ref.shape[0]
    lhs = jnp.concatenate([a_ref[0], a_ref[1], a_ref[2], a_ref[3]], axis=0)  # (4t, 9)
    z = jnp.dot(lhs, w_ref[...], preferred_element_type=jnp.float32)        # (4t, 32)
    z = jnp.maximum(jnp.maximum(z[:t], z[t:2 * t]),
                    jnp.maximum(z[2 * t:3 * t], z[3 * t:]))                  # max over quadrants
    o_ref[...] = jnp.maximum(z + b_ref[...], 0.0)                            # bias(+BN) + ReLU


def _conv2_pool_kernel(x_ref, w_ref, b_ref, o_ref, p_ref):
    # x_ref: (tb, 272, 32) bf16 padded slab; w_ref: (288, 64) bf16 (taps folded into K)
    # b_ref: (1, 64) f32; o_ref: (tb, 49, 64) bf16; p_ref: VMEM (207, 64) f32 scratch
    tb = o_ref.shape[0]
    w = w_ref[...]
    b = b_ref[...]
    for m in range(tb):
        taps = [x_ref[m, pl.ds(8 + kh * 16 + kw - 1, _C_ROWS), :]
                for kh in range(3) for kw in range(3)]
        lhs = jnp.concatenate(taps, axis=-1)                       # (224, 288) in-kernel im2col
        z = jnp.dot(lhs, w, preferred_element_type=jnp.float32)    # one K=288 MXU matmul / image
        z = jnp.maximum(z + b, 0.0)                                # BN (scale in w) + ReLU
        p = jnp.maximum(z[:-1, :], z[1:, :])                       # 2x2 pool: w-pairs 1 row apart
        p_ref[...] = jnp.maximum(p[:_P2_ROWS, :], p[16:16 + _P2_ROWS, :])   # h-pairs 16 rows apart
        q = p_ref[pl.ds(1, 103, stride=2), :]                      # valid maxes: row 16*jh + jw
        for jh in range(7):
            o_ref[m, pl.ds(jh * 7, 7), :] = q[16 * jh:16 * jh + 7, :].astype(o_ref.dtype)


def _fc_kernel(x_ref, w1_ref, b1_ref, w2_ref, b2_ref, o_ref):
    h = jnp.dot(x_ref[...], w1_ref[...], preferred_element_type=jnp.float32) + b1_ref[...]
    h = jnp.maximum(h, 0.0).astype(jnp.bfloat16)
    # TODO(synk): training-mode Dropout(0.5) mask not implemented (eval-mode identity).
    o_ref[...] = jnp.dot(h, w2_ref[...], preferred_element_type=jnp.float32) + b2_ref[...]


# ---------------------------------------------------------------------------
# pallas_call wrappers
# ---------------------------------------------------------------------------
def conv1_pool(quads, w, b, *, row_tile_target=2048):
    """quads: (4, R, 9) f32; w: (9, 32); b: (1, 32)  ->  (R, 32) f32, R = N*196."""
    R = quads.shape[1]
    C = w.shape[1]
    tile = _pick_tile(R, min(row_tile_target, max(8, R // 2)), 8)   # aim for >=2 grid steps
    return pl.pallas_call(
        _conv1_pool_kernel,
        out_shape=jax.ShapeDtypeStruct((R, C), jnp.float32),
        grid=(R // tile,),
        in_specs=[
            pl.BlockSpec((4, tile, 9), lambda i: (0, i, 0)),
            pl.BlockSpec((9, C), lambda i: (0, 0)),
            pl.BlockSpec((1, C), lambda i: (0, 0)),
        ],
        out_specs=pl.BlockSpec((tile, C), lambda i: (i, 0)),
        compiler_params=pltpu.CompilerParams(dimension_semantics=("parallel",)),
    )(quads, w, b)


def conv2_pool(x_slab, w, b, *, image_tile_target=4):
    """x_slab: (N, 272, 32) bf16; w: (288, 64) bf16; b: (1, 64) f32 -> (N, 49, 64) bf16."""
    N = x_slab.shape[0]
    Cin = x_slab.shape[2]
    Cout = w.shape[1]
    tb = _pick_tile(N, min(image_tile_target, max(1, N // 2)), 1)   # >=2 grid steps when N>=2
    return pl.pallas_call(
        _conv2_pool_kernel,
        out_shape=jax.ShapeDtypeStruct((N, 49, Cout), jnp.bfloat16),
        grid=(N // tb,),
        in_specs=[
            pl.BlockSpec((tb, _P_ROWS, Cin), lambda i: (i, 0, 0)),
            pl.BlockSpec(w.shape, lambda i: (0, 0)),
            pl.BlockSpec((1, Cout), lambda i: (0, 0)),
        ],
        out_specs=pl.BlockSpec((tb, 49, Cout), lambda i: (i, 0, 0)),
        scratch_shapes=[pltpu.VMEM((_P2_ROWS, Cout), jnp.float32)],
        compiler_params=pltpu.CompilerParams(dimension_semantics=("parallel",)),
    )(x_slab, w, b)


def fc_head(flat, w1, b1, w2, b2, *, batch_tile_target=64):
    """flat: (N, 3136) bf16; w1: (3136, 100) bf16; w2: (100, 10) bf16 -> (N, 10) f32."""
    N, K = flat.shape
    H = w1.shape[1]
    O = w2.shape[1]
    tb = _pick_tile(N, min(batch_tile_target, max(16, N // 2)), 16)
    return pl.pallas_call(
        _fc_kernel,
        out_shape=jax.ShapeDtypeStruct((N, O), jnp.float32),
        grid=(N // tb,),
        in_specs=[
            pl.BlockSpec((tb, K), lambda i: (i, 0)),
            pl.BlockSpec((K, H), lambda i: (0, 0)),
            pl.BlockSpec((1, H), lambda i: (0, 0)),
            pl.BlockSpec((H, O), lambda i: (0, 0)),
            pl.BlockSpec((1, O), lambda i: (0, 0)),
        ],
        out_specs=pl.BlockSpec((tb, O), lambda i: (i, 0)),
        compiler_params=pltpu.CompilerParams(dimension_semantics=("parallel",)),
    )(flat, w1, b1, w2, b2)


# ---------------------------------------------------------------------------
# Parameter prep (BN folding, weight repacking) -- run ONCE, outside forward()
# ---------------------------------------------------------------------------
def _bn_fold(gamma, beta, mean, var, lin_bias):
    scale = gamma / jnp.sqrt(var + EPS)
    bias = (lin_bias - mean) * scale + beta
    return scale, bias


def pack_params(p):
    # conv1: (kh,kw,cin=1) x cout, BN scale folded in; kept f32 (K=9 stage is tiny).
    s1, b1 = _bn_fold(p['bn1_g'], p['bn1_b'], p['bn1_m'], p['bn1_v'], p['conv1_b'])
    c1w = jnp.transpose(p['conv1_w'], (2, 3, 1, 0)).reshape(9, 32) * s1[None, :]
    # conv2: taps folded into the contraction dim -> (288, 64), bf16 operands.
    s2, b2 = _bn_fold(p['bn2_g'], p['bn2_b'], p['bn2_m'], p['bn2_v'], p['conv2_b'])
    c2w = jnp.transpose(p['conv2_w'], (2, 3, 1, 0)).reshape(288, 64) * s2[None, :]
    # fc1: permute rows from PyTorch's (c, jh, jw) flatten to the kernel's (jh, jw, c)
    # layout at the TRUE K=3136 (no zero-expansion); BN1d scale folded in.
    s3, b3 = _bn_fold(p['bn3_g'], p['bn3_b'], p['bn3_m'], p['bn3_v'], p['fc1_b'])
    f1w = (p['fc1_w'].T.reshape(64, 7, 7, 100).transpose(1, 2, 0, 3).reshape(3136, 100)
           * s3[None, :])
    return dict(
        c1w=c1w.astype(jnp.float32), c1b=b1[None, :].astype(jnp.float32),
        c2w=c2w.astype(jnp.bfloat16), c2b=b2[None, :].astype(jnp.float32),
        f1w=f1w.astype(jnp.bfloat16), f1b=b3[None, :].astype(jnp.float32),
        f2w=p['fc2_w'].T.astype(jnp.bfloat16), f2b=p['fc2_b'][None, :].astype(jnp.float32),
    )


def _conv1_quad_patches(x_nhw):
    """(N,28,28) -> (4, N*196, 9): rows = pooled output pixels (n, jh, jw),
    leading axis = pool quadrant (qh, qw), features ordered (kh, kw) [Cin=1]."""
    # TODO(synk): this im2col is still built host-side (~9x the input bytes); conv1 is a
    # tiny fraction of total time so the in-kernel gather was not ported for stage 1.
    N = x_nhw.shape[0]
    xp = jnp.pad(x_nhw, ((0, 0), (1, 1), (1, 1)))
    quads = []
    for qh in (0, 1):
        for qw in (0, 1):
            taps = [xp[:, qh + kh:qh + kh + 27:2, qw + kw:qw + kw + 27:2]
                    for kh in range(3) for kw in range(3)]
            quads.append(jnp.stack(taps, axis=-1).reshape(N * 196, 9))
    return jnp.stack(quads, axis=0)


# ---------------------------------------------------------------------------
# Forward pass (eval mode, matches nn.Sequential in ModelArchitecture)
# ---------------------------------------------------------------------------
def forward(x_nchw, pk):
    N = x_nchw.shape[0]
    x = x_nchw.astype(jnp.float32).reshape(N, 28, 28)

    # Conv1 + BN + ReLU + MaxPool (fused, single matmul over all 4 pool quadrants)
    y1 = conv1_pool(_conv1_quad_patches(x), pk['c1w'], pk['c1b'])        # (N*196, 32) f32

    # Glue: embed pooled 14x14x32 maps into the zero-padded row slab conv2 gathers from.
    y1 = y1.reshape(N, 14, 14, 32)
    y1 = jnp.pad(y1, ((0, 0), (1, 1), (1, 1), (0, 0))).reshape(N, 256, 32)
    x2 = jnp.pad(y1, ((0, 0), (8, 8), (0, 0))).astype(jnp.bfloat16)      # (N, 272, 32) bf16

    # Conv2 + BN + ReLU + MaxPool (fused, in-kernel K=288 im2col, 49-row compact output)
    y2 = conv2_pool(x2, pk['c2w'], pk['c2b'])                            # (N, 49, 64) bf16

    # Flatten + Linear + BN1d + ReLU + Dropout(eval) + Linear (fused)
    flat = y2.reshape(N, 49 * 64)                                        # free reshape, K=3136
    return fc_head(flat, pk['f1w'], pk['f1b'], pk['f2w'], pk['f2b'])     # (N, 10) f32


# ---------------------------------------------------------------------------
# Pure-JAX reference (for correctness check)
# ---------------------------------------------------------------------------
def reference(x, p):
    hi = lax.Precision.HIGHEST

    def conv_bn_relu(h, w, b, g, beta, m, v):
        z = lax.conv_general_dilated(
            h, w, (1, 1), ((1, 1), (1, 1)),
            dimension_numbers=('NCHW', 'OIHW', 'NCHW'), precision=hi)
        z = z + b[None, :, None, None]
        z = ((z - m[None, :, None, None]) / jnp.sqrt(v[None, :, None, None] + EPS)
             * g[None, :, None, None] + beta[None, :, None, None])
        return jnp.maximum(z, 0.0)

    def pool(h):
        N, C, H, W = h.shape
        return h.reshape(N, C, H // 2, 2, W // 2, 2).max(axis=(3, 5))

    h = pool(conv_bn_relu(x, p['conv1_w'], p['conv1_b'], p['bn1_g'], p['bn1_b'],
                          p['bn1_m'], p['bn1_v']))
    h = pool(conv_bn_relu(h, p['conv2_w'], p['conv2_b'], p['bn2_g'], p['bn2_b'],
                          p['bn2_m'], p['bn2_v']))
    flat = h.reshape(h.shape[0], -1)
    z = jnp.dot(flat, p['fc1_w'].T, precision=hi) + p['fc1_b']
    z = (z - p['bn3_m']) / jnp.sqrt(p['bn3_v'] + EPS) * p['bn3_g'] + p['bn3_b']
    z = jnp.maximum(z, 0.0)
    return jnp.dot(z, p['fc2_w'].T, precision=hi) + p['fc2_b']


# ---------------------------------------------------------------------------
# Deterministic parameter init (shapes from ModelArchitecture.__init__)
# ---------------------------------------------------------------------------
def init_params(key):
    ks = jax.random.split(key, 20)

    def n(k, shape, s=0.1):
        return (s * jax.random.normal(k, shape)).astype(jnp.float32)

    def u(k, shape):
        return jax.random.uniform(k, shape, minval=0.5, maxval=1.5).astype(jnp.float32)

    return dict(
        conv1_w=n(ks[0], (32, 1, 3, 3)), conv1_b=n(ks[1], (32,)),
        bn1_g=u(ks[2], (32,)), bn1_b=n(ks[3], (32,)),
        bn1_m=n(ks[4], (32,)), bn1_v=u(ks[5], (32,)),
        conv2_w=n(ks[6], (64, 32, 3, 3)), conv2_b=n(ks[7], (64,)),
        bn2_g=u(ks[8], (64,)), bn2_b=n(ks[9], (64,)),
        bn2_m=n(ks[10], (64,)), bn2_v=u(ks[11], (64,)),
        fc1_w=n(ks[12], (100, 64 * 7 * 7), 0.02), fc1_b=n(ks[13], (100,)),
        bn3_g=u(ks[14], (100,)), bn3_b=n(ks[15], (100,)),
        bn3_m=n(ks[16], (100,)), bn3_v=u(ks[17], (100,)),
        fc2_w=n(ks[18], (10, 100)), fc2_b=n(ks[19], (10,)),
    )


if __name__ == "__main__":
    key = jax.random.PRNGKey(0)
    pkey, xkey = jax.random.split(key)
    params = init_params(pkey)
    x = jax.random.normal(xkey, (2, 1, 28, 28), dtype=jnp.float32)  # NCHW, MNIST-sized

    packed = pack_params(params)                    # hoisted weight prep (runs once)
    out = jax.jit(forward)(x, packed)
    out = jax.block_until_ready(out)
    assert out.shape == (2, 10), out.shape

    ref = jax.block_until_ready(reference(x, params))
    err = float(jnp.max(jnp.abs(out - ref)))
    # bf16 MXU operands through a 4-matmul chain -> tolerance loosened vs. the f32 version.
    assert jnp.allclose(out, ref, rtol=3e-2, atol=3e-2), f"max abs err {err}"

    print("KERNEL_OK")
</pallas_src>

<mosaic_0001>
module attributes {stable_mosaic.version = 11 : i64} {
  func.func @_conv1_pool_kernel(%arg0: i32, %arg1: memref<4x56x9xf32, #tpu.memory_space<vmem>>, %arg2: memref<9x32xf32, #tpu.memory_space<vmem>>, %arg3: memref<1x32xf32, #tpu.memory_space<vmem>>, %arg4: memref<56x32xf32, #tpu.memory_space<vmem>>) attributes {dimension_semantics = [#tpu.dimension_semantics<parallel>], iteration_bounds = array<i64: 7>, scalar_prefetch = 0 : i64, scratch_operands = 0 : i64, tpu.core_type = #tpu.core_type<tc>, window_params = [{transform_indices = @transform_0, window_bounds = array<i64: 4, 56, 9>}, {pipeline_mode = #tpu.pipeline_mode<synchronous>, transform_indices = @transform_1, window_bounds = array<i64: 9, 32>}, {pipeline_mode = #tpu.pipeline_mode<synchronous>, transform_indices = @transform_2, window_bounds = array<i64: 1, 32>}, {transform_indices = @transform_3, window_bounds = array<i64: 56, 32>}]} {
    %c0 = arith.constant 0 : index
    %c0_0 = arith.constant 0 : index
    %c0_1 = arith.constant 0 : index
    %0 = vector.load %arg1[%c0, %c0_0, %c0_1] : memref<4x56x9xf32, #tpu.memory_space<vmem>>, vector<1x56x9xf32>
    %1 = vector.shape_cast %0 : vector<1x56x9xf32> to vector<56x9xf32>
    %c1 = arith.constant 1 : index
    %c0_2 = arith.constant 0 : index
    %c0_3 = arith.constant 0 : index
    %2 = vector.load %arg1[%c1, %c0_2, %c0_3] : memref<4x56x9xf32, #tpu.memory_space<vmem>>, vector<1x56x9xf32>
    %3 = vector.shape_cast %2 : vector<1x56x9xf32> to vector<56x9xf32>
    %c2 = arith.constant 2 : index
    %c0_4 = arith.constant 0 : index
    %c0_5 = arith.constant 0 : index
    %4 = vector.load %arg1[%c2, %c0_4, %c0_5] : memref<4x56x9xf32, #tpu.memory_space<vmem>>, vector<1x56x9xf32>
    %5 = vector.shape_cast %4 : vector<1x56x9xf32> to vector<56x9xf32>
    %c3 = arith.constant 3 : index
    %c0_6 = arith.constant 0 : index
    %c0_7 = arith.constant 0 : index
    %6 = vector.load %arg1[%c3, %c0_6, %c0_7] : memref<4x56x9xf32, #tpu.memory_space<vmem>>, vector<1x56x9xf32>
    %7 = vector.shape_cast %6 : vector<1x56x9xf32> to vector<56x9xf32>
    %8 = tpu.concatenate %1, %3, %5, %7 in 0 : vector<56x9xf32>, vector<56x9xf32>, vector<56x9xf32>, vector<56x9xf32> -> vector<224x9xf32>
    %c0_8 = arith.constant 0 : index
    %c0_9 = arith.constant 0 : index
    %9 = vector.load %arg2[%c0_8, %c0_9] : memref<9x32xf32, #tpu.memory_space<vmem>>, vector<9x32xf32>
    %cst = arith.constant dense<0.000000e+00> : vector<224x32xf32>
    %10 = tpu.matmul %8, %9, %cst {dimension_numbers = #tpu.dot_dimension_numbers<[1], [0], [0], [1], [0, 0, 1, 1], [], []>} : vector<224x9xf32>, vector<9x32xf32>, vector<224x32xf32> -> vector<224x32xf32>
    %11 = vector.extract_strided_slice %10 {offsets = [0, 0], sizes = [56, 32], strides = [1, 1]} : vector<224x32xf32> to vector<56x32xf32>
    %12 = vector.extract_strided_slice %10 {offsets = [56, 0], sizes = [56, 32], strides = [1, 1]} : vector<224x32xf32> to vector<56x32xf32>
    %13 = arith.maximumf %11, %12 : vector<56x32xf32>
    %14 = vector.extract_strided_slice %10 {offsets = [112, 0], sizes = [56, 32], strides = [1, 1]} : vector<224x32xf32> to vector<56x32xf32>
    %15 = vector.extract_strided_slice %10 {offsets = [168, 0], sizes = [56, 32], strides = [1, 1]} : vector<224x32xf32> to vector<56x32xf32>
    %16 = arith.maximumf %14, %15 : vector<56x32xf32>
    %17 = arith.maximumf %13, %16 : vector<56x32xf32>
    %c0_10 = arith.constant 0 : index
    %c0_11 = arith.constant 0 : index
    %18 = vector.load %arg3[%c0_10, %c0_11] : memref<1x32xf32, #tpu.memory_space<vmem>>, vector<1x32xf32>
    %19 = vector.broadcast %18 : vector<1x32xf32> to vector<56x32xf32>
    %20 = arith.addf %17, %19 : vector<56x32xf32>
    %cst_12 = arith.constant 0.000000e+00 : f32
    %21 = vector.broadcast %cst_12 : f32 to vector<56x32xf32>
    %22 = arith.maximumf %20, %21 : vector<56x32xf32>
    %c0_13 = arith.constant 0 : index
    %c0_14 = arith.constant 0 : index
    %23 = vector.load %arg4[%c0_13, %c0_14] : memref<56x32xf32, #tpu.memory_space<vmem>>, vector<56x32xf32>
    tpu.vector_store %arg4[%c0_13, %c0_14], %22 {strides = array<i32>} : memref<56x32xf32, #tpu.memory_space<vmem>>, vector<56x32xf32>,
    return
  }
  func.func @transform_0(%arg0: i32) -> (i32, i32, i32) {
    %c0_i32 = arith.constant 0 : i32
    %c0_i32_0 = arith.constant 0 : i32
    %c0_i32_1 = arith.constant 0 : i32
    return %c0_i32, %arg0, %c0_i32_0 : i32, i32, i32
  }
  func.func @transform_1(%arg0: i32) -> (i32, i32) {
    %c0_i32 = arith.constant 0 : i32
    %c0_i32_0 = arith.constant 0 : i32
    %c0_i32_1 = arith.constant 0 : i32
    return %c0_i32, %c0_i32_0 : i32, i32
  }
  func.func @transform_2(%arg0: i32) -> (i32, i32) {
    %c0_i32 = arith.constant 0 : i32
    %c0_i32_0 = arith.constant 0 : i32
    %c0_i32_1 = arith.constant 0 : i32
    return %c0_i32, %c0_i32_0 : i32, i32
  }
  func.func @transform_3(%arg0: i32) -> (i32, i32) {
    %c0_i32 = arith.constant 0 : i32
    %c0_i32_0 = arith.constant 0 : i32
    return %arg0, %c0_i32 : i32, i32
  }
}

module attributes {stable_mosaic.version = 11 : i64} {
  func.func @_conv2_pool_kernel(%arg0: i32, %arg1: memref<1x272x32xbf16, #tpu.memory_space<vmem>>, %arg2: memref<288x64xbf16, #tpu.memory_space<vmem>>, %arg3: memref<1x64xf32, #tpu.memory_space<vmem>>, %arg4: memref<1x49x64xbf16, #tpu.memory_space<vmem>>, %arg5: memref<207x64xf32, #tpu.memory_space<vmem>>) attributes {dimension_semantics = [#tpu.dimension_semantics<parallel>], iteration_bounds = array<i64: 2>, scalar_prefetch = 0 : i64, scratch_operands = 1 : i64, tpu.core_type = #tpu.core_type<tc>, window_params = [{transform_indices = @transform_0, window_bounds = array<i64: 1, 272, 32>}, {pipeline_mode = #tpu.pipeline_mode<synchronous>, transform_indices = @transform_1, window_bounds = array<i64: 288, 64>}, {pipeline_mode = #tpu.pipeline_mode<synchronous>, transform_indices = @transform_2, window_bounds = array<i64: 1, 64>}, {transform_indices = @transform_3, window_bounds = array<i64: 1, 49, 64>}]} {
    %c0 = arith.constant 0 : index
    %c0_0 = arith.constant 0 : index
    %0 = vector.load %arg2[%c0, %c0_0] : memref<288x64xbf16, #tpu.memory_space<vmem>>, vector<288x64xbf16>
    %c0_1 = arith.constant 0 : index
    %c0_2 = arith.constant 0 : index
    %1 = vector.load %arg3[%c0_1, %c0_2] : memref<1x64xf32, #tpu.memory_space<vmem>>, vector<1x64xf32>
    %c0_3 = arith.constant 0 : index
    %c7 = arith.constant 7 : index
    %c0_4 = arith.constant 0 : index
    %2 = vector.load %arg1[%c0_3, %c7, %c0_4] : memref<1x272x32xbf16, #tpu.memory_space<vmem>>, vector<1x224x32xbf16>
    %3 = vector.shape_cast %2 : vector<1x224x32xbf16> to vector<224x32xbf16>
    %c0_5 = arith.constant 0 : index
    %c8 = arith.constant 8 : index
    %c0_6 = arith.constant 0 : index
    %4 = vector.load %arg1[%c0_5, %c8, %c0_6] : memref<1x272x32xbf16, #tpu.memory_space<vmem>>, vector<1x224x32xbf16>
    %5 = vector.shape_cast %4 : vector<1x224x32xbf16> to vector<224x32xbf16>
    %c0_7 = arith.constant 0 : index
    %c9 = arith.constant 9 : index
    %c0_8 = arith.constant 0 : index
    %6 = vector.load %arg1[%c0_7, %c9, %c0_8] : memref<1x272x32xbf16, #tpu.memory_space<vmem>>, vector<1x224x32xbf16>
    %7 = vector.shape_cast %6 : vector<1x224x32xbf16> to vector<224x32xbf16>
    %c0_9 = arith.constant 0 : index
    %c23 = arith.constant 23 : index
    %c0_10 = arith.constant 0 : index
    %8 = vector.load %arg1[%c0_9, %c23, %c0_10] : memref<1x272x32xbf16, #tpu.memory_space<vmem>>, vector<1x224x32xbf16>
    %9 = vector.shape_cast %8 : vector<1x224x32xbf16> to vector<224x32xbf16>
    %c0_11 = arith.constant 0 : index
    %c24 = arith.constant 24 : index
    %c0_12 = arith.constant 0 : index
    %10 = vector.load %arg1[%c0_11, %c24, %c0_12] : memref<1x272x32xbf16, #tpu.memory_space<vmem>>, vector<1x224x32xbf16>
    %11 = vector.shape_cast %10 : vector<1x224x32xbf16> to vector<224x32xbf16>
    %c0_13 = arith.constant 0 : index
    %c25 = arith.constant 25 : index
    %c0_14 = arith.constant 0 : index
    %12 = vector.load %arg1[%c0_13, %c25, %c0_14] : memref<1x272x32xbf16, #tpu.memory_space<vmem>>, vector<1x224x32xbf16>
    %13 = vector.shape_cast %12 : vector<1x224x32xbf16> to vector<224x32xbf16>
    %c0_15 = arith.constant 0 : index
    %c39 = arith.constant 39 : index
    %c0_16 = arith.constant 0 : index
    %14 = vector.load %arg1[%c0_15, %c39, %c0_16] : memref<1x272x32xbf16, #tpu.memory_space<vmem>>, vector<1x224x32xbf16>
    %15 = vector.shape_cast %14 : vector<1x224x32xbf16> to vector<224x32xbf16>
    %c0_17 = arith.constant 0 : index
    %c40 = arith.constant 40 : index
    %c0_18 = arith.constant 0 : index
    %16 = vector.load %arg1[%c0_17, %c40, %c0_18] : memref<1x272x32xbf16, #tpu.memory_space<vmem>>, vector<1x224x32xbf16>
    %17 = vector.shape_cast %16 : vector<1x224x32xbf16> to vector<224x32xbf16>
    %c0_19 = arith.constant 0 : index
    %c41 = arith.constant 41 : index
    %c0_20 = arith.constant 0 : index
    %18 = vector.load %arg1[%c0_19, %c41, %c0_20] : memref<1x272x32xbf16, #tpu.memory_space<vmem>>, vector<1x224x32xbf16>
    %19 = vector.shape_cast %18 : vector<1x224x32xbf16> to vector<224x32xbf16>
    %20 = tpu.concatenate %3, %5, %7, %9, %11, %13, %15, %17, %19 in 1 : vector<224x32xbf16>, vector<224x32xbf16>, vector<224x32xbf16>, vector<224x32xbf16>, vector<224x32xbf16>, vector<224x32xbf16>, vector<224x32xbf16>, vector<224x32xbf16>, vector<224x32xbf16> -> vector<224x288xbf16>
    %cst = arith.constant dense<0.000000e+00> : vector<224x64xf32>
    %21 = tpu.matmul %20, %0, %cst {dimension_numbers = #tpu.dot_dimension_numbers<[1], [0], [0], [1], [0, 0, 1, 1], [], []>} : vector<224x288xbf16>, vector<288x64xbf16>, vector<224x64xf32> -> vector<224x64xf32>
    %22 = vector.broadcast %1 : vector<1x64xf32> to vector<224x64xf32>
    %23 = arith.addf %21, %22 : vector<224x64xf32>
    %cst_21 = arith.constant 0.000000e+00 : f32
    %24 = vector.broadcast %cst_21 : f32 to vector<224x64xf32>
    %25 = arith.maximumf %23, %24 : vector<224x64xf32>
    %26 = vector.extract_strided_slice %25 {offsets = [0, 0], sizes = [223, 64], strides = [1, 1]} : vector<224x64xf32> to vector<223x64xf32>
    %27 = vector.extract_strided_slice %25 {offsets = [1, 0], sizes = [223, 64], strides = [1, 1]} : vector<224x64xf32> to vector<223x64xf32>
    %28 = arith.maximumf %26, %27 : vector<223x64xf32>
    %29 = vector.extract_strided_slice %28 {offsets = [0, 0], sizes = [207, 64], strides = [1, 1]} : vector<223x64xf32> to vector<207x64xf32>
    %30 = vector.extract_strided_slice %28 {offsets = [16, 0], sizes = [207, 64], strides = [1, 1]} : vector<223x64xf32> to vector<207x64xf32>
    %31 = arith.maximumf %29, %30 : vector<207x64xf32>
    %c0_22 = arith.constant 0 : index
    %c0_23 = arith.constant 0 : index
    %32 = vector.load %arg5[%c0_22, %c0_23] : memref<207x64xf32, #tpu.memory_space<vmem>>, vector<207x64xf32>
    tpu.vector_store %arg5[%c0_22, %c0_23], %31 {strides = array<i32>} : memref<207x64xf32, #tpu.memory_space<vmem>>, vector<207x64xf32>,
    %c1 = arith.constant 1 : index
    %c0_24 = arith.constant 0 : index
    %33 = tpu.strided_load %arg5[%c1, %c0_24] {strides = array<i32: 2, 1>} : memref<207x64xf32, #tpu.memory_space<vmem>>, vector<103x64xf32>
    %34 = vector.extract_strided_slice %33 {offsets = [0, 0], sizes = [7, 64], strides = [1, 1]} : vector<103x64xf32> to vector<7x64xf32>
    %35 = arith.truncf %34 : vector<7x64xf32> to vector<7x64xbf16>
    %c0_25 = arith.constant 0 : index
    %c0_26 = arith.constant 0 : index
    %c0_27 = arith.constant 0 : index
    %36 = vector.load %arg4[%c0_25, %c0_26, %c0_27] : memref<1x49x64xbf16, #tpu.memory_space<vmem>>, vector<1x7x64xbf16>
    %37 = vector.shape_cast %36 : vector<1x7x64xbf16> to vector<7x64xbf16>
    %38 = vector.shape_cast %35 : vector<7x64xbf16> to vector<1x7x64xbf16>
    tpu.vector_store %arg4[%c0_25, %c0_26, %c0_27], %38 {strides = array<i32>} : memref<1x49x64xbf16, #tpu.memory_space<vmem>>, vector<1x7x64xbf16>,
    %39 = vector.extract_strided_slice %33 {offsets = [16, 0], sizes = [7, 64], strides = [1, 1]} : vector<103x64xf32> to vector<7x64xf32>
    %40 = arith.truncf %39 : vector<7x64xf32> to vector<7x64xbf16>
    %c0_28 = arith.constant 0 : index
    %c7_29 = arith.constant 7 : index
    %c0_30 = arith.constant 0 : index
    %41 = vector.load %arg4[%c0_28, %c7_29, %c0_30] : memref<1x49x64xbf16, #tpu.memory_space<vmem>>, vector<1x7x64xbf16>
    %42 = vector.shape_cast %41 : vector<1x7x64xbf16> to vector<7x64xbf16>
    %43 = vector.shape_cast %40 : vector<7x64xbf16> to vector<1x7x64xbf16>
    tpu.vector_store %arg4[%c0_28, %c7_29, %c0_30], %43 {strides = array<i32>} : memref<1x49x64xbf16, #tpu.memory_space<vmem>>, vector<1x7x64xbf16>,
    %44 = vector.extract_strided_slice %33 {offsets = [32, 0], sizes = [7, 64], strides = [1, 1]} : vector<103x64xf32> to vector<7x64xf32>
    %45 = arith.truncf %44 : vector<7x64xf32> to vector<7x64xbf16>
    %c0_31 = arith.constant 0 : index
    %c14 = arith.constant 14 : index
    %c0_32 = arith.constant 0 : index
    %46 = vector.load %arg4[%c0_31, %c14, %c0_32] : memref<1x49x64xbf16, #tpu.memory_space<vmem>>, vector<1x7x64xbf16>
    %47 = vector.shape_cast %46 : vector<1x7x64xbf16> to vector<7x64xbf16>
    %48 = vector.shape_cast %45 : vector<7x64xbf16> to vector<1x7x64xbf16>
    tpu.vector_store %arg4[%c0_31, %c14, %c0_32], %48 {strides = array<i32>} : memref<1x49x64xbf16, #tpu.memory_space<vmem>>, vector<1x7x64xbf16>,
    %49 = vector.extract_strided_slice %33 {offsets = [48, 0], sizes = [7, 64], strides = [1, 1]} : vector<103x64xf32> to vector<7x64xf32>
    %50 = arith.truncf %49 : vector<7x64xf32> to vector<7x64xbf16>
    %c0_33 = arith.constant 0 : index
    %c21 = arith.constant 21 : index
    %c0_34 = arith.constant 0 : index
    %51 = vector.load %arg4[%c0_33, %c21, %c0_34] : memref<1x49x64xbf16, #tpu.memory_space<vmem>>, vector<1x7x64xbf16>
    %52 = vector.shape_cast %51 : vector<1x7x64xbf16> to vector<7x64xbf16>
    %53 = vector.shape_cast %50 : vector<7x64xbf16> to vector<1x7x64xbf16>
    tpu.vector_store %arg4[%c0_33, %c21, %c0_34], %53 {strides = array<i32>} : memref<1x49x64xbf16, #tpu.memory_space<vmem>>, vector<1x7x64xbf16>,
    %54 = vector.extract_strided_slice %33 {offsets = [64, 0], sizes = [7, 64], strides = [1, 1]} : vector<103x64xf32> to vector<7x64xf32>
    %55 = arith.truncf %54 : vector<7x64xf32> to vector<7x64xbf16>
    %c0_35 = arith.constant 0 : index
    %c28 = arith.constant 28 : index
    %c0_36 = arith.constant 0 : index
    %56 = vector.load %arg4[%c0_35, %c28, %c0_36] : memref<1x49x64xbf16, #tpu.memory_space<vmem>>, vector<1x7x64xbf16>
    %57 = vector.shape_cast %56 : vector<1x7x64xbf16> to vector<7x64xbf16>
    %58 = vector.shape_cast %55 : vector<7x64xbf16> to vector<1x7x64xbf16>
    tpu.vector_store %arg4[%c0_35, %c28, %c0_36], %58 {strides = array<i32>} : memref<1x49x64xbf16, #tpu.memory_space<vmem>>, vector<1x7x64xbf16>,
    %59 = vector.extract_strided_slice %33 {offsets = [80, 0], sizes = [7, 64], strides = [1, 1]} : vector<103x64xf32> to vector<7x64xf32>
    %60 = arith.truncf %59 : vector<7x64xf32> to vector<7x64xbf16>
    %c0_37 = arith.constant 0 : index
    %c35 = arith.constant 35 : index
    %c0_38 = arith.constant 0 : index
    %61 = vector.load %arg4[%c0_37, %c35, %c0_38] : memref<1x49x64xbf16, #tpu.memory_space<vmem>>, vector<1x7x64xbf16>
    %62 = vector.shape_cast %61 : vector<1x7x64xbf16> to vector<7x64xbf16>
    %63 = vector.shape_cast %60 : vector<7x64xbf16> to vector<1x7x64xbf16>
    tpu.vector_store %arg4[%c0_37, %c35, %c0_38], %63 {strides = array<i32>} : memref<1x49x64xbf16, #tpu.memory_space<vmem>>, vector<1x7x64xbf16>,
    %64 = vector.extract_strided_slice %33 {offsets = [96, 0], sizes = [7, 64], strides = [1, 1]} : vector<103x64xf32> to vector<7x64xf32>
    %65 = arith.truncf %64 : vector<7x64xf32> to vector<7x64xbf16>
    %c0_39 = arith.constant 0 : index
    %c42 = arith.constant 42 : index
    %c0_40 = arith.constant 0 : index
    %66 = vector.load %arg4[%c0_39, %c42, %c0_40] : memref<1x49x64xbf16, #tpu.memory_space<vmem>>, vector<1x7x64xbf16>
    %67 = vector.shape_cast %66 : vector<1x7x64xbf16> to vector<7x64xbf16>
    %68 = vector.shape_cast %65 : vector<7x64xbf16> to vector<1x7x64xbf16>
    tpu.vector_store %arg4[%c0_39, %c42, %c0_40], %68 {strides = array<i32>} : memref<1x49x64xbf16, #tpu.memory_space<vmem>>, vector<1x7x64xbf16>,
    return
  }
  func.func @transform_0(%arg0: i32) -> (i32, i32, i32) {
    %c0_i32 = arith.constant 0 : i32
    %c0_i32_0 = arith.constant 0 : i32
    %c0_i32_1 = arith.constant 0 : i32
    return %arg0, %c0_i32, %c0_i32_0 : i32, i32, i32
  }
  func.func @transform_1(%arg0: i32) -> (i32, i32) {
    %c0_i32 = arith.constant 0 : i32
    %c0_i32_0 = arith.constant 0 : i32
    %c0_i32_1 = arith.constant 0 : i32
    return %c0_i32, %c0_i32_0 : i32, i32
  }
  func.func @transform_2(%arg0: i32) -> (i32, i32) {
    %c0_i32 = arith.constant 0 : i32
    %c0_i32_0 = arith.constant 0 : i32
    %c0_i32_1 = arith.constant 0 : i32
    return %c0_i32, %c0_i32_0 : i32, i32
  }
  func.func @transform_3(%arg0: i32) -> (i32, i32, i32) {
    %c0_i32 = arith.constant 0 : i32
    %c0_i32_0 = arith.constant 0 : i32
    %c0_i32_1 = arith.constant 0 : i32
    return %arg0, %c0_i32, %c0_i32_0 : i32, i32, i32
  }
}

module attributes {stable_mosaic.version = 11 : i64} {
  func.func @_fc_kernel(%arg0: i32, %arg1: memref<2x3136xbf16, #tpu.memory_space<vmem>>, %arg2: memref<3136x100xbf16, #tpu.memory_space<vmem>>, %arg3: memref<1x100xf32, #tpu.memory_space<vmem>>, %arg4: memref<100x10xbf16, #tpu.memory_space<vmem>>, %arg5: memref<1x10xf32, #tpu.memory_space<vmem>>, %arg6: memref<2x10xf32, #tpu.memory_space<vmem>>) attributes {dimension_semantics = [#tpu.dimension_semantics<parallel>], iteration_bounds = array<i64: 1>, scalar_prefetch = 0 : i64, scratch_operands = 0 : i64, tpu.core_type = #tpu.core_type<tc>, window_params = [{transform_indices = @transform_0, window_bounds = array<i64: 2, 3136>}, {pipeline_mode = #tpu.pipeline_mode<synchronous>, transform_indices = @transform_1, window_bounds = array<i64: 3136, 100>}, {pipeline_mode = #tpu.pipeline_mode<synchronous>, transform_indices = @transform_2, window_bounds = array<i64: 1, 100>}, {pipeline_mode = #tpu.pipeline_mode<synchronous>, transform_indices = @transform_3, window_bounds = array<i64: 100, 10>}, {pipeline_mode = #tpu.pipeline_mode<synchronous>, transform_indices = @transform_4, window_bounds = array<i64: 1, 10>}, {transform_indices = @transform_5, window_bounds = array<i64: 2, 10>}]} {
    %c0 = arith.constant 0 : index
    %c0_0 = arith.constant 0 : index
    %0 = vector.load %arg1[%c0, %c0_0] : memref<2x3136xbf16, #tpu.memory_space<vmem>>, vector<2x3136xbf16>
    %c0_1 = arith.constant 0 : index
    %c0_2 = arith.constant 0 : index
    %1 = vector.load %arg2[%c0_1, %c0_2] : memref<3136x100xbf16, #tpu.memory_space<vmem>>, vector<3136x100xbf16>
    %cst = arith.constant dense<0.000000e+00> : vector<2x100xf32>
    %2 = tpu.matmul %0, %1, %cst {dimension_numbers = #tpu.dot_dimension_numbers<[1], [0], [0], [1], [0, 0, 1, 1], [], []>} : vector<2x3136xbf16>, vector<3136x100xbf16>, vector<2x100xf32> -> vector<2x100xf32>
    %c0_3 = arith.constant 0 : index
    %c0_4 = arith.constant 0 : index
    %3 = vector.load %arg3[%c0_3, %c0_4] : memref<1x100xf32, #tpu.memory_space<vmem>>, vector<1x100xf32>
    %4 = vector.broadcast %3 : vector<1x100xf32> to vector<2x100xf32>
    %5 = arith.addf %2, %4 : vector<2x100xf32>
    %cst_5 = arith.constant 0.000000e+00 : f32
    %6 = vector.broadcast %cst_5 : f32 to vector<2x100xf32>
    %7 = arith.maximumf %5, %6 : vector<2x100xf32>
    %8 = arith.truncf %7 : vector<2x100xf32> to vector<2x100xbf16>
    %c0_6 = arith.constant 0 : index
    %c0_7 = arith.constant 0 : index
    %9 = vector.load %arg4[%c0_6, %c0_7] : memref<100x10xbf16, #tpu.memory_space<vmem>>, vector<100x10xbf16>
    %cst_8 = arith.constant dense<0.000000e+00> : vector<2x10xf32>
    %10 = tpu.matmul %8, %9, %cst_8 {dimension_numbers = #tpu.dot_dimension_numbers<[1], [0], [0], [1], [0, 0, 1, 1], [], []>} : vector<2x100xbf16>, vector<100x10xbf16>, vector<2x10xf32> -> vector<2x10xf32>
    %c0_9 = arith.constant 0 : index
    %c0_10 = arith.constant 0 : index
    %11 = vector.load %arg5[%c0_9, %c0_10] : memref<1x10xf32, #tpu.memory_space<vmem>>, vector<1x10xf32>
    %12 = vector.broadcast %11 : vector<1x10xf32> to vector<2x10xf32>
    %13 = arith.addf %10, %12 : vector<2x10xf32>
    %c0_11 = arith.constant 0 : index
    %c0_12 = arith.constant 0 : index
    %14 = vector.load %arg6[%c0_11, %c0_12] : memref<2x10xf32, #tpu.memory_space<vmem>>, vector<2x10xf32>
    tpu.vector_store %arg6[%c0_11, %c0_12], %13 {strides = array<i32>} : memref<2x10xf32, #tpu.memory_space<vmem>>, vector<2x10xf32>,
    return
  }
  func.func @transform_0(%arg0: i32) -> (i32, i32) {
    %c0_i32 = arith.constant 0 : i32
    %c0_i32_0 = arith.constant 0 : i32
    return %arg0, %c0_i32 : i32, i32
  }
  func.func @transform_1(%arg0: i32) -> (i32, i32) {
    %c0_i32 = arith.constant 0 : i32
    %c0_i32_0 = arith.constant 0 : i32
    %c0_i32_1 = arith.constant 0 : i32
    return %c0_i32, %c0_i32_0 : i32, i32
  }
  func.func @transform_2(%arg0: i32) -> (i32, i32) {
    %c0_i32 = arith.constant 0 : i32
    %c0_i32_0 = arith.constant 0 : i32
    %c0_i32_1 = arith.constant 0 : i32
    return %c0_i32, %c0_i32_0 : i32, i32
  }
  func.func @transform_3(%arg0: i32) -> (i32, i32) {
    %c0_i32 = arith.constant 0 : i32
    %c0_i32_0 = arith.constant 0 : i32
    %c0_i32_1 = arith.constant 0 : i32
    return %c0_i32, %c0_i32_0 : i32, i32
  }
  func.func @transform_4(%arg0: i32) -> (i32, i32) {
    %c0_i32 = arith.constant 0 : i32
    %c0_i32_0 = arith.constant 0 : i32
    %c0_i32_1 = arith.constant 0 : i32
    return %c0_i32, %c0_i32_0 : i32, i32
  }
  func.func @transform_5(%arg0: i32) -> (i32, i32) {
    %c0_i32 = arith.constant 0 : i32
    %c0_i32_0 = arith.constant 0 : i32
    return %arg0, %c0_i32 : i32, i32
  }
}

</mosaic_0001>

<llo_original>
// kernel: forward.3
$region0: #{forward.3}
  #allocation0 [shape = 'u32[]', space=smem, size = 0x4, offset = 0x4, fixed_abs, tag = 'smem constant byte address 0x4 - core index']
  #allocation1 [shape = 'u32[144,128]{1,0:T(1,128)}', space=vmem, size = 0x12000, scoped, tag = 'internal scratch']
  %s0 = inlined_call_operand.vmem [shape: f32[4,392,9], index: 0, kind: input, shape index: {}]
  %s1 = inlined_call_operand.vmem [shape: f32[9,32], index: 1, kind: input, shape index: {}]
  %s2 = inlined_call_operand.vmem [shape: f32[1,32], index: 2, kind: input, shape index: {}]
  %s3 = inlined_call_operand.vmem [shape: f32[392,32], index: 3, kind: output, shape index: {}]
  %s4 = sld [smem:[#allocation0]]
  $region83: #{forward.3} parent=0
    _
  %s6 = ssub.s32 1, %s4
  %s7 = scalar_select 0, %s6, %s4
  $region1: #{forward.3} parent=0
    #allocation2 [shape = 'u8[229376]{0}', space=vmem, size = 0x38000, scoped, tag = 'input window, operand 0']
    loop: start=0, step=1, limit=9
    $region2: #{forward.3} parent=1 // loop_pre_header
      _
    $region3: #{forward.3} parent=1 // loop_header
      %s9 = sphi 0, %s13
      %p10 = scmp.ge.s32.totalorder %s9, 9
      %s19 = sphi 0, %s21
      %s22 = sphi 0, %s19
      %s23 = sphi 0, %s22
      %s39 = sphi 0, %s23
      %s43 = sphi 0, %s43
      %s45 = sphi 0, %s43
      %s46 = sphi 0, %s45
      %s60 = sphi 0, %s46
      %s64 = sphi 0, %s64
      %s66 = sphi 0, %s64
      %s67 = sphi 0, %s66
      %s81 = sphi 0, %s67
      %s87 = sphi 0, %s89
      %s90 = sphi 0, %s87
      %s91 = sphi 0, %s90
      %s107 = sphi 0, %s91
    $region4: #{forward.3} parent=1 // loop_header_branch
      %12 = sbr.rel (%p10) target = $region8
    $region5: #{forward.3} parent=1 // loop_body
      %s14 = ssub.s32 %s9, 1
      %s15 = ssub.s32 %s9, 2
      %s16 = sadd.s32 %s9, 1
      %s17 = ssub.s32 %s9, %s16
      %p18 = scmp.eq.s32.totalorder %s17, 0
      %s20 = sadd.s32 %s19, 1
      %s21 = scalar_select %p18, %s19, %s20
      %p24 = pneg %p18
      %p25 = scmp.eq.s32.totalorder %s9, 6
      %p26 = por %p24, %p25
      %p27 = scmp.ne.s32.totalorder %s19, %s22
      %p28 = scmp.eq.s32.totalorder %s9, 0
      %p29 = por %p27, %p28
      %p30 = scmp.ne.s32.totalorder %s19, %s22
      %p31 = scmp.eq.s32.totalorder %s14, 6
      %p32 = por %p30, %p31
      %p33 = scmp.ne.s32.totalorder %s22, %s23
      %p34 = scmp.eq.s32.totalorder %s14, 0
      %p35 = por %p33, %p34
      %p36 = scmp.ne.s32.totalorder %s22, %s23
      %p37 = scmp.eq.s32.totalorder %s15, 6
      %p38 = por %p36, %p37
      %p40 = scmp.ne.s32.totalorder %s23, %s39
      %p41 = scmp.eq.s32.totalorder %s15, 0
      %p42 = por %p40, %p41
      %s44 = sadd.s32 %s43, 1
      %p47 = scmp.eq.s32.totalorder %s9, 6
      %p48 = scmp.ne.s32.totalorder %s43, %s45
      %p49 = scmp.eq.s32.totalorder %s9, 0
      %p50 = por %p48, %p49
      %p51 = scmp.ne.s32.totalorder %s43, %s45
      %p52 = scmp.eq.s32.totalorder %s14, 6
      %p53 = por %p51, %p52
      %p54 = scmp.ne.s32.totalorder %s45, %s46
      %p55 = scmp.eq.s32.totalorder %s14, 0
      %p56 = por %p54, %p55
      %p57 = scmp.ne.s32.totalorder %s45, %s46
      %p58 = scmp.eq.s32.totalorder %s15, 6
      %p59 = por %p57, %p58
      %p61 = scmp.ne.s32.totalorder %s46, %s60
      %p62 = scmp.eq.s32.totalorder %s15, 0
      %p63 = por %p61, %p62
      %s65 = sadd.s32 %s64, 1
      %p68 = scmp.eq.s32.totalorder %s9, 6
      %p69 = scmp.ne.s32.totalorder %s64, %s66
      %p70 = scmp.eq.s32.totalorder %s9, 0
      %p71 = por %p69, %p70
      %p72 = scmp.ne.s32.totalorder %s64, %s66
      %p73 = scmp.eq.s32.totalorder %s14, 6
      %p74 = por %p72, %p73
      %p75 = scmp.ne.s32.totalorder %s66, %s67
      %p76 = scmp.eq.s32.totalorder %s14, 0
      %p77 = por %p75, %p76
      %p78 = scmp.ne.s32.totalorder %s66, %s67
      %p79 = scmp.eq.s32.totalorder %s15, 6
      %p80 = por %p78, %p79
      %p82 = scmp.ne.s32.totalorder %s67, %s81
      %p83 = scmp.eq.s32.totalorder %s15, 0
      %p84 = por %p82, %p83
      %s85 = ssub.s32 %s9, %s16
      %p86 = scmp.eq.s32.totalorder %s85, 0
      %s88 = sadd.s32 %s87, 1
      %s89 = scalar_select %p86, %s87, %s88
      %p92 = pneg %p86
      %p93 = scmp.eq.s32.totalorder %s9, 6
      %p94 = por %p92, %p93
      %p95 = scmp.ne.s32.totalorder %s87, %s90
      %p96 = scmp.eq.s32.totalorder %s9, 0
      %p97 = por %p95, %p96
      %p98 = scmp.ne.s32.totalorder %s87, %s90
      %p99 = scmp.eq.s32.totalorder %s14, 6
      %p100 = por %p98, %p99
      %p101 = scmp.ne.s32.totalorder %s90, %s91
      %p102 = scmp.eq.s32.totalorder %s14, 0
      %p103 = por %p101, %p102
      %p104 = scmp.ne.s32.totalorder %s90, %s91
      %p105 = scmp.eq.s32.totalorder %s15, 6
      %p106 = por %p104, %p105
      %p108 = scmp.ne.s32.totalorder %s91, %s107
      %p109 = scmp.eq.s32.totalorder %s15, 0
      %p110 = por %p108, %p109
      %p111 = scmp.le.s32.totalorder 1, %s9
      %p112 = scmp.lt.s32.totalorder %s9, 8
      %p113 = pnand %p111, %p112
      %p114 = pneg %p113
      // Predicated region
      $region9: #{forward.3} parent=5 // pred_check
        _
      $region10: #{forward.3} parent=5 // pred_check_branch
        %116 = sbr.rel (%p113) target = $region12
      $region11: #{forward.3} parent=5 // pred_region
        %s117 = ssub.s32 %s9, 1
        // Predicated region
        $region13: #{forward.3} parent=11 // pred_check
          %p118 = pneg %p56
        $region14: #{forward.3} parent=11 // pred_check_branch
          %120 = sbr.rel (%p118) target = $region16
        $region15: #{forward.3} parent=11 // pred_region
          _
        $region16: #{forward.3} parent=11 // pred_fallthru
          _
        // Predicated region
        $region17: #{forward.3} parent=11 // pred_check
          %p121 = pneg %p77
        $region18: #{forward.3} parent=11 // pred_check_branch
          %123 = sbr.rel (%p121) target = $region20
        $region19: #{forward.3} parent=11 // pred_region
          _
        $region20: #{forward.3} parent=11 // pred_fallthru
          _
      $region12: #{forward.3} parent=5 // pred_fallthru
        _
      %p124 = scmp.lt.s32.totalorder %s9, 7
      // Predicated region
      $region21: #{forward.3} parent=5 // pred_check
        %p125 = pneg %p124
      $region22: #{forward.3} parent=5 // pred_check_branch
        %127 = sbr.rel (%p125) target = $region24
      $region23: #{forward.3} parent=5 // pred_region
        // Predicated region
        $region25: #{forward.3} parent=23 // pred_check
          %p128 = pneg %p29
        $region26: #{forward.3} parent=23 // pred_check_branch
          %130 = sbr.rel (%p128) target = $region28
        $region27: #{forward.3} parent=23 // pred_region
          %s131 = sand.u32 %s19, 1
          %s132 = sand.u32 %s19, 1
          %s133 = smul.addr %s132, 224
          %s134 = scalar_lea.vmem [#allocation2], %s133
          %s135 = smul.u32 7, %s9
          %s136 = smul.addr %s135, 8
          %s137 = scalar_lea.vmem %s0, %s136
          // Predicated region
          $region29: #{forward.3} parent=27 // pred_check
            _
          $region30: #{forward.3} parent=27 // pred_check_branch
            %139 = sbr.rel (0) target = $region32
          $region31: #{forward.3} parent=27 // pred_region
            // Predicated region
            $region33: #{forward.3} parent=31 // pred_check
              _
            $region34: #{forward.3} parent=31 // pred_check_branch
              %141 = sbr.rel (0) target = $region36
            $region35: #{forward.3} parent=31 // pred_region
              // Predicated region
              $region48: #{forward.3} parent=35 // pred_check
                _
              $region49: #{forward.3} parent=35 // pred_check_branch
                %210 = sbr.rel (0) target = $region51
              $region50: #{forward.3} parent=35 // pred_region
                loop: start=0, step=1, limit=1
                $region52: #{forward.3} parent=50 // loop_pre_header
                  _
                $region53: #{forward.3} parent=50 // loop_header
                  %s212 = sphi 0, %s216
                  %p213 = scmp.ge.s32.totalorder %s212, 1
                  %s217 = sphi %s137, %s137
                  %s218 = sphi %s134, %s134
                $region54: #{forward.3} parent=50 // loop_header_branch
                  %215 = sbr.rel (%p213) target = $region58
                $region55: #{forward.3} parent=50 // loop_body
                  %v219 = vld [vmem:[%s217] sm:$0xff]
                  %220 = vst [vmem:[%s218] sm:$0xff] %v219
                  %v221 = vld [vmem:[%s217 + $0x8] sm:$0xff]
                  %222 = vst [vmem:[%s218 + $0x8] sm:$0xff] %v221
                  %v223 = vld [vmem:[%s217 + $0x10] sm:$0xff]
                  %224 = vst [vmem:[%s218 + $0x10] sm:$0xff] %v223
                  %v225 = vld [vmem:[%s217 + $0x18] sm:$0xff]
                  %226 = vst [vmem:[%s218 + $0x18] sm:$0xff] %v225
                  %v227 = vld [vmem:[%s217 + $0x20] sm:$0xff]
                  %228 = vst [vmem:[%s218 + $0x20] sm:$0xff] %v227
                  %v229 = vld [vmem:[%s217 + $0x28] sm:$0xff]
                  %230 = vst [vmem:[%s218 + $0x28] sm:$0xff] %v229
                  %v231 = vld [vmem:[%s217 + $0x30] sm:$0xff]
                  %232 = vst [vmem:[%s218 + $0x30] sm:$0xff] %v231
                  %v233 = vld [vmem:[%s217 + $0x188] sm:$0xff]
                  %234 = vst [vmem:[%s218 + $0x38] sm:$0xff] %v233
                  %v235 = vld [vmem:[%s217 + $0x190] sm:$0xff]
                  %236 = vst [vmem:[%s218 + $0x40] sm:$0xff] %v235
                  %v237 = vld [vmem:[%s217 + $0x198] sm:$0xff]
                  %238 = vst [vmem:[%s218 + $0x48] sm:$0xff] %v237
                  %v239 = vld [vmem:[%s217 + $0x1a0] sm:$0xff]
                  %240 = vst [vmem:[%s218 + $0x50] sm:$0xff] %v239
                  %v241 = vld [vmem:[%s217 + $0x1a8] sm:$0xff]
                  %242 = vst [vmem:[%s218 + $0x58] sm:$0xff] %v241
                  %v243 = vld [vmem:[%s217 + $0x1b0] sm:$0xff]
                  %244 = vst [vmem:[%s218 + $0x60] sm:$0xff] %v243
                  %v245 = vld [vmem:[%s217 + $0x1b8] sm:$0xff]
                  %246 = vst [vmem:[%s218 + $0x68] sm:$0xff] %v245
                  %v247 = vld [vmem:[%s217 + $0x310] sm:$0xff]
                  %248 = vst [vmem:[%s218 + $0x70] sm:$0xff] %v247
                  %v249 = vld [vmem:[%s217 + $0x318] sm:$0xff]
                  %250 = vst [vmem:[%s218 + $0x78] sm:$0xff] %v249
                  %v251 = vld [vmem:[%s217 + $0x320] sm:$0xff]
                  %252 = vst [vmem:[%s218 + $0x80] sm:$0xff] %v251
                  %v253 = vld [vmem:[%s217 + $0x328] sm:$0xff]
                  %254 = vst [vmem:[%s218 + $0x88] sm:$0xff] %v253
                  %v255 = vld [vmem:[%s217 + $0x330] sm:$0xff]
                  %256 = vst [vmem:[%s218 + $0x90] sm:$0xff] %v255
                  %v257 = vld [vmem:[%s217 + $0x338] sm:$0xff]
                  %258 = vst [vmem:[%s218 + $0x98] sm:$0xff] %v257
                  %v259 = vld [vmem:[%s217 + $0x340] sm:$0xff]
                  %260 = vst [vmem:[%s218 + $0xa0] sm:$0xff] %v259
                  %v261 = vld [vmem:[%s217 + $0x498] sm:$0xff]
                  %262 = vst [vmem:[%s218 + $0xa8] sm:$0xff] %v261
                  %v263 = vld [vmem:[%s217 + $0x4a0] sm:$0xff]
                  %264 = vst [vmem:[%s218 + $0xb0] sm:$0xff] %v263
                  %v265 = vld [vmem:[%s217 + $0x4a8] sm:$0xff]
                  %266 = vst [vmem:[%s218 + $0xb8] sm:$0xff] %v265
                  %v267 = vld [vmem:[%s217 + $0x4b0] sm:$0xff]
                  %268 = vst [vmem:[%s218 + $0xc0] sm:$0xff] %v267
                  %v269 = vld [vmem:[%s217 + $0x4b8] sm:$0xff]
                  %270 = vst [vmem:[%s218 + $0xc8] sm:$0xff] %v269
                  %v271 = vld [vmem:[%s217 + $0x4c0] sm:$0xff]
                  %272 = vst [vmem:[%s218 + $0xd0] sm:$0xff] %v271
                  %v273 = vld [vmem:[%s217 + $0x4c8] sm:$0xff]
                  %274 = vst [vmem:[%s218 + $0xd8] sm:$0xff] %v273
                $region56: #{forward.3} parent=50 // loop_footer
                  %s216 = sadd.s32 1, %s212
                $region57: #{forward.3} parent=50 // loop_footer_branch
                  %211 = sbr.rel target = $region53
                $region58: #{forward.3} parent=50 // loop_exit
                  _
              $region51: #{forward.3} parent=35 // pred_fallthru
                _
              // Predicated region
              $region59: #{forward.3} parent=35 // pred_check
                _
              $region60: #{forward.3} parent=35 // pred_check_branch
                %276 = sbr.rel target = $region62
              $region61: #{forward.3} parent=35 // pred_region
                _
              $region62: #{forward.3} parent=35 // pred_fallthru
                _
            $region36: #{forward.3} parent=31 // pred_fallthru
              _
            // Predicated region
            $region37: #{forward.3} parent=31 // pred_check
              _
            $region38: #{forward.3} parent=31 // pred_check_branch
              %143 = sbr.rel target = $region40
            $region39: #{forward.3} parent=31 // pred_region
              loop: start=0, step=1, limit=1
              $region41: #{forward.3} parent=39 // loop_pre_header
                _
              $region42: #{forward.3} parent=39 // loop_header
                %s146 = sphi 0, %s150
                %p147 = scmp.ge.s32.totalorder %s146, 1
                %s151 = sphi %s137, %s137
                %s152 = sphi %s134, %s134
              $region43: #{forward.3} parent=39 // loop_header_branch
                %149 = sbr.rel (%p147) target = $region47
              $region44: #{forward.3} parent=39 // loop_body
                %v153 = vld [vmem:[%s151] sm:$0xff]
                %154 = vst [vmem:[%s152] sm:$0xff] %v153
                %v155 = vld [vmem:[%s151 + $0x8] sm:$0xff]
                %156 = vst [vmem:[%s152 + $0x8] sm:$0xff] %v155
                %v157 = vld [vmem:[%s151 + $0x10] sm:$0xff]
                %158 = vst [vmem:[%s152 + $0x10] sm:$0xff] %v157
                %v159 = vld [vmem:[%s151 + $0x18] sm:$0xff]
                %160 = vst [vmem:[%s152 + $0x18] sm:$0xff] %v159
                %v161 = vld [vmem:[%s151 + $0x20] sm:$0xff]
                %162 = vst [vmem:[%s152 + $0x20] sm:$0xff] %v161
                %v163 = vld [vmem:[%s151 + $0x28] sm:$0xff]
                %164 = vst [vmem:[%s152 + $0x28] sm:$0xff] %v163
                %v165 = vld [vmem:[%s151 + $0x30] sm:$0xff]
                %166 = vst [vmem:[%s152 + $0x30] sm:$0xff] %v165
                %v167 = vld [vmem:[%s151 + $0x188] sm:$0xff]
                %168 = vst [vmem:[%s152 + $0x38] sm:$0xff] %v167
                %v169 = vld [vmem:[%s151 + $0x190] sm:$0xff]
                %170 = vst [vmem:[%s152 + $0x40] sm:$0xff] %v169
                %v171 = vld [vmem:[%s151 + $0x198] sm:$0xff]
                %172 = vst [vmem:[%s152 + $0x48] sm:$0xff] %v171
                %v173 = vld [vmem:[%s151 + $0x1a0] sm:$0xff]
                %174 = vst [vmem:[%s152 + $0x50] sm:$0xff] %v173
                %v175 = vld [vmem:[%s151 + $0x1a8] sm:$0xff]
                %176 = vst [vmem:[%s152 + $0x58] sm:$0xff] %v175
                %v177 = vld [vmem:[%s151 + $0x1b0] sm:$0xff]
                %178 = vst [vmem:[%s152 + $0x60] sm:$0xff] %v177
                %v179 = vld [vmem:[%s151 + $0x1b8] sm:$0xff]
                %180 = vst [vmem:[%s152 + $0x68] sm:$0xff] %v179
                %v181 = vld [vmem:[%s151 + $0x310] sm:$0xff]
                %182 = vst [vmem:[%s152 + $0x70] sm:$0xff] %v181
                %v183 = vld [vmem:[%s151 + $0x318] sm:$0xff]
                %184 = vst [vmem:[%s152 + $0x78] sm:$0xff] %v183
                %v185 = vld [vmem:[%s151 + $0x320] sm:$0xff]
                %186 = vst [vmem:[%s152 + $0x80] sm:$0xff] %v185
                %v187 = vld [vmem:[%s151 + $0x328] sm:$0xff]
                %188 = vst [vmem:[%s152 + $0x88] sm:$0xff] %v187
                %v189 = vld [vmem:[%s151 + $0x330] sm:$0xff]
                %190 = vst [vmem:[%s152 + $0x90] sm:$0xff] %v189
                %v191 = vld [vmem:[%s151 + $0x338] sm:$0xff]
                %192 = vst [vmem:[%s152 + $0x98] sm:$0xff] %v191
                %v193 = vld [vmem:[%s151 + $0x340] sm:$0xff]
                %194 = vst [vmem:[%s152 + $0xa0] sm:$0xff] %v193
                %v195 = vld [vmem:[%s151 + $0x498] sm:$0xff]
                %196 = vst [vmem:[%s152 + $0xa8] sm:$0xff] %v195
                %v197 = vld [vmem:[%s151 + $0x4a0] sm:$0xff]
                %198 = vst [vmem:[%s152 + $0xb0] sm:$0xff] %v197
                %v199 = vld [vmem:[%s151 + $0x4a8] sm:$0xff]
                %200 = vst [vmem:[%s152 + $0xb8] sm:$0xff] %v199
                %v201 = vld [vmem:[%s151 + $0x4b0] sm:$0xff]
                %202 = vst [vmem:[%s152 + $0xc0] sm:$0xff] %v201
                %v203 = vld [vmem:[%s151 + $0x4b8] sm:$0xff]
                %204 = vst [vmem:[%s152 + $0xc8] sm:$0xff] %v203
                %v205 = vld [vmem:[%s151 + $0x4c0] sm:$0xff]
                %206 = vst [vmem:[%s152 + $0xd0] sm:$0xff] %v205
                %v207 = vld [vmem:[%s151 + $0x4c8] sm:$0xff]
                %208 = vst [vmem:[%s152 + $0xd8] sm:$0xff] %v207
              $region45: #{forward.3} parent=39 // loop_footer
                %s150 = sadd.s32 1, %s146
              $region46: #{forward.3} parent=39 // loop_footer_branch
                %145 = sbr.rel target = $region42
              $region47: #{forward.3} parent=39 // loop_exit
                _
            $region40: #{forward.3} parent=31 // pred_fallthru
              _
          $region32: #{forward.3} parent=27 // pred_fallthru
            _
          %277 = vnop
        $region28: #{forward.3} parent=23 // pred_fallthru
          _
      $region24: #{forward.3} parent=5 // pred_fallthru
        _
      %p278 = scmp.le.s32.totalorder 1, %s9
      %p279 = scmp.lt.s32.totalorder %s9, 8
      %p280 = pnand %p278, %p279
      %p281 = pneg %p280
      // Predicated region
      $region63: #{forward.3} parent=5 // pred_check
        _
      $region64: #{forward.3} parent=5 // pred_check_branch
        %283 = sbr.rel (%p280) target = $region66
      $region65: #{forward.3} parent=5 // pred_region
        %s284 = ssub.s32 %s9, 1
        %s285 = sand.u32 %s22, 1
        %s286 = sand.u32 %s22, 1
        %s287 = smul.addr %s286, 224
        %s288 = scalar_lea.vmem [#allocation2], %s287
        // Predicated region
        $region67: #{forward.3} parent=65 // pred_check
          %p289 = pneg %p35
        $region68: #{forward.3} parent=65 // pred_check_branch
          %291 = sbr.rel (%p289) target = $region70
        $region69: #{forward.3} parent=65 // pred_region
          _
        $region70: #{forward.3} parent=65 // pred_fallthru
          _
        %s292 = sand.u32 %s22, 1
        %s293 = sand.u32 %s22, 1
        %s294 = smul.addr %s293, 224
        %s295 = scalar_lea.vmem [#allocation2], %s294
        %p296 = pneg %p35
        %p297 = pneg %p32
        %p298 = pneg %p56
        %p299 = pneg %p53
        %p300 = pneg %p77
        %p301 = pneg %p74
        %p302 = pneg %p103
        %p303 = pneg %p100
        %s304 = smul.u32 7, %s14
        %p305 = scmp.lt.s32.totalorder %s304, 48
        %s306 = scalar_select %p305, %s304, 48
        %s307 = smul.addr %s306, 8
        %s308 = scalar_lea.vmem %s3, %s307
        %s309 = smul.u32 7, %s14
        %s310 = smul.u32 7, %s14
        %p311 = scmp.lt.s32.totalorder %s310, 48
        %s312 = scalar_select %p311, %s310, 48
        %s313 = smul.addr %s312, 8
        %s314 = scalar_lea.vmem %s3, %s313
        %s315 = smul.u32 7, %s14
        %v316 = vld [vmem:[%s288] sm:$0xff]
        %v317 = vld [vmem:[%s288 + $0x8] sm:$0xff]
        %v318 = vld [vmem:[%s288 + $0x10] sm:$0xff]
        %v319 = vld [vmem:[%s288 + $0x18] sm:$0xff]
        %v320 = vld [vmem:[%s288 + $0x20] sm:$0xff]
        %v321 = vld [vmem:[%s288 + $0x28] sm:$0xff]
        %v322 = vld [vmem:[%s288 + $0x30] sm:$0xff]
        %s323 = scalar_lea.vmem %s288, 56 [#allocation2]
        %v324 = vld [vmem:[%s323] sm:$0xff]
        %v325 = vld [vmem:[%s323 + $0x8] sm:$0xff]
        %v326 = vld [vmem:[%s323 + $0x10] sm:$0xff]
        %v327 = vld [vmem:[%s323 + $0x18] sm:$0xff]
        %v328 = vld [vmem:[%s323 + $0x20] sm:$0xff]
        %v329 = vld [vmem:[%s323 + $0x28] sm:$0xff]
        %v330 = vld [vmem:[%s323 + $0x30] sm:$0xff]
        %s331 = scalar_lea.vmem %s288, 112 [#allocation2]
        %v332 = vld [vmem:[%s331] sm:$0xff]
        %v333 = vld [vmem:[%s331 + $0x8] sm:$0xff]
        %v334 = vld [vmem:[%s331 + $0x10] sm:$0xff]
        %v335 = vld [vmem:[%s331 + $0x18] sm:$0xff]
        %v336 = vld [vmem:[%s331 + $0x20] sm:$0xff]
        %v337 = vld [vmem:[%s331 + $0x28] sm:$0xff]
        %v338 = vld [vmem:[%s331 + $0x30] sm:$0xff]
        %s339 = scalar_lea.vmem %s288, 168 [#allocation2]
        %v340 = vld [vmem:[%s339] sm:$0xff]
        %v341 = vld [vmem:[%s339 + $0x8] sm:$0xff]
        %v342 = vld [vmem:[%s339 + $0x10] sm:$0xff]
        %v343 = vld [vmem:[%s339 + $0x18] sm:$0xff]
        %v344 = vld [vmem:[%s339 + $0x20] sm:$0xff]
        %v345 = vld [vmem:[%s339 + $0x28] sm:$0xff]
        %v346 = vld [vmem:[%s339 + $0x30] sm:$0xff]
        %v347 = vld [vmem:[%s1] sm:$0xff]
        %v348 = vld [vmem:[%s1 + $0x8] sm:$0x1]
        %vm349 = vcmask 72704
        %v351 = vsel %vm349, %v316, 0
        %v354 = vsel %vm349, %v317, 0
        %v357 = vsel %vm349, %v318, 0
        %v360 = vsel %vm349, %v319, 0
        %v363 = vsel %vm349, %v320, 0
        %v366 = vsel %vm349, %v321, 0
        %v369 = vsel %vm349, %v322, 0
        %v372 = vsel %vm349, %v324, 0
        %v375 = vsel %vm349, %v325, 0
        %v378 = vsel %vm349, %v326, 0
        %v381 = vsel %vm349, %v327, 0
        %v384 = vsel %vm349, %v328, 0
        %v387 = vsel %vm349, %v329, 0
        %v390 = vsel %vm349, %v330, 0
        %v393 = vsel %vm349, %v332, 0
        %v396 = vsel %vm349, %v333, 0
        %v399 = vsel %vm349, %v334, 0
        %v402 = vsel %vm349, %v335, 0
        %v405 = vsel %vm349, %v336, 0
        %v408 = vsel %vm349, %v337, 0
        %v411 = vsel %vm349, %v338, 0
        %v414 = vsel %vm349, %v340, 0
        %v417 = vsel %vm349, %v341, 0
        %v420 = vsel %vm349, %v342, 0
        %v423 = vsel %vm349, %v343, 0
        %v426 = vsel %vm349, %v344, 0
        %v429 = vsel %vm349, %v345, 0
        %v432 = vsel %vm349, %v346, 0
        %vm434 = vcmask 1040384
        %v436 = vsel %vm434, %v348, 0
        %438 = vmatprep.subr.mxu0 0.0
        %439 = vmatpush1.msra.mxu0 %v347
        %440 = vmatprep.subr.mxu0 0.0
        %441 = vmatpush1.msra.mxu0 %v436
        %442 = vmatprep.subr.mxu0 0.0
        %443 = vmatpush1.msra.mxu0 0.0
        %444 = vmatprep.subr.mxu0 0.0
        %445 = vmatpush1.msra.mxu0 0.0
        %446 = vmatprep.subr.mxu0 0.0
        %447 = vmatpush1.msra.mxu0 0.0
        %448 = vmatprep.subr.mxu0 0.0
        %449 = vmatpush1.msra.mxu0 0.0
        %450 = vmatprep.subr.mxu0 0.0
        %451 = vmatpush1.msra.mxu0 0.0
        %452 = vmatprep.subr.mxu0 0.0
        %453 = vmatpush1.msra.mxu0 0.0
        %454 = vmatprep.subr.mxu0 0.0
        %455 = vmatpush1.msra.mxu0 0.0
        %456 = vmatprep.subr.mxu0 0.0
        %457 = vmatpush1.msra.mxu0 0.0
        %458 = vmatprep.subr.mxu0 0.0
        %459 = vmatpush1.msra.mxu0 0.0
        %460 = vmatprep.subr.mxu0 0.0
        %461 = vmatpush1.msra.mxu0 0.0
        %462 = vmatprep.subr.mxu0 0.0
        %463 = vmatpush1.msra.mxu0 0.0
        %464 = vmatprep.subr.mxu0 0.0
        %465 = vmatpush1.msra.mxu0 0.0
        %466 = vmatprep.subr.mxu0 0.0
        %467 = vmatpush1.msra.mxu0 0.0
        %468 = vmatprep.subr.mxu0 0.0
        %469 = vmatpush1.msra.mxu0 0.0
        %470 = vmatprep.subr.mxu0 0.0
        %471 = vmatpush1.msra.mxu0 0.0
        %472 = vmatprep.subr.mxu0 0.0
        %473 = vmatpush1.msra.mxu0 0.0
        %474 = vmatprep.subr.mxu0 0.0
        %475 = vmatpush1.msra.mxu0 0.0
        %476 = vmatprep.subr.mxu0 0.0
        %477 = vmatpush1.msra.mxu0 0.0
        %478 = vmatprep.subr.mxu0 0.0
        %479 = vmatpush1.msra.mxu0 0.0
        %480 = vmatprep.subr.mxu0 0.0
        %481 = vmatpush1.msra.mxu0 0.0
        %482 = vmatprep.subr.mxu0 0.0
        %483 = vmatpush1.msra.mxu0 0.0
        %484 = vmatprep.subr.mxu0 0.0
        %485 = vmatpush1.msra.mxu0 0.0
        %486 = vmatprep.subr.mxu0 0.0
        %487 = vmatpush1.msra.mxu0 0.0
        %488 = vmatprep.subr.mxu0 0.0
        %489 = vmatpush1.msra.mxu0 0.0
        %490 = vmatprep.subr.mxu0 0.0
        %491 = vmatpush1.msra.mxu0 0.0
        %492 = vmatprep.subr.mxu0 0.0
        %493 = vmatpush1.msra.mxu0 0.0
        %494 = vmatprep.subr.mxu0 0.0
        %495 = vmatpush1.msra.mxu0 0.0
        %496 = vmatprep.subr.mxu0 0.0
        %497 = vmatpush1.msra.mxu0 0.0
        %498 = vmatprep.subr.mxu0 0.0
        %499 = vmatpush1.msra.mxu0 0.0
        %500 = vmatprep.subr.mxu0 0.0
        %501 = vmatpush1.msra.mxu0 0.0
        %502 = vmatprep.mubr.f32.mxu0 0.0
        %503 = vmatmul.mubr.f32.gmra.mrb[0].mxu0 %v351
        %v504 = vpop.f32.mrb[0].mxu0
        %v505 = vadd.f32 0.0, %v504
        %v506 = vpop.f32.mrb[0].mxu0
        %507 = vmatprep.mubr.f32.mxu0 0.0
        %508 = vmatmul.mubr.f32.gmra.mrb[0].mxu0 %v354
        %v509 = vpop.f32.mrb[0].mxu0
        %v510 = vadd.f32 0.0, %v509
        %v511 = vpop.f32.mrb[0].mxu0
        %512 = vmatprep.mubr.f32.mxu0 0.0
        %513 = vmatmul.mubr.f32.gmra.mrb[0].mxu0 %v357
        %v514 = vpop.f32.mrb[0].mxu0
        %v515 = vadd.f32 0.0, %v514
        %v516 = vpop.f32.mrb[0].mxu0
        %517 = vmatprep.mubr.f32.mxu0 0.0
        %518 = vmatmul.mubr.f32.gmra.mrb[0].mxu0 %v360
        %v519 = vpop.f32.mrb[0].mxu0
        %v520 = vadd.f32 0.0, %v519
        %v521 = vpop.f32.mrb[0].mxu0
        %522 = vmatprep.mubr.f32.mxu0 0.0
        %523 = vmatmul.mubr.f32.gmra.mrb[0].mxu0 %v363
        %v524 = vpop.f32.mrb[0].mxu0
        %v525 = vadd.f32 0.0, %v524
        %v526 = vpop.f32.mrb[0].mxu0
        %527 = vmatprep.mubr.f32.mxu0 0.0
        %528 = vmatmul.mubr.f32.gmra.mrb[0].mxu0 %v366
        %v529 = vpop.f32.mrb[0].mxu0
        %v530 = vadd.f32 0.0, %v529
        %v531 = vpop.f32.mrb[0].mxu0
        %532 = vmatprep.mubr.f32.mxu0 0.0
        %533 = vmatmul.mubr.f32.gmra.mrb[0].mxu0 %v369
        %v534 = vpop.f32.mrb[0].mxu0
        %v535 = vadd.f32 0.0, %v534
        %v536 = vpop.f32.mrb[0].mxu0
        %537 = vmatprep.mubr.f32.mxu0 0.0
        %538 = vmatmul.mubr.f32.gmra.mrb[0].mxu0 %v372
        %v539 = vpop.f32.mrb[0].mxu0
        %v540 = vadd.f32 0.0, %v539
        %v541 = vpop.f32.mrb[0].mxu0
        %542 = vmatprep.mubr.f32.mxu0 0.0
        %543 = vmatmul.mubr.f32.gmra.mrb[0].mxu0 %v375
        %v544 = vpop.f32.mrb[0].mxu0
        %v545 = vadd.f32 0.0, %v544
        %v546 = vpop.f32.mrb[0].mxu0
        %547 = vmatprep.mubr.f32.mxu0 0.0
        %548 = vmatmul.mubr.f32.gmra.mrb[0].mxu0 %v378
        %v549 = vpop.f32.mrb[0].mxu0
        %v550 = vadd.f32 0.0, %v549
        %v551 = vpop.f32.mrb[0].mxu0
        %552 = vmatprep.mubr.f32.mxu0 0.0
        %553 = vmatmul.mubr.f32.gmra.mrb[0].mxu0 %v381
        %v554 = vpop.f32.mrb[0].mxu0
        %v555 = vadd.f32 0.0, %v554
        %v556 = vpop.f32.mrb[0].mxu0
        %557 = vmatprep.mubr.f32.mxu0 0.0
        %558 = vmatmul.mubr.f32.gmra.mrb[0].mxu0 %v384
        %v559 = vpop.f32.mrb[0].mxu0
        %v560 = vadd.f32 0.0, %v559
        %v561 = vpop.f32.mrb[0].mxu0
        %562 = vmatprep.mubr.f32.mxu0 0.0
        %563 = vmatmul.mubr.f32.gmra.mrb[0].mxu0 %v387
        %v564 = vpop.f32.mrb[0].mxu0
        %v565 = vadd.f32 0.0, %v564
        %v566 = vpop.f32.mrb[0].mxu0
        %567 = vmatprep.mubr.f32.mxu0 0.0
        %568 = vmatmul.mubr.f32.gmra.mrb[0].mxu0 %v390
        %v569 = vpop.f32.mrb[0].mxu0
        %v570 = vadd.f32 0.0, %v569
        %v571 = vpop.f32.mrb[0].mxu0
        %572 = vmatprep.mubr.f32.mxu0 0.0
        %573 = vmatmul.mubr.f32.gmra.mrb[0].mxu0 %v393
        %v574 = vpop.f32.mrb[0].mxu0
        %v575 = vadd.f32 0.0, %v574
        %v576 = vpop.f32.mrb[0].mxu0
        %577 = vmatprep.mubr.f32.mxu0 0.0
        %578 = vmatmul.mubr.f32.gmra.mrb[0].mxu0 %v396
        %v579 = vpop.f32.mrb[0].mxu0
        %v580 = vadd.f32 0.0, %v579
        %v581 = vpop.f32.mrb[0].mxu0
        %582 = vmatprep.mubr.f32.mxu0 0.0
        %583 = vmatmul.mubr.f32.gmra.mrb[0].mxu0 %v399
        %v584 = vpop.f32.mrb[0].mxu0
        %v585 = vadd.f32 0.0, %v584
        %v586 = vpop.f32.mrb[0].mxu0
        %587 = vmatprep.mubr.f32.mxu0 0.0
        %588 = vmatmul.mubr.f32.gmra.mrb[0].mxu0 %v402
        %v589 = vpop.f32.mrb[0].mxu0
        %v590 = vadd.f32 0.0, %v589
        %v591 = vpop.f32.mrb[0].mxu0
        %592 = vmatprep.mubr.f32.mxu0 0.0
        %593 = vmatmul.mubr.f32.gmra.mrb[0].mxu0 %v405
        %v594 = vpop.f32.mrb[0].mxu0
        %v595 = vadd.f32 0.0, %v594
        %v596 = vpop.f32.mrb[0].mxu0
        %597 = vmatprep.mubr.f32.mxu0 0.0
        %598 = vmatmul.mubr.f32.gmra.mrb[0].mxu0 %v408
        %v599 = vpop.f32.mrb[0].mxu0
        %v600 = vadd.f32 0.0, %v599
        %v601 = vpop.f32.mrb[0].mxu0
        %602 = vmatprep.mubr.f32.mxu0 0.0
        %603 = vmatmul.mubr.f32.gmra.mrb[0].mxu0 %v411
        %v604 = vpop.f32.mrb[0].mxu0
        %v605 = vadd.f32 0.0, %v604
        %v606 = vpop.f32.mrb[0].mxu0
        %607 = vmatprep.mubr.f32.mxu0 0.0
        %608 = vmatmul.mubr.f32.gmra.mrb[0].mxu0 %v414
        %v609 = vpop.f32.mrb[0].mxu0
        %v610 = vadd.f32 0.0, %v609
        %v611 = vpop.f32.mrb[0].mxu0
        %612 = vmatprep.mubr.f32.mxu0 0.0
        %613 = vmatmul.mubr.f32.gmra.mrb[0].mxu0 %v417
        %v614 = vpop.f32.mrb[0].mxu0
        %v615 = vadd.f32 0.0, %v614
        %v616 = vpop.f32.mrb[0].mxu0
        %617 = vmatprep.mubr.f32.mxu0 0.0
        %618 = vmatmul.mubr.f32.gmra.mrb[0].mxu0 %v420
        %v619 = vpop.f32.mrb[0].mxu0
        %v620 = vadd.f32 0.0, %v619
        %v621 = vpop.f32.mrb[0].mxu0
        %622 = vmatprep.mubr.f32.mxu0 0.0
        %623 = vmatmul.mubr.f32.gmra.mrb[0].mxu0 %v423
        %v624 = vpop.f32.mrb[0].mxu0
        %v625 = vadd.f32 0.0, %v624
        %v626 = vpop.f32.mrb[0].mxu0
        %627 = vmatprep.mubr.f32.mxu0 0.0
        %628 = vmatmul.mubr.f32.gmra.mrb[0].mxu0 %v426
        %v629 = vpop.f32.mrb[0].mxu0
        %v630 = vadd.f32 0.0, %v629
        %v631 = vpop.f32.mrb[0].mxu0
        %632 = vmatprep.mubr.f32.mxu0 0.0
        %633 = vmatmul.mubr.f32.gmra.mrb[0].mxu0 %v429
        %v634 = vpop.f32.mrb[0].mxu0
        %v635 = vadd.f32 0.0, %v634
        %v636 = vpop.f32.mrb[0].mxu0
        %637 = vmatprep.mubr.f32.mxu0 0.0
        %638 = vmatmul.mubr.f32.gmra.mrb[0].mxu0 %v432
        %v639 = vpop.f32.mrb[0].mxu0
        %v640 = vadd.f32 0.0, %v639
        %v641 = vpop.f32.mrb[0].mxu0
        %642 = vdwg.mxu0
        %v643 = vmax.f32 %v505, %v540
        %v644 = vmax.f32 %v510, %v545
        %v645 = vmax.f32 %v515, %v550
        %v646 = vmax.f32 %v520, %v555
        %v647 = vmax.f32 %v525, %v560
        %v648 = vmax.f32 %v530, %v565
        %v649 = vmax.f32 %v535, %v570
        %v650 = vmax.f32 %v575, %v610
        %v651 = vmax.f32 %v580, %v615
        %v652 = vmax.f32 %v585, %v620
        %v653 = vmax.f32 %v590, %v625
        %v654 = vmax.f32 %v595, %v630
        %v655 = vmax.f32 %v600, %v635
        %v656 = vmax.f32 %v605, %v640
        %v657 = vmax.f32 %v643, %v650
        %v658 = vmax.f32 %v644, %v651
        %v659 = vmax.f32 %v645, %v652
        %v660 = vmax.f32 %v646, %v653
        %v661 = vmax.f32 %v647, %v654
        %v662 = vmax.f32 %v648, %v655
        %v663 = vmax.f32 %v649, %v656
        %v664 = vld [vmem:[%s2] sm:$0x1]
        %v666 = vlaneseq
        %v667 = vshrl.u32 %v666, 7
        %v668 = vsub.s32 0, %v667
        %v669 = vrot.slane %v664, %v668
        %v671 = vadd.f32 %v657, %v669
        %v672 = vadd.f32 %v658, %v669
        %v673 = vadd.f32 %v659, %v669
        %v674 = vadd.f32 %v660, %v669
        %v675 = vadd.f32 %v661, %v669
        %v676 = vadd.f32 %v662, %v669
        %v677 = vadd.f32 %v663, %v669
        %v678 = vmax.f32 %v671, 0.0
        %v679 = vmax.f32 %v672, 0.0
        %v680 = vmax.f32 %v673, 0.0
        %v681 = vmax.f32 %v674, 0.0
        %v682 = vmax.f32 %v675, 0.0
        %v683 = vmax.f32 %v676, 0.0
        %v684 = vmax.f32 %v677, 0.0
        %vm685 = vcmask 261120
        %686 = vst.msk [vmem:[%s314] sm:$0xff] %vm685, %v678
        %687 = vst.msk [vmem:[%s314 + $0x8] sm:$0xff] %vm685, %v679
        %688 = vst.msk [vmem:[%s314 + $0x10] sm:$0xff] %vm685, %v680
        %689 = vst.msk [vmem:[%s314 + $0x18] sm:$0xff] %vm685, %v681
        %690 = vst.msk [vmem:[%s314 + $0x20] sm:$0xff] %vm685, %v682
        %691 = vst.msk [vmem:[%s314 + $0x28] sm:$0xff] %vm685, %v683
        %692 = vst.msk [vmem:[%s314 + $0x30] sm:$0xff] %vm685, %v684
        %s693 = smul.u32 7, %s14
        %p694 = scmp.lt.s32.totalorder %s693, 48
        %s695 = scalar_select %p694, %s693, 48
        %s696 = smul.addr %s695, 8
        %s697 = scalar_lea.vmem %s3, %s696
        // Predicated region
        $region71: #{forward.3} parent=65 // pred_check
          %p698 = pneg %p100
        $region72: #{forward.3} parent=65 // pred_check_branch
          %700 = sbr.rel (%p698) target = $region74
        $region73: #{forward.3} parent=65 // pred_region
          %s701 = smul.u32 7, %s14
        $region74: #{forward.3} parent=65 // pred_fallthru
          _
      $region66: #{forward.3} parent=5 // pred_fallthru
        _
      %p702 = scmp.le.s32.totalorder 2, %s9
      // Predicated region
      $region75: #{forward.3} parent=5 // pred_check
        %p703 = pneg %p702
      $region76: #{forward.3} parent=5 // pred_check_branch
        %705 = sbr.rel (%p703) target = $region78
      $region77: #{forward.3} parent=5 // pred_region
        %s706 = ssub.s32 %s9, 2
        // Predicated region
        $region79: #{forward.3} parent=77 // pred_check
          %p707 = pneg %p106
        $region80: #{forward.3} parent=77 // pred_check_branch
          %709 = sbr.rel (%p707) target = $region82
        $region81: #{forward.3} parent=77 // pred_region
          %s710 = smul.u32 7, %s15
          %p711 = scmp.lt.s32.totalorder %s710, 48
          %s712 = scalar_select %p711, %s710, 48
          %s713 = smul.addr %s712, 8
          %s714 = scalar_lea.vmem %s3, %s713
        $region82: #{forward.3} parent=77 // pred_fallthru
          _
      $region78: #{forward.3} parent=5 // pred_fallthru
        _
    $region6: #{forward.3} parent=1 // loop_footer
      %s13 = sadd.s32 1, %s9
    $region7: #{forward.3} parent=1 // loop_footer_branch
      %8 = sbr.rel target = $region3
    $region8: #{forward.3} parent=1 // loop_exit
      _

// kernel: forward.4
$region0: #{forward.4}
  #allocation0 [shape = 'u32[]', space=smem, size = 0x4, offset = 0x4, fixed_abs, tag = 'smem constant byte address 0x4 - core index']
  #allocation1 [shape = 'u32[144,128]{1,0:T(1,128)}', space=vmem, size = 0x12000, scoped, tag = 'internal scratch']
  #allocation2 [shape = 'f32[207,64]{1,0:T(8,128)}', space=vmem, size = 0x1a000, scoped, tag = 'scratch operand']
  %s0 = inlined_call_operand.vmem [shape: bf16[2,272,32], index: 0, kind: input, shape index: {}]
  %s1 = inlined_call_operand.vmem [shape: bf16[288,64], index: 1, kind: input, shape index: {}]
  %s2 = inlined_call_operand.vmem [shape: f32[1,64], index: 2, kind: input, shape index: {}]
  %s3 = inlined_call_operand.vmem [shape: bf16[2,49,64], index: 3, kind: output, shape index: {}]
  %s4 = sld [smem:[#allocation0]]
  $region45: #{forward.4} parent=0
    _
  %s6 = ssub.s32 1, %s4
  %s7 = scalar_select 0, %s6, %s4
  loop: start=0, step=1, limit=4
  $region2: #{forward.4} parent=0 // loop_pre_header
    _
  $region3: #{forward.4} parent=0 // loop_header
    %s9 = sphi 0, %s13
    %p10 = scmp.ge.s32.totalorder %s9, 4
    %s19 = sphi 0, %s21
    %s22 = sphi 0, %s19
    %s23 = sphi 0, %s22
    %s39 = sphi 0, %s23
    %s43 = sphi 0, %s43
    %s45 = sphi 0, %s43
    %s46 = sphi 0, %s45
    %s60 = sphi 0, %s46
    %s64 = sphi 0, %s64
    %s66 = sphi 0, %s64
    %s67 = sphi 0, %s66
    %s81 = sphi 0, %s67
    %s87 = sphi 0, %s89
    %s90 = sphi 0, %s87
    %s91 = sphi 0, %s90
    %s107 = sphi 0, %s91
  $region4: #{forward.4} parent=0 // loop_header_branch
    %12 = sbr.rel (%p10) target = $region8
  $region5: #{forward.4} parent=0 // loop_body
    %s14 = ssub.s32 %s9, 1
    %s15 = ssub.s32 %s9, 2
    %s16 = sadd.s32 %s9, 1
    %s17 = ssub.s32 %s9, %s16
    %p18 = scmp.eq.s32.totalorder %s17, 0
    %s20 = sadd.s32 %s19, 1
    %s21 = scalar_select %p18, %s19, %s20
    %p24 = pneg %p18
    %p25 = scmp.eq.s32.totalorder %s9, 1
    %p26 = por %p24, %p25
    %p27 = scmp.ne.s32.totalorder %s19, %s22
    %p28 = scmp.eq.s32.totalorder %s9, 0
    %p29 = por %p27, %p28
    %p30 = scmp.ne.s32.totalorder %s19, %s22
    %p31 = scmp.eq.s32.totalorder %s14, 1
    %p32 = por %p30, %p31
    %p33 = scmp.ne.s32.totalorder %s22, %s23
    %p34 = scmp.eq.s32.totalorder %s14, 0
    %p35 = por %p33, %p34
    %p36 = scmp.ne.s32.totalorder %s22, %s23
    %p37 = scmp.eq.s32.totalorder %s15, 1
    %p38 = por %p36, %p37
    %p40 = scmp.ne.s32.totalorder %s23, %s39
    %p41 = scmp.eq.s32.totalorder %s15, 0
    %p42 = por %p40, %p41
    %s44 = sadd.s32 %s43, 1
    %p47 = scmp.eq.s32.totalorder %s9, 1
    %p48 = scmp.ne.s32.totalorder %s43, %s45
    %p49 = scmp.eq.s32.totalorder %s9, 0
    %p50 = por %p48, %p49
    %p51 = scmp.ne.s32.totalorder %s43, %s45
    %p52 = scmp.eq.s32.totalorder %s14, 1
    %p53 = por %p51, %p52
    %p54 = scmp.ne.s32.totalorder %s45, %s46
    %p55 = scmp.eq.s32.totalorder %s14, 0
    %p56 = por %p54, %p55
    %p57 = scmp.ne.s32.totalorder %s45, %s46
    %p58 = scmp.eq.s32.totalorder %s15, 1
    %p59 = por %p57, %p58
    %p61 = scmp.ne.s32.totalorder %s46, %s60
    %p62 = scmp.eq.s32.totalorder %s15, 0
    %p63 = por %p61, %p62
    %s65 = sadd.s32 %s64, 1
    %p68 = scmp.eq.s32.totalorder %s9, 1
    %p69 = scmp.ne.s32.totalorder %s64, %s66
    %p70 = scmp.eq.s32.totalorder %s9, 0
    %p71 = por %p69, %p70
    %p72 = scmp.ne.s32.totalorder %s64, %s66
    %p73 = scmp.eq.s32.totalorder %s14, 1
    %p74 = por %p72, %p73
    %p75 = scmp.ne.s32.totalorder %s66, %s67
    %p76 = scmp.eq.s32.totalorder %s14, 0
    %p77 = por %p75, %p76
    %p78 = scmp.ne.s32.totalorder %s66, %s67
    %p79 = scmp.eq.s32.totalorder %s15, 1
    %p80 = por %p78, %p79
    %p82 = scmp.ne.s32.totalorder %s67, %s81
    %p83 = scmp.eq.s32.totalorder %s15, 0
    %p84 = por %p82, %p83
    %s85 = ssub.s32 %s9, %s16
    %p86 = scmp.eq.s32.totalorder %s85, 0
    %s88 = sadd.s32 %s87, 1
    %s89 = scalar_select %p86, %s87, %s88
    %p92 = pneg %p86
    %p93 = scmp.eq.s32.totalorder %s9, 1
    %p94 = por %p92, %p93
    %p95 = scmp.ne.s32.totalorder %s87, %s90
    %p96 = scmp.eq.s32.totalorder %s9, 0
    %p97 = por %p95, %p96
    %p98 = scmp.ne.s32.totalorder %s87, %s90
    %p99 = scmp.eq.s32.totalorder %s14, 1
    %p100 = por %p98, %p99
    %p101 = scmp.ne.s32.totalorder %s90, %s91
    %p102 = scmp.eq.s32.totalorder %s14, 0
    %p103 = por %p101, %p102
    %p104 = scmp.ne.s32.totalorder %s90, %s91
    %p105 = scmp.eq.s32.totalorder %s15, 1
    %p106 = por %p104, %p105
    %p108 = scmp.ne.s32.totalorder %s91, %s107
    %p109 = scmp.eq.s32.totalorder %s15, 0
    %p110 = por %p108, %p109
    %p111 = scmp.le.s32.totalorder 1, %s9
    %p112 = scmp.lt.s32.totalorder %s9, 3
    %p113 = pnand %p111, %p112
    %p114 = pneg %p113
    // Predicated region
    $region9: #{forward.4} parent=5 // pred_check
      _
    $region10: #{forward.4} parent=5 // pred_check_branch
      %116 = sbr.rel (%p113) target = $region12
    $region11: #{forward.4} parent=5 // pred_region
      %s117 = ssub.s32 %s9, 1
      // Predicated region
      $region13: #{forward.4} parent=11 // pred_check
        %p118 = pneg %p56
      $region14: #{forward.4} parent=11 // pred_check_branch
        %120 = sbr.rel (%p118) target = $region16
      $region15: #{forward.4} parent=11 // pred_region
        _
      $region16: #{forward.4} parent=11 // pred_fallthru
        _
      // Predicated region
      $region17: #{forward.4} parent=11 // pred_check
        %p121 = pneg %p77
      $region18: #{forward.4} parent=11 // pred_check_branch
        %123 = sbr.rel (%p121) target = $region20
      $region19: #{forward.4} parent=11 // pred_region
        _
      $region20: #{forward.4} parent=11 // pred_fallthru
        _
    $region12: #{forward.4} parent=5 // pred_fallthru
      _
    %p124 = scmp.lt.s32.totalorder %s9, 2
    // Predicated region
    $region21: #{forward.4} parent=5 // pred_check
      %p125 = pneg %p124
    $region22: #{forward.4} parent=5 // pred_check_branch
      %127 = sbr.rel (%p125) target = $region24
    $region23: #{forward.4} parent=5 // pred_region
      // Predicated region
      $region25: #{forward.4} parent=23 // pred_check
        %p128 = pneg %p29
      $region26: #{forward.4} parent=23 // pred_check_branch
        %130 = sbr.rel (%p128) target = $region28
      $region27: #{forward.4} parent=23 // pred_region
        %p131 = scmp.lt.s32.totalorder %s9, 1
        %s132 = scalar_select %p131, %s9, 1
        %s133 = smul.addr %s132, 34
        %s134 = smul.addr %s133, 4
        %s135 = scalar_lea.vmem %s0, %s134
      $region28: #{forward.4} parent=23 // pred_fallthru
        _
    $region24: #{forward.4} parent=5 // pred_fallthru
      _
    %p136 = scmp.le.s32.totalorder 1, %s9
    %p137 = scmp.lt.s32.totalorder %s9, 3
    %p138 = pnand %p136, %p137
    %p139 = pneg %p138
    // Predicated region
    $region29: #{forward.4} parent=5 // pred_check
      _
    $region30: #{forward.4} parent=5 // pred_check_branch
      %141 = sbr.rel (%p138) target = $region32
    $region31: #{forward.4} parent=5 // pred_region
      %s142 = ssub.s32 %s9, 1
      %p143 = scmp.lt.s32.totalorder %s14, 1
      %s144 = scalar_select %p143, %s14, 1
      %s145 = smul.addr %s144, 34
      %s146 = smul.addr %s145, 4
      %s147 = scalar_lea.vmem %s0, %s146
      %p148 = pneg %p35
      %p149 = pneg %p32
      %p150 = pneg %p56
      %p151 = pneg %p53
      %p152 = pneg %p77
      %p153 = pneg %p74
      %p154 = pneg %p103
      %p155 = pneg %p100
      %p156 = scmp.lt.s32.totalorder %s14, 1
      %s157 = scalar_select %p156, %s14, 1
      %s158 = smul.addr %s157, 7
      %s159 = smul.addr %s158, 4
      %s160 = scalar_lea.vmem %s3, %s159
      %p161 = scmp.lt.s32.totalorder %s14, 1
      %s162 = scalar_select %p161, %s14, 1
      %s163 = smul.addr %s162, 34
      %s164 = smul.addr %s163, 4
      %s165 = scalar_lea.vmem %s0, %s164
      %p166 = scmp.lt.s32.totalorder %s14, 1
      %s167 = scalar_select %p166, %s14, 1
      %s168 = smul.addr %s167, 7
      %s169 = smul.addr %s168, 4
      %s170 = scalar_lea.vmem %s3, %s169
      %v172 = vld [vmem:[%s1] sm:$0xf]
      %v173 = vld [vmem:[%s1 + $0x4] sm:$0xf]
      %v174 = vld [vmem:[%s1 + $0x8] sm:$0xf]
      %v175 = vld [vmem:[%s1 + $0xc] sm:$0xf]
      %v176 = vld [vmem:[%s1 + $0x10] sm:$0xf]
      %v177 = vld [vmem:[%s1 + $0x14] sm:$0xf]
      %v178 = vld [vmem:[%s1 + $0x18] sm:$0xf]
      %v179 = vld [vmem:[%s1 + $0x1c] sm:$0xf]
      %v180 = vld [vmem:[%s1 + $0x20] sm:$0xf]
      %v181 = vld [vmem:[%s1 + $0x24] sm:$0xf]
      %v182 = vld [vmem:[%s1 + $0x28] sm:$0xf]
      %v183 = vld [vmem:[%s1 + $0x2c] sm:$0xf]
      %v184 = vld [vmem:[%s1 + $0x30] sm:$0xf]
      %v185 = vld [vmem:[%s1 + $0x34] sm:$0xf]
      %v186 = vld [vmem:[%s1 + $0x38] sm:$0xf]
      %v187 = vld [vmem:[%s1 + $0x3c] sm:$0xf]
      %v188 = vld [vmem:[%s1 + $0x40] sm:$0xf]
      %v189 = vld [vmem:[%s1 + $0x44] sm:$0xf]
      %v190 = vld [vmem:[%s1 + $0x48] sm:$0xf]
      %v191 = vld [vmem:[%s1 + $0x4c] sm:$0xf]
      %v192 = vld [vmem:[%s1 + $0x50] sm:$0xf]
      %v193 = vld [vmem:[%s1 + $0x54] sm:$0xf]
      %v194 = vld [vmem:[%s1 + $0x58] sm:$0xf]
      %v195 = vld [vmem:[%s1 + $0x5c] sm:$0xf]
      %v196 = vld [vmem:[%s1 + $0x60] sm:$0xf]
      %v197 = vld [vmem:[%s1 + $0x64] sm:$0xf]
      %v198 = vld [vmem:[%s1 + $0x68] sm:$0xf]
      %v199 = vld [vmem:[%s1 + $0x6c] sm:$0xf]
      %v200 = vld [vmem:[%s1 + $0x70] sm:$0xf]
      %v201 = vld [vmem:[%s1 + $0x74] sm:$0xf]
      %v202 = vld [vmem:[%s1 + $0x78] sm:$0xf]
      %v203 = vld [vmem:[%s1 + $0x7c] sm:$0xf]
      %v204 = vld [vmem:[%s1 + $0x80] sm:$0xf]
      %v205 = vld [vmem:[%s1 + $0x84] sm:$0xf]
      %v206 = vld [vmem:[%s1 + $0x88] sm:$0xf]
      %v207 = vld [vmem:[%s1 + $0x8c] sm:$0xf]
      %v208 = vld [vmem:[%s2] sm:$0x1]
      %v209 = vld [vmem:[%s165] sm:$0x8]
      %v210 = vld [vmem:[%s165 + $0x4] sm:$0xf]
      %v211 = vld [vmem:[%s165 + $0x8] sm:$0xf]
      %v212 = vld [vmem:[%s165 + $0xc] sm:$0xf]
      %v213 = vld [vmem:[%s165 + $0x10] sm:$0xf]
      %v214 = vld [vmem:[%s165 + $0x14] sm:$0xf]
      %v215 = vld [vmem:[%s165 + $0x18] sm:$0xf]
      %v216 = vld [vmem:[%s165 + $0x1c] sm:$0xf]
      %v217 = vld [vmem:[%s165 + $0x20] sm:$0xf]
      %v218 = vld [vmem:[%s165 + $0x24] sm:$0xf]
      %v219 = vld [vmem:[%s165 + $0x28] sm:$0xf]
      %v220 = vld [vmem:[%s165 + $0x2c] sm:$0xf]
      %v221 = vld [vmem:[%s165 + $0x30] sm:$0xf]
      %v222 = vld [vmem:[%s165 + $0x34] sm:$0xf]
      %v223 = vld [vmem:[%s165 + $0x38] sm:$0xf]
      %v224 = vld [vmem:[%s165 + $0x3c] sm:$0xf]
      %v225 = vld [vmem:[%s165 + $0x40] sm:$0xf]
      %v226 = vld [vmem:[%s165 + $0x44] sm:$0xf]
      %v227 = vld [vmem:[%s165 + $0x48] sm:$0xf]
      %v228 = vld [vmem:[%s165 + $0x4c] sm:$0xf]
      %v229 = vld [vmem:[%s165 + $0x50] sm:$0xf]
      %v230 = vld [vmem:[%s165 + $0x54] sm:$0xf]
      %v231 = vld [vmem:[%s165 + $0x58] sm:$0xf]
      %v232 = vld [vmem:[%s165 + $0x5c] sm:$0xf]
      %v233 = vld [vmem:[%s165 + $0x60] sm:$0xf]
      %v234 = vld [vmem:[%s165 + $0x64] sm:$0xf]
      %v235 = vld [vmem:[%s165 + $0x68] sm:$0xf]
      %v236 = vld [vmem:[%s165 + $0x6c] sm:$0xf]
      %v237 = vld [vmem:[%s165 + $0x70] sm:$0xf]
      %v238 = vld [vmem:[%s165 + $0x74] sm:$0x1]
      %v239 = vld [vmem:[%s165 + $0x8] sm:$0x8]
      %v240 = vld [vmem:[%s165 + $0x74] sm:$0xf]
      %v241 = vld [vmem:[%s165 + $0x78] sm:$0xf]
      %v242 = vld [vmem:[%s165 + $0x7c] sm:$0x1]
      %v243 = vld [vmem:[%s165 + $0x10] sm:$0x8]
      %v244 = vld [vmem:[%s165 + $0x7c] sm:$0xf]
      %v245 = vld [vmem:[%s165 + $0x80] sm:$0xf]
      %v246 = vld [vmem:[%s165 + $0x84] sm:$0x1]
      %v276 = vunpack.c.l.b16 %v209
      %v277 = vunpack.c.l.b16 %v210
      %v278 = vunpack.c.l.b16 %v211
      %v279 = vunpack.c.l.b16 %v212
      %v280 = vunpack.c.l.b16 %v213
      %v281 = vunpack.c.l.b16 %v214
      %v282 = vunpack.c.l.b16 %v215
      %v283 = vunpack.c.l.b16 %v216
      %v284 = vunpack.c.l.b16 %v217
      %v285 = vunpack.c.l.b16 %v218
      %v286 = vunpack.c.l.b16 %v219
      %v287 = vunpack.c.l.b16 %v220
      %v288 = vunpack.c.l.b16 %v221
      %v289 = vunpack.c.l.b16 %v222
      %v290 = vunpack.c.l.b16 %v223
      %v291 = vunpack.c.l.b16 %v224
      %v292 = vunpack.c.l.b16 %v225
      %v293 = vunpack.c.l.b16 %v226
      %v294 = vunpack.c.l.b16 %v227
      %v295 = vunpack.c.l.b16 %v228
      %v296 = vunpack.c.l.b16 %v229
      %v297 = vunpack.c.l.b16 %v230
      %v298 = vunpack.c.l.b16 %v231
      %v299 = vunpack.c.l.b16 %v232
      %v300 = vunpack.c.l.b16 %v233
      %v301 = vunpack.c.l.b16 %v234
      %v302 = vunpack.c.l.b16 %v235
      %v303 = vunpack.c.l.b16 %v236
      %v304 = vunpack.c.l.b16 %v237
      %v305 = vpack.c.b16 %v277, %v276
      %v306 = vpack.c.b16 %v279, %v278
      %v307 = vpack.c.b16 %v281, %v280
      %v308 = vpack.c.b16 %v283, %v282
      %v309 = vpack.c.b16 %v285, %v284
      %v310 = vpack.c.b16 %v287, %v286
      %v311 = vpack.c.b16 %v289, %v288
      %v312 = vpack.c.b16 %v291, %v290
      %v313 = vpack.c.b16 %v293, %v292
      %v314 = vpack.c.b16 %v295, %v294
      %v315 = vpack.c.b16 %v297, %v296
      %v316 = vpack.c.b16 %v299, %v298
      %v317 = vpack.c.b16 %v301, %v300
      %v318 = vpack.c.b16 %v303, %v302
      %v319 = vpack.c.b16 %v304, %v304
      %v320 = vpack.c.b16 %v278, %v277
      %v321 = vpack.c.b16 %v280, %v279
      %v322 = vpack.c.b16 %v282, %v281
      %v323 = vpack.c.b16 %v284, %v283
      %v324 = vpack.c.b16 %v286, %v285
      %v325 = vpack.c.b16 %v288, %v287
      %v326 = vpack.c.b16 %v290, %v289
      %v327 = vpack.c.b16 %v292, %v291
      %v328 = vpack.c.b16 %v294, %v293
      %v329 = vpack.c.b16 %v296, %v295
      %v330 = vpack.c.b16 %v298, %v297
      %v331 = vpack.c.b16 %v300, %v299
      %v332 = vpack.c.b16 %v302, %v301
      %v333 = vpack.c.b16 %v304, %v303
      %vm334 = vsmask.f32 3328
      %v336 = vshrl.u32 %v320, 16
      %v338 = vrot.slane %v336, 4
      %v339 = vshll.u32 %v320, 16
      %v341 = vrot.slane %v339, 5
      %v342 = vor.u32 %v338, %v341
      %v344 = vshrl.u32 %v321, 16
      %v346 = vrot.slane %v344, 4
      %v347 = vshll.u32 %v321, 16
      %v349 = vrot.slane %v347, 5
      %v350 = vor.u32 %v346, %v349
      %v351 = vsel %vm334, %v342, %v350
      %v353 = vshrl.u32 %v322, 16
      %v355 = vrot.slane %v353, 4
      %v356 = vshll.u32 %v322, 16
      %v358 = vrot.slane %v356, 5
      %v359 = vor.u32 %v355, %v358
      %v360 = vsel %vm334, %v350, %v359
      %v362 = vshrl.u32 %v323, 16
      %v364 = vrot.slane %v362, 4
      %v365 = vshll.u32 %v323, 16
      %v367 = vrot.slane %v365, 5
      %v368 = vor.u32 %v364, %v367
      %v369 = vsel %vm334, %v359, %v368
      %v371 = vshrl.u32 %v324, 16
      %v373 = vrot.slane %v371, 4
      %v374 = vshll.u32 %v324, 16
      %v376 = vrot.slane %v374, 5
      %v377 = vor.u32 %v373, %v376
      %v378 = vsel %vm334, %v368, %v377
      %v380 = vshrl.u32 %v325, 16
      %v382 = vrot.slane %v380, 4
      %v383 = vshll.u32 %v325, 16
      %v385 = vrot.slane %v383, 5
      %v386 = vor.u32 %v382, %v385
      %v387 = vsel %vm334, %v377, %v386
      %v389 = vshrl.u32 %v326, 16
      %v391 = vrot.slane %v389, 4
      %v392 = vshll.u32 %v326, 16
      %v394 = vrot.slane %v392, 5
      %v395 = vor.u32 %v391, %v394
      %v396 = vsel %vm334, %v386, %v395
      %v398 = vshrl.u32 %v327, 16
      %v400 = vrot.slane %v398, 4
      %v401 = vshll.u32 %v327, 16
      %v403 = vrot.slane %v401, 5
      %v404 = vor.u32 %v400, %v403
      %v405 = vsel %vm334, %v395, %v404
      %v407 = vshrl.u32 %v328, 16
      %v409 = vrot.slane %v407, 4
      %v410 = vshll.u32 %v328, 16
      %v412 = vrot.slane %v410, 5
      %v413 = vor.u32 %v409, %v412
      %v414 = vsel %vm334, %v404, %v413
      %v416 = vshrl.u32 %v329, 16
      %v418 = vrot.slane %v416, 4
      %v419 = vshll.u32 %v329, 16
      %v421 = vrot.slane %v419, 5
      %v422 = vor.u32 %v418, %v421
      %v423 = vsel %vm334, %v413, %v422
      %v425 = vshrl.u32 %v330, 16
      %v427 = vrot.slane %v425, 4
      %v428 = vshll.u32 %v330, 16
      %v430 = vrot.slane %v428, 5
      %v431 = vor.u32 %v427, %v430
      %v432 = vsel %vm334, %v422, %v431
      %v434 = vshrl.u32 %v331, 16
      %v436 = vrot.slane %v434, 4
      %v437 = vshll.u32 %v331, 16
      %v439 = vrot.slane %v437, 5
      %v440 = vor.u32 %v436, %v439
      %v441 = vsel %vm334, %v431, %v440
      %v443 = vshrl.u32 %v332, 16
      %v445 = vrot.slane %v443, 4
      %v446 = vshll.u32 %v332, 16
      %v448 = vrot.slane %v446, 5
      %v449 = vor.u32 %v445, %v448
      %v450 = vsel %vm334, %v440, %v449
      %v452 = vshrl.u32 %v333, 16
      %v454 = vrot.slane %v452, 4
      %v455 = vshll.u32 %v333, 16
      %v457 = vrot.slane %v455, 5
      %v458 = vor.u32 %v454, %v457
      %v459 = vsel %vm334, %v449, %v458
      %460 = vrot.lane.b32.xlu0 %v342, 32
      %v461 = vpop.permute.xlu0 %460
      %462 = vrot.lane.b32.xlu0 %v351, 32
      %v463 = vpop.permute.xlu0 %462
      %464 = vrot.lane.b32.xlu0 %v360, 32
      %v465 = vpop.permute.xlu0 %464
      %466 = vrot.lane.b32.xlu0 %v369, 32
      %v467 = vpop.permute.xlu0 %466
      %468 = vrot.lane.b32.xlu0 %v378, 32
      %v469 = vpop.permute.xlu0 %468
      %470 = vrot.lane.b32.xlu0 %v387, 32
      %v471 = vpop.permute.xlu0 %470
      %472 = vrot.lane.b32.xlu0 %v396, 32
      %v473 = vpop.permute.xlu0 %472
      %474 = vrot.lane.b32.xlu0 %v405, 32
      %v475 = vpop.permute.xlu0 %474
      %476 = vrot.lane.b32.xlu0 %v414, 32
      %v477 = vpop.permute.xlu0 %476
      %478 = vrot.lane.b32.xlu0 %v423, 32
      %v479 = vpop.permute.xlu0 %478
      %480 = vrot.lane.b32.xlu0 %v432, 32
      %v481 = vpop.permute.xlu0 %480
      %482 = vrot.lane.b32.xlu0 %v441, 32
      %v483 = vpop.permute.xlu0 %482
      %484 = vrot.lane.b32.xlu0 %v450, 32
      %v485 = vpop.permute.xlu0 %484
      %486 = vrot.lane.b32.xlu0 %v459, 32
      %v487 = vpop.permute.xlu0 %486
      %488 = vrot.lane.b32.xlu0 %v458, 32
      %v489 = vpop.permute.xlu0 %488
      %v491 = vunpack.c.l.b16 %v238
      %v492 = vpack.c.b16 %v491, %v491
      %vm493 = vcmask 1042432
      %v494 = vrot.slane %v320, 5
      %v495 = vrot.slane %v321, 5
      %v496 = vsel %vm493, %v494, %v495
      %v497 = vrot.slane %v322, 5
      %v498 = vsel %vm493, %v495, %v497
      %v499 = vrot.slane %v323, 5
      %v500 = vsel %vm493, %v497, %v499
      %v501 = vrot.slane %v324, 5
      %v502 = vsel %vm493, %v499, %v501
      %v503 = vrot.slane %v325, 5
      %v504 = vsel %vm493, %v501, %v503
      %v505 = vrot.slane %v326, 5
      %v506 = vsel %vm493, %v503, %v505
      %v507 = vrot.slane %v327, 5
      %v508 = vsel %vm493, %v505, %v507
      %v509 = vrot.slane %v328, 5
      %v510 = vsel %vm493, %v507, %v509
      %v511 = vrot.slane %v329, 5
      %v512 = vsel %vm493, %v509, %v511
      %v513 = vrot.slane %v330, 5
      %v514 = vsel %vm493, %v511, %v513
      %v515 = vrot.slane %v331, 5
      %v516 = vsel %vm493, %v513, %v515
      %v517 = vrot.slane %v332, 5
      %v518 = vsel %vm493, %v515, %v517
      %v519 = vrot.slane %v333, 5
      %v520 = vsel %vm493, %v517, %v519
      %v521 = vrot.slane %v492, 5
      %v522 = vsel %vm493, %v519, %v521
      %523 = vrot.lane.b32.xlu0 %v494, 64
      %v524 = vpop.permute.xlu0 %523
      %525 = vrot.lane.b32.xlu0 %v496, 64
      %v526 = vpop.permute.xlu0 %525
      %527 = vrot.lane.b32.xlu0 %v498, 64
      %v528 = vpop.permute.xlu0 %527
      %529 = vrot.lane.b32.xlu0 %v500, 64
      %v530 = vpop.permute.xlu0 %529
      %531 = vrot.lane.b32.xlu0 %v502, 64
      %v532 = vpop.permute.xlu0 %531
      %533 = vrot.lane.b32.xlu0 %v504, 64
      %v534 = vpop.permute.xlu0 %533
      %535 = vrot.lane.b32.xlu0 %v506, 64
      %v536 = vpop.permute.xlu0 %535
      %537 = vrot.lane.b32.xlu0 %v508, 64
      %v538 = vpop.permute.xlu0 %537
      %539 = vrot.lane.b32.xlu0 %v510, 64
      %v540 = vpop.permute.xlu0 %539
      %541 = vrot.lane.b32.xlu0 %v512, 64
      %v542 = vpop.permute.xlu0 %541
      %543 = vrot.lane.b32.xlu0 %v514, 64
      %v544 = vpop.permute.xlu0 %543
      %545 = vrot.lane.b32.xlu0 %v516, 64
      %v546 = vpop.permute.xlu0 %545
      %547 = vrot.lane.b32.xlu0 %v518, 64
      %v548 = vpop.permute.xlu0 %547
      %549 = vrot.lane.b32.xlu0 %v520, 64
      %v550 = vpop.permute.xlu0 %549
      %551 = vrot.lane.b32.xlu0 %v522, 64
      %v552 = vpop.permute.xlu0 %551
      %v556 = vunpack.c.l.b16 %v239
      %v557 = vunpack.c.l.b16 %v240
      %v558 = vunpack.c.l.b16 %v241
      %v559 = vpack.c.b16 %v279, %v556
      %v560 = vpack.c.b16 %v557, %v304
      %v561 = vpack.c.b16 %v558, %v558
      %562 = vrot.lane.b32.xlu0 %v559, 96
      %v563 = vpop.permute.xlu0 %562
      %564 = vrot.lane.b32.xlu0 %v307, 96
      %v565 = vpop.permute.xlu0 %564
      %566 = vrot.lane.b32.xlu0 %v308, 96
      %v567 = vpop.permute.xlu0 %566
      %568 = vrot.lane.b32.xlu0 %v309, 96
      %v569 = vpop.permute.xlu0 %568
      %570 = vrot.lane.b32.xlu0 %v310, 96
      %v571 = vpop.permute.xlu0 %570
      %572 = vrot.lane.b32.xlu0 %v311, 96
      %v573 = vpop.permute.xlu0 %572
      %574 = vrot.lane.b32.xlu0 %v312, 96
      %v575 = vpop.permute.xlu0 %574
      %576 = vrot.lane.b32.xlu0 %v313, 96
      %v577 = vpop.permute.xlu0 %576
      %578 = vrot.lane.b32.xlu0 %v314, 96
      %v579 = vpop.permute.xlu0 %578
      %580 = vrot.lane.b32.xlu0 %v315, 96
      %v581 = vpop.permute.xlu0 %580
      %582 = vrot.lane.b32.xlu0 %v316, 96
      %v583 = vpop.permute.xlu0 %582
      %584 = vrot.lane.b32.xlu0 %v317, 96
      %v585 = vpop.permute.xlu0 %584
      %586 = vrot.lane.b32.xlu0 %v318, 96
      %v587 = vpop.permute.xlu0 %586
      %588 = vrot.lane.b32.xlu0 %v560, 96
      %v589 = vpop.permute.xlu0 %588
      %590 = vrot.lane.b32.xlu0 %v561, 96
      %v591 = vpop.permute.xlu0 %590
      %v592 = vpack.c.b16 %v558, %v557
      %v594 = vshrl.u32 %v592, 16
      %v596 = vrot.slane %v594, 4
      %v597 = vshll.u32 %v592, 16
      %v599 = vrot.slane %v597, 5
      %v600 = vor.u32 %v596, %v599
      %v601 = vsel %vm334, %v458, %v600
      %v603 = vunpack.c.l.b16 %v242
      %v604 = vpack.c.b16 %v603, %v603
      %v605 = vrot.slane %v592, 5
      %v606 = vsel %vm493, %v519, %v605
      %v607 = vrot.slane %v604, 5
      %v608 = vsel %vm493, %v605, %v607
      %609 = vrot.lane.b32.xlu0 %v495, 32
      %v610 = vpop.permute.xlu0 %609
      %611 = vrot.lane.b32.xlu0 %v498, 32
      %v612 = vpop.permute.xlu0 %611
      %613 = vrot.lane.b32.xlu0 %v500, 32
      %v614 = vpop.permute.xlu0 %613
      %615 = vrot.lane.b32.xlu0 %v502, 32
      %v616 = vpop.permute.xlu0 %615
      %617 = vrot.lane.b32.xlu0 %v504, 32
      %v618 = vpop.permute.xlu0 %617
      %619 = vrot.lane.b32.xlu0 %v506, 32
      %v620 = vpop.permute.xlu0 %619
      %621 = vrot.lane.b32.xlu0 %v508, 32
      %v622 = vpop.permute.xlu0 %621
      %623 = vrot.lane.b32.xlu0 %v510, 32
      %v624 = vpop.permute.xlu0 %623
      %625 = vrot.lane.b32.xlu0 %v512, 32
      %v626 = vpop.permute.xlu0 %625
      %627 = vrot.lane.b32.xlu0 %v514, 32
      %v628 = vpop.permute.xlu0 %627
      %629 = vrot.lane.b32.xlu0 %v516, 32
      %v630 = vpop.permute.xlu0 %629
      %631 = vrot.lane.b32.xlu0 %v518, 32
      %v632 = vpop.permute.xlu0 %631
      %633 = vrot.lane.b32.xlu0 %v520, 32
      %v634 = vpop.permute.xlu0 %633
      %635 = vrot.lane.b32.xlu0 %v606, 32
      %v636 = vpop.permute.xlu0 %635
      %637 = vrot.lane.b32.xlu0 %v608, 32
      %v638 = vpop.permute.xlu0 %637
      %v642 = vunpack.c.l.b16 %v243
      %v643 = vunpack.c.l.b16 %v244
      %v644 = vunpack.c.l.b16 %v245
      %v645 = vpack.c.b16 %v281, %v642
      %v646 = vpack.c.b16 %v643, %v558
      %v647 = vpack.c.b16 %v644, %v644
      %648 = vrot.lane.b32.xlu0 %v645, 64
      %v649 = vpop.permute.xlu0 %648
      %650 = vrot.lane.b32.xlu0 %v308, 64
      %v651 = vpop.permute.xlu0 %650
      %652 = vrot.lane.b32.xlu0 %v309, 64
      %v653 = vpop.permute.xlu0 %652
      %654 = vrot.lane.b32.xlu0 %v310, 64
      %v655 = vpop.permute.xlu0 %654
      %656 = vrot.lane.b32.xlu0 %v311, 64
      %v657 = vpop.permute.xlu0 %656
      %658 = vrot.lane.b32.xlu0 %v312, 64
      %v659 = vpop.permute.xlu0 %658
      %660 = vrot.lane.b32.xlu0 %v313, 64
      %v661 = vpop.permute.xlu0 %660
      %662 = vrot.lane.b32.xlu0 %v314, 64
      %v663 = vpop.permute.xlu0 %662
      %664 = vrot.lane.b32.xlu0 %v315, 64
      %v665 = vpop.permute.xlu0 %664
      %666 = vrot.lane.b32.xlu0 %v316, 64
      %v667 = vpop.permute.xlu0 %666
      %668 = vrot.lane.b32.xlu0 %v317, 64
      %v669 = vpop.permute.xlu0 %668
      %670 = vrot.lane.b32.xlu0 %v318, 64
      %v671 = vpop.permute.xlu0 %670
      %672 = vrot.lane.b32.xlu0 %v560, 64
      %v673 = vpop.permute.xlu0 %672
      %674 = vrot.lane.b32.xlu0 %v646, 64
      %v675 = vpop.permute.xlu0 %674
      %676 = vrot.lane.b32.xlu0 %v647, 64
      %v677 = vpop.permute.xlu0 %676
      %v678 = vpack.c.b16 %v644, %v643
      %v680 = vshrl.u32 %v678, 16
      %v682 = vrot.slane %v680, 4
      %v683 = vshll.u32 %v678, 16
      %v685 = vrot.slane %v683, 5
      %v686 = vor.u32 %v682, %v685
      %v687 = vsel %vm334, %v600, %v686
      %688 = vrot.lane.b32.xlu0 %v359, 96
      %v689 = vpop.permute.xlu0 %688
      %690 = vrot.lane.b32.xlu0 %v369, 96
      %v691 = vpop.permute.xlu0 %690
      %692 = vrot.lane.b32.xlu0 %v378, 96
      %v693 = vpop.permute.xlu0 %692
      %694 = vrot.lane.b32.xlu0 %v387, 96
      %v695 = vpop.permute.xlu0 %694
      %696 = vrot.lane.b32.xlu0 %v396, 96
      %v697 = vpop.permute.xlu0 %696
      %698 = vrot.lane.b32.xlu0 %v405, 96
      %v699 = vpop.permute.xlu0 %698
      %700 = vrot.lane.b32.xlu0 %v414, 96
      %v701 = vpop.permute.xlu0 %700
      %702 = vrot.lane.b32.xlu0 %v423, 96
      %v703 = vpop.permute.xlu0 %702
      %704 = vrot.lane.b32.xlu0 %v432, 96
      %v705 = vpop.permute.xlu0 %704
      %706 = vrot.lane.b32.xlu0 %v441, 96
      %v707 = vpop.permute.xlu0 %706
      %708 = vrot.lane.b32.xlu0 %v450, 96
      %v709 = vpop.permute.xlu0 %708
      %710 = vrot.lane.b32.xlu0 %v459, 96
      %v711 = vpop.permute.xlu0 %710
      %712 = vrot.lane.b32.xlu0 %v601, 96
      %v713 = vpop.permute.xlu0 %712
      %714 = vrot.lane.b32.xlu0 %v687, 96
      %v715 = vpop.permute.xlu0 %714
      %716 = vrot.lane.b32.xlu0 %v686, 96
      %v717 = vpop.permute.xlu0 %716
      %v719 = vunpack.c.l.b16 %v246
      %v720 = vpack.c.b16 %v719, %v719
      %v721 = vrot.slane %v678, 5
      %v722 = vsel %vm493, %v605, %v721
      %v723 = vrot.slane %v720, 5
      %v724 = vsel %vm493, %v721, %v723
      %vm725 = vcmask 261120
      %v728 = vsel %vm725, %v305, %v461
      %v731 = vsel %vm725, %v306, %v463
      %v734 = vsel %vm725, %v307, %v465
      %v737 = vsel %vm725, %v308, %v467
      %v740 = vsel %vm725, %v309, %v469
      %v743 = vsel %vm725, %v310, %v471
      %v746 = vsel %vm725, %v311, %v473
      %v749 = vsel %vm725, %v312, %v475
      %v752 = vsel %vm725, %v313, %v477
      %v755 = vsel %vm725, %v314, %v479
      %v758 = vsel %vm725, %v315, %v481
      %v761 = vsel %vm725, %v316, %v483
      %v764 = vsel %vm725, %v317, %v485
      %v767 = vsel %vm725, %v318, %v487
      %v770 = vsel %vm725, %v319, %v489
      %vm771 = vcmask 523264
      %v773 = vsel %vm771, %v728, %v524
      %v775 = vsel %vm771, %v731, %v526
      %v777 = vsel %vm771, %v734, %v528
      %v779 = vsel %vm771, %v737, %v530
      %v781 = vsel %vm771, %v740, %v532
      %v783 = vsel %vm771, %v743, %v534
      %v785 = vsel %vm771, %v746, %v536
      %v787 = vsel %vm771, %v749, %v538
      %v789 = vsel %vm771, %v752, %v540
      %v791 = vsel %vm771, %v755, %v542
      %v793 = vsel %vm771, %v758, %v544
      %v795 = vsel %vm771, %v761, %v546
      %v797 = vsel %vm771, %v764, %v548
      %v799 = vsel %vm771, %v767, %v550
      %v801 = vsel %vm771, %v770, %v552
      %vm802 = vcmask 785408
      %v804 = vsel %vm802, %v773, %v563
      %v806 = vsel %vm802, %v775, %v565
      %v808 = vsel %vm802, %v777, %v567
      %v810 = vsel %vm802, %v779, %v569
      %v812 = vsel %vm802, %v781, %v571
      %v814 = vsel %vm802, %v783, %v573
      %v816 = vsel %vm802, %v785, %v575
      %v818 = vsel %vm802, %v787, %v577
      %v820 = vsel %vm802, %v789, %v579
      %v822 = vsel %vm802, %v791, %v581
      %v824 = vsel %vm802, %v793, %v583
      %v826 = vsel %vm802, %v795, %v585
      %v828 = vsel %vm802, %v797, %v587
      %v830 = vsel %vm802, %v799, %v589
      %v832 = vsel %vm802, %v801, %v591
      %v835 = vsel %vm725, %v350, %v610
      %v838 = vsel %vm725, %v360, %v612
      %v841 = vsel %vm725, %v369, %v614
      %v844 = vsel %vm725, %v378, %v616
      %v847 = vsel %vm725, %v387, %v618
      %v850 = vsel %vm725, %v396, %v620
      %v853 = vsel %vm725, %v405, %v622
      %v856 = vsel %vm725, %v414, %v624
      %v859 = vsel %vm725, %v423, %v626
      %v862 = vsel %vm725, %v432, %v628
      %v865 = vsel %vm725, %v441, %v630
      %v868 = vsel %vm725, %v450, %v632
      %v871 = vsel %vm725, %v459, %v634
      %v874 = vsel %vm725, %v601, %v636
      %v877 = vsel %vm725, %v600, %v638
      %v879 = vsel %vm771, %v835, %v649
      %v881 = vsel %vm771, %v838, %v651
      %v883 = vsel %vm771, %v841, %v653
      %v885 = vsel %vm771, %v844, %v655
      %v887 = vsel %vm771, %v847, %v657
      %v889 = vsel %vm771, %v850, %v659
      %v891 = vsel %vm771, %v853, %v661
      %v893 = vsel %vm771, %v856, %v663
      %v895 = vsel %vm771, %v859, %v665
      %v897 = vsel %vm771, %v862, %v667
      %v899 = vsel %vm771, %v865, %v669
      %v901 = vsel %vm771, %v868, %v671
      %v903 = vsel %vm771, %v871, %v673
      %v905 = vsel %vm771, %v874, %v675
      %v907 = vsel %vm771, %v877, %v677
      %v909 = vsel %vm802, %v879, %v689
      %v911 = vsel %vm802, %v881, %v691
      %v913 = vsel %vm802, %v883, %v693
      %v915 = vsel %vm802, %v885, %v695
      %v917 = vsel %vm802, %v887, %v697
      %v919 = vsel %vm802, %v889, %v699
      %v921 = vsel %vm802, %v891, %v701
      %v923 = vsel %vm802, %v893, %v703
      %v925 = vsel %vm802, %v895, %v705
      %v927 = vsel %vm802, %v897, %v707
      %v929 = vsel %vm802, %v899, %v709
      %v931 = vsel %vm802, %v901, %v711
      %v933 = vsel %vm802, %v903, %v713
      %v935 = vsel %vm802, %v905, %v715
      %v937 = vsel %vm802, %v907, %v717
      %v939 = vlaneseq
      %v940 = vshrl.u32 %v939, 7
      %v941 = vsub.s32 0, %v940
      %v942 = vrot.slane %v208, %v941
      %vm944 = vsmask.f32 4352
      %v945 = vshrl.u32 %v804, 16
      %v947 = vrot.slane %v945, 3
      %v948 = vshll.u32 %v804, 16
      %v950 = vrot.slane %v948, 4
      %v951 = vor.u32 %v947, %v950
      %v952 = vshrl.u32 %v806, 16
      %v954 = vrot.slane %v952, 3
      %v955 = vshll.u32 %v806, 16
      %v957 = vrot.slane %v955, 4
      %v958 = vor.u32 %v954, %v957
      %v959 = vsel %vm944, %v951, %v958
      %v960 = vshrl.u32 %v909, 16
      %v962 = vrot.slane %v960, 3
      %v963 = vshll.u32 %v909, 16
      %v965 = vrot.slane %v963, 4
      %v966 = vor.u32 %v962, %v965
      %v967 = vshrl.u32 %v911, 16
      %v969 = vrot.slane %v967, 3
      %v970 = vshll.u32 %v911, 16
      %v972 = vrot.slane %v970, 4
      %v973 = vor.u32 %v969, %v972
      %v974 = vsel %vm944, %v966, %v973
      %v976 = vshrl.u32 %v497, 16
      %v978 = vrot.slane %v976, 3
      %v979 = vshll.u32 %v497, 16
      %v981 = vrot.slane %v979, 4
      %v982 = vor.u32 %v978, %v981
      %v984 = vshrl.u32 %v500, 16
      %v986 = vrot.slane %v984, 3
      %v987 = vshll.u32 %v500, 16
      %v989 = vrot.slane %v987, 4
      %v990 = vor.u32 %v986, %v989
      %v991 = vsel %vm944, %v982, %v990
      %v992 = vshrl.u32 %v808, 16
      %v994 = vrot.slane %v992, 3
      %v995 = vshll.u32 %v808, 16
      %v997 = vrot.slane %v995, 4
      %v998 = vor.u32 %v994, %v997
      %v999 = vsel %vm944, %v958, %v998
      %v1000 = vshrl.u32 %v913, 16
      %v1002 = vrot.slane %v1000, 3
      %v1003 = vshll.u32 %v913, 16
      %v1005 = vrot.slane %v1003, 4
      %v1006 = vor.u32 %v1002, %v1005
      %v1007 = vsel %vm944, %v973, %v1006
      %v1009 = vshrl.u32 %v502, 16
      %v1011 = vrot.slane %v1009, 3
      %v1012 = vshll.u32 %v502, 16
      %v1014 = vrot.slane %v1012, 4
      %v1015 = vor.u32 %v1011, %v1014
      %v1016 = vsel %vm944, %v990, %v1015
      %v1017 = vshrl.u32 %v810, 16
      %v1019 = vrot.slane %v1017, 3
      %v1020 = vshll.u32 %v810, 16
      %v1022 = vrot.slane %v1020, 4
      %v1023 = vor.u32 %v1019, %v1022
      %v1024 = vsel %vm944, %v998, %v1023
      %v1025 = vshrl.u32 %v915, 16
      %v1027 = vrot.slane %v1025, 3
      %v1028 = vshll.u32 %v915, 16
      %v1030 = vrot.slane %v1028, 4
      %v1031 = vor.u32 %v1027, %v1030
      %v1032 = vsel %vm944, %v1006, %v1031
      %v1034 = vshrl.u32 %v504, 16
      %v1036 = vrot.slane %v1034, 3
      %v1037 = vshll.u32 %v504, 16
      %v1039 = vrot.slane %v1037, 4
      %v1040 = vor.u32 %v1036, %v1039
      %v1041 = vsel %vm944, %v1015, %v1040
      %v1042 = vshrl.u32 %v812, 16
      %v1044 = vrot.slane %v1042, 3
      %v1045 = vshll.u32 %v812, 16
      %v1047 = vrot.slane %v1045, 4
      %v1048 = vor.u32 %v1044, %v1047
      %v1049 = vsel %vm944, %v1023, %v1048
      %v1050 = vshrl.u32 %v917, 16
      %v1052 = vrot.slane %v1050, 3
      %v1053 = vshll.u32 %v917, 16
      %v1055 = vrot.slane %v1053, 4
      %v1056 = vor.u32 %v1052, %v1055
      %v1057 = vsel %vm944, %v1031, %v1056
      %v1059 = vshrl.u32 %v506, 16
      %v1061 = vrot.slane %v1059, 3
      %v1062 = vshll.u32 %v506, 16
      %v1064 = vrot.slane %v1062, 4
      %v1065 = vor.u32 %v1061, %v1064
      %v1066 = vsel %vm944, %v1040, %v1065
      %v1067 = vshrl.u32 %v814, 16
      %v1069 = vrot.slane %v1067, 3
      %v1070 = vshll.u32 %v814, 16
      %v1072 = vrot.slane %v1070, 4
      %v1073 = vor.u32 %v1069, %v1072
      %v1074 = vsel %vm944, %v1048, %v1073
      %v1075 = vshrl.u32 %v919, 16
      %v1077 = vrot.slane %v1075, 3
      %v1078 = vshll.u32 %v919, 16
      %v1080 = vrot.slane %v1078, 4
      %v1081 = vor.u32 %v1077, %v1080
      %v1082 = vsel %vm944, %v1056, %v1081
      %v1084 = vshrl.u32 %v508, 16
      %v1086 = vrot.slane %v1084, 3
      %v1087 = vshll.u32 %v508, 16
      %v1089 = vrot.slane %v1087, 4
      %v1090 = vor.u32 %v1086, %v1089
      %v1091 = vsel %vm944, %v1065, %v1090
      %v1092 = vshrl.u32 %v816, 16
      %v1094 = vrot.slane %v1092, 3
      %v1095 = vshll.u32 %v816, 16
      %v1097 = vrot.slane %v1095, 4
      %v1098 = vor.u32 %v1094, %v1097
      %v1099 = vsel %vm944, %v1073, %v1098
      %v1100 = vshrl.u32 %v921, 16
      %v1102 = vrot.slane %v1100, 3
      %v1103 = vshll.u32 %v921, 16
      %v1105 = vrot.slane %v1103, 4
      %v1106 = vor.u32 %v1102, %v1105
      %v1107 = vsel %vm944, %v1081, %v1106
      %v1109 = vshrl.u32 %v510, 16
      %v1111 = vrot.slane %v1109, 3
      %v1112 = vshll.u32 %v510, 16
      %v1114 = vrot.slane %v1112, 4
      %v1115 = vor.u32 %v1111, %v1114
      %v1116 = vsel %vm944, %v1090, %v1115
      %v1117 = vshrl.u32 %v818, 16
      %v1119 = vrot.slane %v1117, 3
      %v1120 = vshll.u32 %v818, 16
      %v1122 = vrot.slane %v1120, 4
      %v1123 = vor.u32 %v1119, %v1122
      %v1124 = vsel %vm944, %v1098, %v1123
      %v1125 = vshrl.u32 %v923, 16
      %v1127 = vrot.slane %v1125, 3
      %v1128 = vshll.u32 %v923, 16
      %v1130 = vrot.slane %v1128, 4
      %v1131 = vor.u32 %v1127, %v1130
      %v1132 = vsel %vm944, %v1106, %v1131
      %v1134 = vshrl.u32 %v512, 16
      %v1136 = vrot.slane %v1134, 3
      %v1137 = vshll.u32 %v512, 16
      %v1139 = vrot.slane %v1137, 4
      %v1140 = vor.u32 %v1136, %v1139
      %v1141 = vsel %vm944, %v1115, %v1140
      %v1142 = vshrl.u32 %v820, 16
      %v1144 = vrot.slane %v1142, 3
      %v1145 = vshll.u32 %v820, 16
      %v1147 = vrot.slane %v1145, 4
      %v1148 = vor.u32 %v1144, %v1147
      %v1149 = vsel %vm944, %v1123, %v1148
      %v1150 = vshrl.u32 %v925, 16
      %v1152 = vrot.slane %v1150, 3
      %v1153 = vshll.u32 %v925, 16
      %v1155 = vrot.slane %v1153, 4
      %v1156 = vor.u32 %v1152, %v1155
      %v1157 = vsel %vm944, %v1131, %v1156
      %v1159 = vshrl.u32 %v514, 16
      %v1161 = vrot.slane %v1159, 3
      %v1162 = vshll.u32 %v514, 16
      %v1164 = vrot.slane %v1162, 4
      %v1165 = vor.u32 %v1161, %v1164
      %v1166 = vsel %vm944, %v1140, %v1165
      %v1167 = vshrl.u32 %v822, 16
      %v1169 = vrot.slane %v1167, 3
      %v1170 = vshll.u32 %v822, 16
      %v1172 = vrot.slane %v1170, 4
      %v1173 = vor.u32 %v1169, %v1172
      %v1174 = vsel %vm944, %v1148, %v1173
      %v1175 = vshrl.u32 %v927, 16
      %v1177 = vrot.slane %v1175, 3
      %v1178 = vshll.u32 %v927, 16
      %v1180 = vrot.slane %v1178, 4
      %v1181 = vor.u32 %v1177, %v1180
      %v1182 = vsel %vm944, %v1156, %v1181
      %v1184 = vshrl.u32 %v516, 16
      %v1186 = vrot.slane %v1184, 3
      %v1187 = vshll.u32 %v516, 16
      %v1189 = vrot.slane %v1187, 4
      %v1190 = vor.u32 %v1186, %v1189
      %v1191 = vsel %vm944, %v1165, %v1190
      %v1192 = vshrl.u32 %v824, 16
      %v1194 = vrot.slane %v1192, 3
      %v1195 = vshll.u32 %v824, 16
      %v1197 = vrot.slane %v1195, 4
      %v1198 = vor.u32 %v1194, %v1197
      %v1199 = vsel %vm944, %v1173, %v1198
      %v1200 = vshrl.u32 %v929, 16
      %v1202 = vrot.slane %v1200, 3
      %v1203 = vshll.u32 %v929, 16
      %v1205 = vrot.slane %v1203, 4
      %v1206 = vor.u32 %v1202, %v1205
      %v1207 = vsel %vm944, %v1181, %v1206
      %v1209 = vshrl.u32 %v518, 16
      %v1211 = vrot.slane %v1209, 3
      %v1212 = vshll.u32 %v518, 16
      %v1214 = vrot.slane %v1212, 4
      %v1215 = vor.u32 %v1211, %v1214
      %v1216 = vsel %vm944, %v1190, %v1215
      %v1217 = vshrl.u32 %v826, 16
      %v1219 = vrot.slane %v1217, 3
      %v1220 = vshll.u32 %v826, 16
      %v1222 = vrot.slane %v1220, 4
      %v1223 = vor.u32 %v1219, %v1222
      %v1224 = vsel %vm944, %v1198, %v1223
      %v1225 = vshrl.u32 %v931, 16
      %v1227 = vrot.slane %v1225, 3
      %v1228 = vshll.u32 %v931, 16
      %v1230 = vrot.slane %v1228, 4
      %v1231 = vor.u32 %v1227, %v1230
      %v1232 = vsel %vm944, %v1206, %v1231
      %v1234 = vshrl.u32 %v520, 16
      %v1236 = vrot.slane %v1234, 3
      %v1237 = vshll.u32 %v520, 16
      %v1239 = vrot.slane %v1237, 4
      %v1240 = vor.u32 %v1236, %v1239
      %v1241 = vsel %vm944, %v1215, %v1240
      %v1242 = vshrl.u32 %v828, 16
      %v1244 = vrot.slane %v1242, 3
      %v1245 = vshll.u32 %v828, 16
      %v1247 = vrot.slane %v1245, 4
      %v1248 = vor.u32 %v1244, %v1247
      %v1249 = vsel %vm944, %v1223, %v1248
      %v1250 = vshrl.u32 %v933, 16
      %v1252 = vrot.slane %v1250, 3
      %v1253 = vshll.u32 %v933, 16
      %v1255 = vrot.slane %v1253, 4
      %v1256 = vor.u32 %v1252, %v1255
      %v1257 = vsel %vm944, %v1231, %v1256
      %v1259 = vshrl.u32 %v606, 16
      %v1261 = vrot.slane %v1259, 3
      %v1262 = vshll.u32 %v606, 16
      %v1264 = vrot.slane %v1262, 4
      %v1265 = vor.u32 %v1261, %v1264
      %v1266 = vsel %vm944, %v1240, %v1265
      %v1267 = vshrl.u32 %v830, 16
      %v1269 = vrot.slane %v1267, 3
      %v1270 = vshll.u32 %v830, 16
      %v1272 = vrot.slane %v1270, 4
      %v1273 = vor.u32 %v1269, %v1272
      %v1274 = vsel %vm944, %v1248, %v1273
      %v1275 = vshrl.u32 %v935, 16
      %v1277 = vrot.slane %v1275, 3
      %v1278 = vshll.u32 %v935, 16
      %v1280 = vrot.slane %v1278, 4
      %v1281 = vor.u32 %v1277, %v1280
      %v1282 = vsel %vm944, %v1256, %v1281
      %v1284 = vshrl.u32 %v722, 16
      %v1286 = vrot.slane %v1284, 3
      %v1287 = vshll.u32 %v722, 16
      %v1289 = vrot.slane %v1287, 4
      %v1290 = vor.u32 %v1286, %v1289
      %v1291 = vsel %vm944, %v1265, %v1290
      %v1292 = vshrl.u32 %v832, 16
      %v1294 = vrot.slane %v1292, 3
      %v1295 = vshll.u32 %v832, 16
      %v1297 = vrot.slane %v1295, 4
      %v1298 = vor.u32 %v1294, %v1297
      %v1299 = vsel %vm944, %v1273, %v1298
      %v1300 = vshrl.u32 %v937, 16
      %v1302 = vrot.slane %v1300, 3
      %v1303 = vshll.u32 %v937, 16
      %v1305 = vrot.slane %v1303, 4
      %v1306 = vor.u32 %v1302, %v1305
      %v1307 = vsel %vm944, %v1281, %v1306
      %v1309 = vshrl.u32 %v724, 16
      %v1311 = vrot.slane %v1309, 3
      %v1312 = vshll.u32 %v724, 16
      %v1314 = vrot.slane %v1312, 4
      %v1315 = vor.u32 %v1311, %v1314
      %v1316 = vsel %vm944, %v1290, %v1315
      %v1381 = vunpack.c.l.b16 %v172
      %v1382 = vunpack.c.l.b16 %v173
      %v1383 = vunpack.c.l.b16 %v174
      %v1384 = vunpack.c.l.b16 %v175
      %v1385 = vunpack.c.l.b16 %v176
      %v1386 = vunpack.c.l.b16 %v177
      %v1387 = vunpack.c.l.b16 %v178
      %v1388 = vunpack.c.l.b16 %v179
      %v1389 = vunpack.c.l.b16 %v180
      %v1390 = vunpack.c.l.b16 %v181
      %v1391 = vunpack.c.l.b16 %v182
      %v1392 = vunpack.c.l.b16 %v183
      %v1393 = vunpack.c.l.b16 %v184
      %v1394 = vunpack.c.l.b16 %v185
      %v1395 = vunpack.c.l.b16 %v186
      %v1396 = vunpack.c.l.b16 %v187
      %v1397 = vunpack.c.l.b16 %v188
      %v1398 = vunpack.c.l.b16 %v189
      %v1399 = vunpack.c.l.b16 %v190
      %v1400 = vunpack.c.l.b16 %v191
      %v1401 = vunpack.c.l.b16 %v192
      %v1402 = vunpack.c.l.b16 %v193
      %v1403 = vunpack.c.l.b16 %v194
      %v1404 = vunpack.c.l.b16 %v195
      %v1405 = vunpack.c.l.b16 %v196
      %v1406 = vunpack.c.l.b16 %v197
      %v1407 = vunpack.c.l.b16 %v198
      %v1408 = vunpack.c.l.b16 %v199
      %v1409 = vunpack.c.l.b16 %v200
      %v1410 = vunpack.c.l.b16 %v201
      %v1411 = vunpack.c.l.b16 %v202
      %v1412 = vunpack.c.l.b16 %v203
      %v1413 = vunpack.c.l.b16 %v204
      %v1414 = vunpack.c.l.b16 %v205
      %v1415 = vunpack.c.l.b16 %v206
      %v1416 = vunpack.c.l.b16 %v207
      %v1417 = vpack.c.b16 %v1382, %v1381
      %v1418 = vpack.c.b16 %v1384, %v1383
      %v1419 = vpack.c.b16 %v1386, %v1385
      %v1420 = vpack.c.b16 %v1388, %v1387
      %v1421 = vpack.c.b16 %v1390, %v1389
      %v1422 = vpack.c.b16 %v1392, %v1391
      %v1423 = vpack.c.b16 %v1394, %v1393
      %v1424 = vpack.c.b16 %v1396, %v1395
      %v1425 = vpack.c.b16 %v1398, %v1397
      %v1426 = vpack.c.b16 %v1400, %v1399
      %v1427 = vpack.c.b16 %v1402, %v1401
      %v1428 = vpack.c.b16 %v1404, %v1403
      %v1429 = vpack.c.b16 %v1406, %v1405
      %v1430 = vpack.c.b16 %v1408, %v1407
      %v1431 = vpack.c.b16 %v1410, %v1409
      %v1432 = vpack.c.b16 %v1412, %v1411
      %v1433 = vpack.c.b16 %v1414, %v1413
      %v1434 = vpack.c.b16 %v1416, %v1415
      %v1454 = vsel %vm725, %v991, 0
      %v1457 = vsel %vm725, %v1016, 0
      %v1460 = vsel %vm725, %v1041, 0
      %v1463 = vsel %vm725, %v1066, 0
      %v1466 = vsel %vm725, %v1091, 0
      %v1469 = vsel %vm725, %v1116, 0
      %v1472 = vsel %vm725, %v1141, 0
      %v1475 = vsel %vm725, %v1166, 0
      %v1478 = vsel %vm725, %v1191, 0
      %v1481 = vsel %vm725, %v1216, 0
      %v1484 = vsel %vm725, %v1241, 0
      %v1487 = vsel %vm725, %v1266, 0
      %v1490 = vsel %vm725, %v1291, 0
      %v1493 = vsel %vm725, %v1316, 0
      %1495 = vmatprep.subr.bf16.mxu0 0
      %1496 = vmatpush1.bf16.msra.mxu0 %v1417
      %1497 = vmatprep.subr.bf16.mxu0 0
      %1498 = vmatpush1.bf16.msra.mxu0 %v1418
      %1499 = vmatprep.subr.bf16.mxu0 0
      %1500 = vmatpush1.bf16.msra.mxu0 %v1419
      %1501 = vmatprep.subr.bf16.mxu0 0
      %1502 = vmatpush1.bf16.msra.mxu0 %v1420
      %1503 = vmatprep.subr.bf16.mxu0 0
      %1504 = vmatpush1.bf16.msra.mxu0 %v1421
      %1505 = vmatprep.subr.bf16.mxu0 0
      %1506 = vmatpush1.bf16.msra.mxu0 %v1422
      %1507 = vmatprep.subr.bf16.mxu0 0
      %1508 = vmatpush1.bf16.msra.mxu0 %v1423
      %1509 = vmatprep.subr.bf16.mxu0 0
      %1510 = vmatpush1.bf16.msra.mxu0 %v1424
      %1511 = vmatprep.subr.bf16.mxu0 0
      %1512 = vmatpush1.bf16.msra.mxu0 %v1425
      %1513 = vmatprep.subr.bf16.mxu0 0
      %1514 = vmatpush1.bf16.msra.mxu0 %v1426
      %1515 = vmatprep.subr.bf16.mxu0 0
      %1516 = vmatpush1.bf16.msra.mxu0 %v1427
      %1517 = vmatprep.subr.bf16.mxu0 0
      %1518 = vmatpush1.bf16.msra.mxu0 %v1428
      %1519 = vmatprep.subr.bf16.mxu0 0
      %1520 = vmatpush1.bf16.msra.mxu0 %v1429
      %1521 = vmatprep.subr.bf16.mxu0 0
      %1522 = vmatpush1.bf16.msra.mxu0 %v1430
      %1523 = vmatprep.subr.bf16.mxu0 0
      %1524 = vmatpush1.bf16.msra.mxu0 %v1431
      %1525 = vmatprep.subr.bf16.mxu0 0
      %1526 = vmatpush1.bf16.msra.mxu0 %v1432
      %1527 = vmatprep.mubr.bf16.mxu0 %v974
      %1528 = vmatmul.mubr.bf16.gmra.mrb[0].mxu0 %v959
      %v1529 = vpop.f32.mrb[0].mxu0
      %v1530 = vadd.f32 %v942, %v1529
      %v1531 = vpop.f32.mrb[0].mxu0
      %v1532 = vpop.f32.mrb[0].mxu0
      %v1533 = vadd.f32 %v942, %v1532
      %v1534 = vpop.f32.mrb[0].mxu0
      %1535 = vmatprep.mubr.bf16.mxu0 %v1007
      %1536 = vmatmul.mubr.bf16.gmra.mrb[0].mxu0 %v999
      %v1537 = vpop.f32.mrb[0].mxu0
      %v1538 = vadd.f32 %v942, %v1537
      %v1539 = vpop.f32.mrb[0].mxu0
      %v1540 = vpop.f32.mrb[0].mxu0
      %v1541 = vadd.f32 %v942, %v1540
      %v1542 = vpop.f32.mrb[0].mxu0
      %1543 = vmatprep.mubr.bf16.mxu0 %v1032
      %1544 = vmatmul.mubr.bf16.gmra.mrb[0].mxu0 %v1024
      %v1545 = vpop.f32.mrb[0].mxu0
      %v1546 = vadd.f32 %v942, %v1545
      %v1547 = vpop.f32.mrb[0].mxu0
      %v1548 = vpop.f32.mrb[0].mxu0
      %v1549 = vadd.f32 %v942, %v1548
      %v1550 = vpop.f32.mrb[0].mxu0
      %1551 = vmatprep.mubr.bf16.mxu0 %v1057
      %1552 = vmatmul.mubr.bf16.gmra.mrb[0].mxu0 %v1049
      %v1553 = vpop.f32.mrb[0].mxu0
      %v1554 = vadd.f32 %v942, %v1553
      %v1555 = vpop.f32.mrb[0].mxu0
      %v1556 = vpop.f32.mrb[0].mxu0
      %v1557 = vadd.f32 %v942, %v1556
      %v1558 = vpop.f32.mrb[0].mxu0
      %1559 = vmatprep.mubr.bf16.mxu0 %v1082
      %1560 = vmatmul.mubr.bf16.gmra.mrb[0].mxu0 %v1074
      %v1561 = vpop.f32.mrb[0].mxu0
      %v1562 = vadd.f32 %v942, %v1561
      %v1563 = vpop.f32.mrb[0].mxu0
      %v1564 = vpop.f32.mrb[0].mxu0
      %v1565 = vadd.f32 %v942, %v1564
      %v1566 = vpop.f32.mrb[0].mxu0
      %1567 = vmatprep.mubr.bf16.mxu0 %v1107
      %1568 = vmatmul.mubr.bf16.gmra.mrb[0].mxu0 %v1099
      %v1569 = vpop.f32.mrb[0].mxu0
      %v1570 = vadd.f32 %v942, %v1569
      %v1571 = vpop.f32.mrb[0].mxu0
      %v1572 = vpop.f32.mrb[0].mxu0
      %v1573 = vadd.f32 %v942, %v1572
      %v1574 = vpop.f32.mrb[0].mxu0
      %1575 = vmatprep.mubr.bf16.mxu0 %v1132
      %1576 = vmatmul.mubr.bf16.gmra.mrb[0].mxu0 %v1124
      %v1577 = vpop.f32.mrb[0].mxu0
      %v1578 = vadd.f32 %v942, %v1577
      %v1579 = vpop.f32.mrb[0].mxu0
      %v1580 = vpop.f32.mrb[0].mxu0
      %v1581 = vadd.f32 %v942, %v1580
      %v1582 = vpop.f32.mrb[0].mxu0
      %1583 = vmatprep.mubr.bf16.mxu0 %v1157
      %1584 = vmatmul.mubr.bf16.gmra.mrb[0].mxu0 %v1149
      %v1585 = vpop.f32.mrb[0].mxu0
      %v1586 = vadd.f32 %v942, %v1585
      %v1587 = vpop.f32.mrb[0].mxu0
      %v1588 = vpop.f32.mrb[0].mxu0
      %v1589 = vadd.f32 %v942, %v1588
      %v1590 = vpop.f32.mrb[0].mxu0
      %1591 = vmatprep.mubr.bf16.mxu0 %v1182
      %1592 = vmatmul.mubr.bf16.gmra.mrb[0].mxu0 %v1174
      %v1593 = vpop.f32.mrb[0].mxu0
      %v1594 = vadd.f32 %v942, %v1593
      %v1595 = vpop.f32.mrb[0].mxu0
      %v1596 = vpop.f32.mrb[0].mxu0
      %v1597 = vadd.f32 %v942, %v1596
      %v1598 = vpop.f32.mrb[0].mxu0
      %1599 = vmatprep.mubr.bf16.mxu0 %v1207
      %1600 = vmatmul.mubr.bf16.gmra.mrb[0].mxu0 %v1199
      %v1601 = vpop.f32.mrb[0].mxu0
      %v1602 = vadd.f32 %v942, %v1601
      %v1603 = vpop.f32.mrb[0].mxu0
      %v1604 = vpop.f32.mrb[0].mxu0
      %v1605 = vadd.f32 %v942, %v1604
      %v1606 = vpop.f32.mrb[0].mxu0
      %1607 = vmatprep.mubr.bf16.mxu0 %v1232
      %1608 = vmatmul.mubr.bf16.gmra.mrb[0].mxu0 %v1224
      %v1609 = vpop.f32.mrb[0].mxu0
      %v1610 = vadd.f32 %v942, %v1609
      %v1611 = vpop.f32.mrb[0].mxu0
      %v1612 = vpop.f32.mrb[0].mxu0
      %v1613 = vadd.f32 %v942, %v1612
      %v1614 = vpop.f32.mrb[0].mxu0
      %1615 = vmatprep.mubr.bf16.mxu0 %v1257
      %1616 = vmatmul.mubr.bf16.gmra.mrb[0].mxu0 %v1249
      %v1617 = vpop.f32.mrb[0].mxu0
      %v1618 = vadd.f32 %v942, %v1617
      %v1619 = vpop.f32.mrb[0].mxu0
      %v1620 = vpop.f32.mrb[0].mxu0
      %v1621 = vadd.f32 %v942, %v1620
      %v1622 = vpop.f32.mrb[0].mxu0
      %1623 = vmatprep.mubr.bf16.mxu0 %v1282
      %1624 = vmatmul.mubr.bf16.gmra.mrb[0].mxu0 %v1274
      %v1625 = vpop.f32.mrb[0].mxu0
      %v1626 = vadd.f32 %v942, %v1625
      %v1627 = vpop.f32.mrb[0].mxu0
      %v1628 = vpop.f32.mrb[0].mxu0
      %v1629 = vadd.f32 %v942, %v1628
      %v1630 = vpop.f32.mrb[0].mxu0
      %1631 = vmatprep.mubr.bf16.mxu0 %v1307
      %1632 = vmatmul.mubr.bf16.gmra.mrb[0].mxu0 %v1299
      %v1633 = vpop.f32.mrb[0].mxu0
      %v1634 = vadd.f32 %v942, %v1633
      %v1635 = vpop.f32.mrb[0].mxu0
      %v1636 = vpop.f32.mrb[0].mxu0
      %v1637 = vadd.f32 %v942, %v1636
      %v1638 = vpop.f32.mrb[0].mxu0
      %1639 = vdwg.mxu0
      %1640 = vmatprep.subr.bf16.mxu0 0
      %1641 = vmatpush1.bf16.msra.mxu0 %v1433
      %1642 = vmatprep.subr.bf16.mxu0 0
      %1643 = vmatpush1.bf16.msra.mxu0 %v1434
      %1644 = vmatprep.subr.bf16.mxu0 0
      %1645 = vmatpush1.bf16.msra.mxu0 0
      %1646 = vmatprep.subr.bf16.mxu0 0
      %1647 = vmatpush1.bf16.msra.mxu0 0
      %1648 = vmatprep.subr.bf16.mxu0 0
      %1649 = vmatpush1.bf16.msra.mxu0 0
      %1650 = vmatprep.subr.bf16.mxu0 0
      %1651 = vmatpush1.bf16.msra.mxu0 0
      %1652 = vmatprep.subr.bf16.mxu0 0
      %1653 = vmatpush1.bf16.msra.mxu0 0
      %1654 = vmatprep.subr.bf16.mxu0 0
      %1655 = vmatpush1.bf16.msra.mxu0 0
      %1656 = vmatprep.subr.bf16.mxu0 0
      %1657 = vmatpush1.bf16.msra.mxu0 0
      %1658 = vmatprep.subr.bf16.mxu0 0
      %1659 = vmatpush1.bf16.msra.mxu0 0
      %1660 = vmatprep.subr.bf16.mxu0 0
      %1661 = vmatpush1.bf16.msra.mxu0 0
      %1662 = vmatprep.subr.bf16.mxu0 0
      %1663 = vmatpush1.bf16.msra.mxu0 0
      %1664 = vmatprep.subr.bf16.mxu0 0
      %1665 = vmatpush1.bf16.msra.mxu0 0
      %1666 = vmatprep.subr.bf16.mxu0 0
      %1667 = vmatpush1.bf16.msra.mxu0 0
      %1668 = vmatprep.subr.bf16.mxu0 0
      %1669 = vmatpush1.bf16.msra.mxu0 0
      %1670 = vmatprep.subr.bf16.mxu0 0
      %1671 = vmatpush1.bf16.msra.mxu0 0
      %1672 = vmatprep.mubr.bf16.mxu0 0
      %1673 = vmatmul.mubr.bf16.gmra.mrb[0].mxu0 %v1454
      %v1674 = vpop.f32.mrb[0].mxu0
      %v1675 = vadd.f32 %v1530, %v1674
      %v1676 = vpop.f32.mrb[0].mxu0
      %v1677 = vpop.f32.mrb[0].mxu0
      %v1678 = vadd.f32 %v1533, %v1677
      %v1679 = vpop.f32.mrb[0].mxu0
      %1680 = vmatprep.mubr.bf16.mxu0 0
      %1681 = vmatmul.mubr.bf16.gmra.mrb[0].mxu0 %v1457
      %v1682 = vpop.f32.mrb[0].mxu0
      %v1683 = vadd.f32 %v1538, %v1682
      %v1684 = vpop.f32.mrb[0].mxu0
      %v1685 = vpop.f32.mrb[0].mxu0
      %v1686 = vadd.f32 %v1541, %v1685
      %v1687 = vpop.f32.mrb[0].mxu0
      %1688 = vmatprep.mubr.bf16.mxu0 0
      %1689 = vmatmul.mubr.bf16.gmra.mrb[0].mxu0 %v1460
      %v1690 = vpop.f32.mrb[0].mxu0
      %v1691 = vadd.f32 %v1546, %v1690
      %v1692 = vpop.f32.mrb[0].mxu0
      %v1693 = vpop.f32.mrb[0].mxu0
      %v1694 = vadd.f32 %v1549, %v1693
      %v1695 = vpop.f32.mrb[0].mxu0
      %1696 = vmatprep.mubr.bf16.mxu0 0
      %1697 = vmatmul.mubr.bf16.gmra.mrb[0].mxu0 %v1463
      %v1698 = vpop.f32.mrb[0].mxu0
      %v1699 = vadd.f32 %v1554, %v1698
      %v1700 = vpop.f32.mrb[0].mxu0
      %v1701 = vpop.f32.mrb[0].mxu0
      %v1702 = vadd.f32 %v1557, %v1701
      %v1703 = vpop.f32.mrb[0].mxu0
      %1704 = vmatprep.mubr.bf16.mxu0 0
      %1705 = vmatmul.mubr.bf16.gmra.mrb[0].mxu0 %v1466
      %v1706 = vpop.f32.mrb[0].mxu0
      %v1707 = vadd.f32 %v1562, %v1706
      %v1708 = vpop.f32.mrb[0].mxu0
      %v1709 = vpop.f32.mrb[0].mxu0
      %v1710 = vadd.f32 %v1565, %v1709
      %v1711 = vpop.f32.mrb[0].mxu0
      %1712 = vmatprep.mubr.bf16.mxu0 0
      %1713 = vmatmul.mubr.bf16.gmra.mrb[0].mxu0 %v1469
      %v1714 = vpop.f32.mrb[0].mxu0
      %v1715 = vadd.f32 %v1570, %v1714
      %v1716 = vpop.f32.mrb[0].mxu0
      %v1717 = vpop.f32.mrb[0].mxu0
      %v1718 = vadd.f32 %v1573, %v1717
      %v1719 = vpop.f32.mrb[0].mxu0
      %1720 = vmatprep.mubr.bf16.mxu0 0
      %1721 = vmatmul.mubr.bf16.gmra.mrb[0].mxu0 %v1472
      %v1722 = vpop.f32.mrb[0].mxu0
      %v1723 = vadd.f32 %v1578, %v1722
      %v1724 = vpop.f32.mrb[0].mxu0
      %v1725 = vpop.f32.mrb[0].mxu0
      %v1726 = vadd.f32 %v1581, %v1725
      %v1727 = vpop.f32.mrb[0].mxu0
      %1728 = vmatprep.mubr.bf16.mxu0 0
      %1729 = vmatmul.mubr.bf16.gmra.mrb[0].mxu0 %v1475
      %v1730 = vpop.f32.mrb[0].mxu0
      %v1731 = vadd.f32 %v1586, %v1730
      %v1732 = vpop.f32.mrb[0].mxu0
      %v1733 = vpop.f32.mrb[0].mxu0
      %v1734 = vadd.f32 %v1589, %v1733
      %v1735 = vpop.f32.mrb[0].mxu0
      %1736 = vmatprep.mubr.bf16.mxu0 0
      %1737 = vmatmul.mubr.bf16.gmra.mrb[0].mxu0 %v1478
      %v1738 = vpop.f32.mrb[0].mxu0
      %v1739 = vadd.f32 %v1594, %v1738
      %v1740 = vpop.f32.mrb[0].mxu0
      %v1741 = vpop.f32.mrb[0].mxu0
      %v1742 = vadd.f32 %v1597, %v1741
      %v1743 = vpop.f32.mrb[0].mxu0
      %1744 = vmatprep.mubr.bf16.mxu0 0
      %1745 = vmatmul.mubr.bf16.gmra.mrb[0].mxu0 %v1481
      %v1746 = vpop.f32.mrb[0].mxu0
      %v1747 = vadd.f32 %v1602, %v1746
      %v1748 = vpop.f32.mrb[0].mxu0
      %v1749 = vpop.f32.mrb[0].mxu0
      %v1750 = vadd.f32 %v1605, %v1749
      %v1751 = vpop.f32.mrb[0].mxu0
      %1752 = vmatprep.mubr.bf16.mxu0 0
      %1753 = vmatmul.mubr.bf16.gmra.mrb[0].mxu0 %v1484
      %v1754 = vpop.f32.mrb[0].mxu0
      %v1755 = vadd.f32 %v1610, %v1754
      %v1756 = vpop.f32.mrb[0].mxu0
      %v1757 = vpop.f32.mrb[0].mxu0
      %v1758 = vadd.f32 %v1613, %v1757
      %v1759 = vpop.f32.mrb[0].mxu0
      %1760 = vmatprep.mubr.bf16.mxu0 0
      %1761 = vmatmul.mubr.bf16.gmra.mrb[0].mxu0 %v1487
      %v1762 = vpop.f32.mrb[0].mxu0
      %v1763 = vadd.f32 %v1618, %v1762
      %v1764 = vpop.f32.mrb[0].mxu0
      %v1765 = vpop.f32.mrb[0].mxu0
      %v1766 = vadd.f32 %v1621, %v1765
      %v1767 = vpop.f32.mrb[0].mxu0
      %1768 = vmatprep.mubr.bf16.mxu0 0
      %1769 = vmatmul.mubr.bf16.gmra.mrb[0].mxu0 %v1490
      %v1770 = vpop.f32.mrb[0].mxu0
      %v1771 = vadd.f32 %v1626, %v1770
      %v1772 = vpop.f32.mrb[0].mxu0
      %v1773 = vpop.f32.mrb[0].mxu0
      %v1774 = vadd.f32 %v1629, %v1773
      %v1775 = vpop.f32.mrb[0].mxu0
      %1776 = vmatprep.mubr.bf16.mxu0 0
      %1777 = vmatmul.mubr.bf16.gmra.mrb[0].mxu0 %v1493
      %v1778 = vpop.f32.mrb[0].mxu0
      %v1779 = vadd.f32 %v1634, %v1778
      %v1780 = vpop.f32.mrb[0].mxu0
      %v1781 = vpop.f32.mrb[0].mxu0
      %v1782 = vadd.f32 %v1637, %v1781
      %v1783 = vpop.f32.mrb[0].mxu0
      %1784 = vdwg.mxu0
      %v1785 = vmax.f32 %v1675, 0.0
      %v1786 = vmax.f32 %v1678, 0.0
      %v1787 = vmax.f32 %v1683, 0.0
      %v1788 = vmax.f32 %v1686, 0.0
      %v1789 = vmax.f32 %v1691, 0.0
      %v1790 = vmax.f32 %v1694, 0.0
      %v1791 = vmax.f32 %v1699, 0.0
      %v1792 = vmax.f32 %v1702, 0.0
      %v1793 = vmax.f32 %v1707, 0.0
      %v1794 = vmax.f32 %v1710, 0.0
      %v1795 = vmax.f32 %v1715, 0.0
      %v1796 = vmax.f32 %v1718, 0.0
      %v1797 = vmax.f32 %v1723, 0.0
      %v1798 = vmax.f32 %v1726, 0.0
      %v1799 = vmax.f32 %v1731, 0.0
      %v1800 = vmax.f32 %v1734, 0.0
      %v1801 = vmax.f32 %v1739, 0.0
      %v1802 = vmax.f32 %v1742, 0.0
      %v1803 = vmax.f32 %v1747, 0.0
      %v1804 = vmax.f32 %v1750, 0.0
      %v1805 = vmax.f32 %v1755, 0.0
      %v1806 = vmax.f32 %v1758, 0.0
      %v1807 = vmax.f32 %v1763, 0.0
      %v1808 = vmax.f32 %v1766, 0.0
      %v1809 = vmax.f32 %v1771, 0.0
      %v1810 = vmax.f32 %v1774, 0.0
      %v1811 = vmax.f32 %v1779, 0.0
      %v1812 = vmax.f32 %v1782, 0.0
      %vm1841 = vcmask 1046528
      %v1842 = vrot.slane %v1785, 1
      %v1843 = vrot.slane %v1786, 1
      %v1844 = vsel %vm1841, %v1842, %v1843
      %v1845 = vrot.slane %v1787, 1
      %v1846 = vsel %vm1841, %v1843, %v1845
      %v1847 = vrot.slane %v1788, 1
      %v1848 = vsel %vm1841, %v1845, %v1847
      %v1849 = vrot.slane %v1789, 1
      %v1850 = vsel %vm1841, %v1847, %v1849
      %v1851 = vrot.slane %v1790, 1
      %v1852 = vsel %vm1841, %v1849, %v1851
      %v1853 = vrot.slane %v1791, 1
      %v1854 = vsel %vm1841, %v1851, %v1853
      %v1855 = vrot.slane %v1792, 1
      %v1856 = vsel %vm1841, %v1853, %v1855
      %v1857 = vrot.slane %v1793, 1
      %v1858 = vsel %vm1841, %v1855, %v1857
      %v1859 = vrot.slane %v1794, 1
      %v1860 = vsel %vm1841, %v1857, %v1859
      %v1861 = vrot.slane %v1795, 1
      %v1862 = vsel %vm1841, %v1859, %v1861
      %v1863 = vrot.slane %v1796, 1
      %v1864 = vsel %vm1841, %v1861, %v1863
      %v1865 = vrot.slane %v1797, 1
      %v1866 = vsel %vm1841, %v1863, %v1865
      %v1867 = vrot.slane %v1798, 1
      %v1868 = vsel %vm1841, %v1865, %v1867
      %v1869 = vrot.slane %v1799, 1
      %v1870 = vsel %vm1841, %v1867, %v1869
      %v1871 = vrot.slane %v1800, 1
      %v1872 = vsel %vm1841, %v1869, %v1871
      %v1873 = vrot.slane %v1801, 1
      %v1874 = vsel %vm1841, %v1871, %v1873
      %v1875 = vrot.slane %v1802, 1
      %v1876 = vsel %vm1841, %v1873, %v1875
      %v1877 = vrot.slane %v1803, 1
      %v1878 = vsel %vm1841, %v1875, %v1877
      %v1879 = vrot.slane %v1804, 1
      %v1880 = vsel %vm1841, %v1877, %v1879
      %v1881 = vrot.slane %v1805, 1
      %v1882 = vsel %vm1841, %v1879, %v1881
      %v1883 = vrot.slane %v1806, 1
      %v1884 = vsel %vm1841, %v1881, %v1883
      %v1885 = vrot.slane %v1807, 1
      %v1886 = vsel %vm1841, %v1883, %v1885
      %v1887 = vrot.slane %v1808, 1
      %v1888 = vsel %vm1841, %v1885, %v1887
      %v1889 = vrot.slane %v1809, 1
      %v1890 = vsel %vm1841, %v1887, %v1889
      %v1891 = vrot.slane %v1810, 1
      %v1892 = vsel %vm1841, %v1889, %v1891
      %v1893 = vrot.slane %v1811, 1
      %v1894 = vsel %vm1841, %v1891, %v1893
      %v1895 = vrot.slane %v1812, 1
      %v1896 = vsel %vm1841, %v1893, %v1895
      %v1925 = vmax.f32 %v1785, %v1844
      %v1926 = vmax.f32 %v1786, %v1846
      %v1927 = vmax.f32 %v1787, %v1848
      %v1928 = vmax.f32 %v1788, %v1850
      %v1929 = vmax.f32 %v1789, %v1852
      %v1930 = vmax.f32 %v1790, %v1854
      %v1931 = vmax.f32 %v1791, %v1856
      %v1932 = vmax.f32 %v1792, %v1858
      %v1933 = vmax.f32 %v1793, %v1860
      %v1934 = vmax.f32 %v1794, %v1862
      %v1935 = vmax.f32 %v1795, %v1864
      %v1936 = vmax.f32 %v1796, %v1866
      %v1937 = vmax.f32 %v1797, %v1868
      %v1938 = vmax.f32 %v1798, %v1870
      %v1939 = vmax.f32 %v1799, %v1872
      %v1940 = vmax.f32 %v1800, %v1874
      %v1941 = vmax.f32 %v1801, %v1876
      %v1942 = vmax.f32 %v1802, %v1878
      %v1943 = vmax.f32 %v1803, %v1880
      %v1944 = vmax.f32 %v1804, %v1882
      %v1945 = vmax.f32 %v1805, %v1884
      %v1946 = vmax.f32 %v1806, %v1886
      %v1947 = vmax.f32 %v1807, %v1888
      %v1948 = vmax.f32 %v1808, %v1890
      %v1949 = vmax.f32 %v1809, %v1892
      %v1950 = vmax.f32 %v1810, %v1894
      %v1951 = vmax.f32 %v1811, %v1896
      %v1952 = vmax.f32 %v1812, %v1895
      %v1953 = vmax.f32 %v1925, %v1927
      %v1954 = vmax.f32 %v1926, %v1928
      %v1955 = vmax.f32 %v1927, %v1929
      %v1956 = vmax.f32 %v1928, %v1930
      %v1957 = vmax.f32 %v1929, %v1931
      %v1958 = vmax.f32 %v1930, %v1932
      %v1959 = vmax.f32 %v1931, %v1933
      %v1960 = vmax.f32 %v1932, %v1934
      %v1961 = vmax.f32 %v1933, %v1935
      %v1962 = vmax.f32 %v1934, %v1936
      %v1963 = vmax.f32 %v1935, %v1937
      %v1964 = vmax.f32 %v1936, %v1938
      %v1965 = vmax.f32 %v1937, %v1939
      %v1966 = vmax.f32 %v1938, %v1940
      %v1967 = vmax.f32 %v1939, %v1941
      %v1968 = vmax.f32 %v1940, %v1942
      %v1969 = vmax.f32 %v1941, %v1943
      %v1970 = vmax.f32 %v1942, %v1944
      %v1971 = vmax.f32 %v1943, %v1945
      %v1972 = vmax.f32 %v1944, %v1946
      %v1973 = vmax.f32 %v1945, %v1947
      %v1974 = vmax.f32 %v1946, %v1948
      %v1975 = vmax.f32 %v1947, %v1949
      %v1976 = vmax.f32 %v1948, %v1950
      %v1977 = vmax.f32 %v1949, %v1951
      %v1978 = vmax.f32 %v1950, %v1952
      %1979 = vst.msk [vmem:[#allocation2] sm:$0xff] %vm771, %v1953
      %1980 = vst.msk [vmem:[#allocation2 + $0x8] sm:$0xff] %vm771, %v1954
      %1981 = vst.msk [vmem:[#allocation2 + $0x10] sm:$0xff] %vm771, %v1955
      %1982 = vst.msk [vmem:[#allocation2 + $0x18] sm:$0xff] %vm771, %v1956
      %1983 = vst.msk [vmem:[#allocation2 + $0x20] sm:$0xff] %vm771, %v1957
      %1984 = vst.msk [vmem:[#allocation2 + $0x28] sm:$0xff] %vm771, %v1958
      %1985 = vst.msk [vmem:[#allocation2 + $0x30] sm:$0xff] %vm771, %v1959
      %1986 = vst.msk [vmem:[#allocation2 + $0x38] sm:$0xff] %vm771, %v1960
      %1987 = vst.msk [vmem:[#allocation2 + $0x40] sm:$0xff] %vm771, %v1961
      %1988 = vst.msk [vmem:[#allocation2 + $0x48] sm:$0xff] %vm771, %v1962
      %1989 = vst.msk [vmem:[#allocation2 + $0x50] sm:$0xff] %vm771, %v1963
      %1990 = vst.msk [vmem:[#allocation2 + $0x58] sm:$0xff] %vm771, %v1964
      %1991 = vst.msk [vmem:[#allocation2 + $0x60] sm:$0xff] %vm771, %v1965
      %1992 = vst.msk [vmem:[#allocation2 + $0x68] sm:$0xff] %vm771, %v1966
      %1993 = vst.msk [vmem:[#allocation2 + $0x70] sm:$0xff] %vm771, %v1967
      %1994 = vst.msk [vmem:[#allocation2 + $0x78] sm:$0xff] %vm771, %v1968
      %1995 = vst.msk [vmem:[#allocation2 + $0x80] sm:$0xff] %vm771, %v1969
      %1996 = vst.msk [vmem:[#allocation2 + $0x88] sm:$0xff] %vm771, %v1970
      %1997 = vst.msk [vmem:[#allocation2 + $0x90] sm:$0xff] %vm771, %v1971
      %1998 = vst.msk [vmem:[#allocation2 + $0x98] sm:$0xff] %vm771, %v1972
      %1999 = vst.msk [vmem:[#allocation2 + $0xa0] sm:$0xff] %vm771, %v1973
      %2000 = vst.msk [vmem:[#allocation2 + $0xa8] sm:$0xff] %vm771, %v1974
      %2001 = vst.msk [vmem:[#allocation2 + $0xb0] sm:$0xff] %vm771, %v1975
      %2002 = vst.msk [vmem:[#allocation2 + $0xb8] sm:$0xff] %vm771, %v1976
      %2003 = vst.msk [vmem:[#allocation2 + $0xc0] sm:$0xff] %vm771, %v1977
      %vm2004 = vcmask 522240
      %2005 = vst.msk [vmem:[#allocation2 + $0xc8] sm:$0x7f] %vm2004, %v1978
      %s2006 = scalar_lea.vmem [#allocation2], 1
      %v2007 = vld [vmem:[%s2006] ss:$2 sm:$0xff]
      %s2008 = scalar_lea.vmem [#allocation2], 33
      %v2009 = vld [vmem:[%s2008] ss:$2 sm:$0xff]
      %s2010 = scalar_lea.vmem [#allocation2], 65
      %v2011 = vld [vmem:[%s2010] ss:$2 sm:$0xff]
      %s2012 = scalar_lea.vmem [#allocation2], 97
      %v2013 = vld [vmem:[%s2012] ss:$2 sm:$0xff]
      %s2014 = scalar_lea.vmem [#allocation2], 129
      %v2015 = vld [vmem:[%s2014] ss:$2 sm:$0xff]
      %s2016 = scalar_lea.vmem [#allocation2], 161
      %v2017 = vld [vmem:[%s2016] ss:$2 sm:$0xff]
      %s2018 = scalar_lea.vmem [#allocation2], 193
      %v2019 = vld [vmem:[%s2018] ss:$2 sm:$0x7f]
      %v2020 = vpack.c.bf16 %v2007, %v2007
      %vm2021 = vcmask 519168
      %vm2022 = vmand %vm2021, %vm334
      %v2023 = vld [vmem:[%s170] sm:$0xf]
      %v2024 = vsel %vm2022, %v2020, %v2023
      %2025 = vst [vmem:[%s170] sm:$0xf] %v2024
      %v2026 = vpack.c.bf16 %v2009, %v2009
      %v2028 = vunpack.c.l.b16 %v2026
      %v2029 = vpack.c.b16 %v2028, %v2028
      %v2031 = vshll.u32 %v2029, 16
      %v2033 = vrot.slane %v2031, 5
      %v2034 = vshrl.u32 %v2029, 16
      %v2036 = vrot.slane %v2034, 4
      %v2037 = vor.u32 %v2036, %v2033
      %v2038 = vrot.slane %v2037, 4
      %vm2041 = vcmask 519171
      %vm2042 = vsmask.f32 7950
      %vm2043 = vmand %vm2041, %vm2042
      %v2044 = vld [vmem:[%s170] sm:$0x8]
      %v2045 = vsel %vm2043, %v2033, %v2044
      %2046 = vst [vmem:[%s170] sm:$0x8] %v2045
      %vm2047 = vcmask 518144
      %2048 = vst.msk [vmem:[%s170 + $0x4] sm:$0x7] %vm2047, %v2038
      %v2049 = vpack.c.bf16 %v2011, %v2011
      %v2051 = vunpack.c.l.b16 %v2049
      %v2052 = vpack.c.b16 %v2051, %v2051
      %v2053 = vrot.slane %v2052, 5
      %v2054 = vrot.slane %v2053, 4
      %vm2057 = vcmask 519171
      %2058 = vst.msk [vmem:[%s170 + $0x4] sm:$0x8] %vm2057, %v2053
      %vm2059 = vcmask 518144
      %vm2060 = vsmask.f32 2304
      %vm2061 = vmand %vm2059, %vm2060
      %v2062 = vld [vmem:[%s170 + $0x8] sm:$0x7]
      %v2063 = vsel %vm2061, %v2054, %v2062
      %2064 = vst [vmem:[%s170 + $0x8] sm:$0x7] %v2063
      %v2065 = vpack.c.bf16 %v2013, %v2013
      %v2067 = vunpack.c.l.b16 %v2065
      %v2068 = vpack.c.b16 %v2067, %v2067
      %v2070 = vshrl.u32 %v2068, 16
      %v2072 = vrot.slane %v2070, 5
      %v2073 = vshll.u32 %v2068, 16
      %v2075 = vrot.slane %v2073, 6
      %v2076 = vor.u32 %v2072, %v2075
      %v2077 = vrot.slane %v2076, 4
      %vm2080 = vcmask 519170
      %vm2081 = vsmask.f32 7946
      %vm2082 = vmand %vm2080, %vm2081
      %v2083 = vld [vmem:[%s170 + $0x8] sm:$0xc]
      %v2084 = vsel %vm2082, %v2076, %v2083
      %2085 = vst [vmem:[%s170 + $0x8] sm:$0xc] %v2084
      %vm2086 = vcmask 517120
      %2087 = vst.msk [vmem:[%s170 + $0xc] sm:$0x3] %vm2086, %v2077
      %v2088 = vpack.c.bf16 %v2015, %v2015
      %v2090 = vunpack.c.l.b16 %v2088
      %v2091 = vpack.c.b16 %v2090, %v2090
      %v2092 = vrot.slane %v2091, 6
      %v2093 = vrot.slane %v2092, 4
      %vm2096 = vcmask 519170
      %2097 = vst.msk [vmem:[%s170 + $0xc] sm:$0xc] %vm2096, %v2092
      %vm2098 = vcmask 517120
      %vm2099 = vsmask.f32 1280
      %vm2100 = vmand %vm2098, %vm2099
      %v2101 = vld [vmem:[%s170 + $0x10] sm:$0x3]
      %v2102 = vsel %vm2100, %v2093, %v2101
      %2103 = vst [vmem:[%s170 + $0x10] sm:$0x3] %v2102
      %v2104 = vpack.c.bf16 %v2017, %v2017
      %v2106 = vunpack.c.l.b16 %v2104
      %v2107 = vpack.c.b16 %v2106, %v2106
      %v2109 = vshrl.u32 %v2107, 16
      %v2111 = vrot.slane %v2109, 6
      %v2112 = vshll.u32 %v2107, 16
      %v2114 = vrot.slane %v2112, 7
      %v2115 = vor.u32 %v2111, %v2114
      %v2116 = vrot.slane %v2115, 4
      %vm2119 = vcmask 519169
      %vm2120 = vsmask.f32 7942
      %vm2121 = vmand %vm2119, %vm2120
      %v2122 = vld [vmem:[%s170 + $0x10] sm:$0xe]
      %v2123 = vsel %vm2121, %v2115, %v2122
      %2124 = vst [vmem:[%s170 + $0x10] sm:$0xe] %v2123
      %vm2125 = vcmask 516096
      %2126 = vst.msk [vmem:[%s170 + $0x14] sm:$0x1] %vm2125, %v2116
      %v2127 = vpack.c.bf16 %v2019, %v2019
      %v2129 = vunpack.c.l.b16 %v2127
      %v2130 = vpack.c.b16 %v2129, %v2129
      %v2131 = vrot.slane %v2130, 7
      %v2132 = vrot.slane %v2131, 4
      %vm2135 = vcmask 519169
      %2136 = vst.msk [vmem:[%s170 + $0x14] sm:$0xe] %vm2135, %v2131
      %vm2137 = vcmask 516096
      %vm2138 = vsmask.f32 256
      %vm2139 = vmand %vm2137, %vm2138
      %v2140 = vld [vmem:[%s170 + $0x18] sm:$0x1]
      %v2141 = vsel %vm2139, %v2132, %v2140
      %2142 = vst [vmem:[%s170 + $0x18] sm:$0x1] %v2141
      %p2143 = scmp.lt.s32.totalorder %s14, 1
      %s2144 = scalar_select %p2143, %s14, 1
      %s2145 = smul.addr %s2144, 7
      %s2146 = smul.addr %s2145, 4
      %s2147 = scalar_lea.vmem %s3, %s2146
      // Predicated region
      $region33: #{forward.4} parent=31 // pred_check
        %p2148 = pneg %p100
      $region34: #{forward.4} parent=31 // pred_check_branch
        %2150 = sbr.rel (%p2148) target = $region36
      $region35: #{forward.4} parent=31 // pred_region
        _
      $region36: #{forward.4} parent=31 // pred_fallthru
        _
    $region32: #{forward.4} parent=5 // pred_fallthru
      _
    %p2151 = scmp.le.s32.totalorder 2, %s9
    // Predicated region
    $region37: #{forward.4} parent=5 // pred_check
      %p2152 = pneg %p2151
    $region38: #{forward.4} parent=5 // pred_check_branch
      %2154 = sbr.rel (%p2152) target = $region40
    $region39: #{forward.4} parent=5 // pred_region
      %s2155 = ssub.s32 %s9, 2
      // Predicated region
      $region41: #{forward.4} parent=39 // pred_check
        %p2156 = pneg %p106
      $region42: #{forward.4} parent=39 // pred_check_branch
        %2158 = sbr.rel (%p2156) target = $region44
      $region43: #{forward.4} parent=39 // pred_region
        %p2159 = scmp.lt.s32.totalorder %s15, 1
        %s2160 = scalar_select %p2159, %s15, 1
        %s2161 = smul.addr %s2160, 7
        %s2162 = smul.addr %s2161, 4
        %s2163 = scalar_lea.vmem %s3, %s2162
      $region44: #{forward.4} parent=39 // pred_fallthru
        _
    $region40: #{forward.4} parent=5 // pred_fallthru
      _
  $region6: #{forward.4} parent=0 // loop_footer
    %s13 = sadd.s32 1, %s9
  $region7: #{forward.4} parent=0 // loop_footer_branch
    %8 = sbr.rel target = $region3
  $region8: #{forward.4} parent=0 // loop_exit
    _

// kernel: forward.5
$region0: #{forward.5}
  #allocation0 [shape = 'u32[]', space=smem, size = 0x4, offset = 0x4, fixed_abs, tag = 'smem constant byte address 0x4 - core index']
  #allocation1 [shape = 'u32[144,128]{1,0:T(1,128)}', space=vmem, size = 0x12000, scoped, tag = 'internal scratch']
  %s0 = inlined_call_operand.vmem [shape: bf16[2,3136], index: 0, kind: input, shape index: {}]
  %s1 = inlined_call_operand.vmem [shape: bf16[3136,100], index: 1, kind: input, shape index: {}]
  %s2 = inlined_call_operand.vmem [shape: f32[1,100], index: 2, kind: input, shape index: {}]
  %s3 = inlined_call_operand.vmem [shape: bf16[100,10], index: 3, kind: input, shape index: {}]
  %s4 = inlined_call_operand.vmem [shape: f32[1,10], index: 4, kind: input, shape index: {}]
  %s5 = inlined_call_operand.hbm [shape: f32[2,10], index: 5, kind: output, shape index: {}]
  %s6 = sld [smem:[#allocation0]]
  $region30: #{forward.5} parent=0
    _
  %s8 = ssub.s32 1, %s6
  %s9 = scalar_select 0, %s8, %s6
  $region1: #{forward.5} parent=0
    #allocation2 [shape = 'u8[1024]{0}', space=vmem, size = 0x400, scoped, tag = 'output window, operand 0, single buffered']
    #allocation3 [shape = 's32[1]{0}', space=sflag, size = 0x4, scoped, tag = 'scoped memory for forward.5']
    %10 = vsyncpa [#allocation3], 0
    // Predicated region
    $region2: #{forward.5} parent=1 // pred_check
      _
    $region3: #{forward.5} parent=1 // pred_check_branch
      %12 = sbr.rel (0) target = $region5
    $region4: #{forward.5} parent=1 // pred_region
      _
    $region5: #{forward.5} parent=1 // pred_fallthru
      _
    // Predicated region
    $region6: #{forward.5} parent=1 // pred_check
      _
    $region7: #{forward.5} parent=1 // pred_check_branch
      %14 = sbr.rel (0) target = $region9
    $region8: #{forward.5} parent=1 // pred_region
      _
    $region9: #{forward.5} parent=1 // pred_fallthru
      _
    // Predicated region
    $region10: #{forward.5} parent=1 // pred_check
      _
    $region11: #{forward.5} parent=1 // pred_check_branch
      %16 = sbr.rel (0) target = $region13
    $region12: #{forward.5} parent=1 // pred_region
      _
    $region13: #{forward.5} parent=1 // pred_fallthru
      _
    // Predicated region
    $region14: #{forward.5} parent=1 // pred_check
      _
    $region15: #{forward.5} parent=1 // pred_check_branch
      %18 = sbr.rel (0) target = $region17
    $region16: #{forward.5} parent=1 // pred_region
      _
    $region17: #{forward.5} parent=1 // pred_fallthru
      _
    // Predicated region
    $region18: #{forward.5} parent=1 // pred_check
      _
    $region19: #{forward.5} parent=1 // pred_check_branch
      %20 = sbr.rel (0) target = $region21
    $region20: #{forward.5} parent=1 // pred_region
      _
    $region21: #{forward.5} parent=1 // pred_fallthru
      _
    %v22 = vld [vmem:[%s0] sm:$0xff]
    %v23 = vld [vmem:[%s0 + $0x8] sm:$0xff]
    %v24 = vld [vmem:[%s0 + $0x10] sm:$0xff]
    %v25 = vld [vmem:[%s0 + $0x18] sm:$0x1]
    %v26 = vld [vmem:[%s1] sm:$0xf]
    %v27 = vld [vmem:[%s1 + $0x4] sm:$0xf]
    %v28 = vld [vmem:[%s1 + $0x8] sm:$0xf]
    %v29 = vld [vmem:[%s1 + $0xc] sm:$0xf]
    %v30 = vld [vmem:[%s1 + $0x10] sm:$0xf]
    %v31 = vld [vmem:[%s1 + $0x14] sm:$0xf]
    %v32 = vld [vmem:[%s1 + $0x18] sm:$0xf]
    %v33 = vld [vmem:[%s1 + $0x1c] sm:$0xf]
    %v34 = vld [vmem:[%s1 + $0x20] sm:$0xf]
    %v35 = vld [vmem:[%s1 + $0x24] sm:$0xf]
    %v36 = vld [vmem:[%s1 + $0x28] sm:$0xf]
    %v37 = vld [vmem:[%s1 + $0x2c] sm:$0xf]
    %v38 = vld [vmem:[%s1 + $0x30] sm:$0xf]
    %v39 = vld [vmem:[%s1 + $0x34] sm:$0xf]
    %v40 = vld [vmem:[%s1 + $0x38] sm:$0xf]
    %v41 = vld [vmem:[%s1 + $0x3c] sm:$0xf]
    %v42 = vld [vmem:[%s1 + $0x40] sm:$0xf]
    %v43 = vld [vmem:[%s1 + $0x44] sm:$0xf]
    %v44 = vld [vmem:[%s1 + $0x48] sm:$0xf]
    %v45 = vld [vmem:[%s1 + $0x4c] sm:$0xf]
    %v46 = vld [vmem:[%s1 + $0x50] sm:$0xf]
    %v47 = vld [vmem:[%s1 + $0x54] sm:$0xf]
    %v48 = vld [vmem:[%s1 + $0x58] sm:$0xf]
    %v49 = vld [vmem:[%s1 + $0x5c] sm:$0xf]
    %v50 = vld [vmem:[%s1 + $0x60] sm:$0xf]
    %v51 = vld [vmem:[%s1 + $0x64] sm:$0xf]
    %v52 = vld [vmem:[%s1 + $0x68] sm:$0xf]
    %v53 = vld [vmem:[%s1 + $0x6c] sm:$0xf]
    %v54 = vld [vmem:[%s1 + $0x70] sm:$0xf]
    %v55 = vld [vmem:[%s1 + $0x74] sm:$0xf]
    %v56 = vld [vmem:[%s1 + $0x78] sm:$0xf]
    %v57 = vld [vmem:[%s1 + $0x7c] sm:$0xf]
    %v58 = vld [vmem:[%s1 + $0x80] sm:$0xf]
    %v59 = vld [vmem:[%s1 + $0x84] sm:$0xf]
    %v60 = vld [vmem:[%s1 + $0x88] sm:$0xf]
    %v61 = vld [vmem:[%s1 + $0x8c] sm:$0xf]
    %v62 = vld [vmem:[%s1 + $0x90] sm:$0xf]
    %v63 = vld [vmem:[%s1 + $0x94] sm:$0xf]
    %v64 = vld [vmem:[%s1 + $0x98] sm:$0xf]
    %v65 = vld [vmem:[%s1 + $0x9c] sm:$0xf]
    %v66 = vld [vmem:[%s1 + $0xa0] sm:$0xf]
    %v67 = vld [vmem:[%s1 + $0xa4] sm:$0xf]
    %v68 = vld [vmem:[%s1 + $0xa8] sm:$0xf]
    %v69 = vld [vmem:[%s1 + $0xac] sm:$0xf]
    %v70 = vld [vmem:[%s1 + $0xb0] sm:$0xf]
    %v71 = vld [vmem:[%s1 + $0xb4] sm:$0xf]
    %v72 = vld [vmem:[%s1 + $0xb8] sm:$0xf]
    %v73 = vld [vmem:[%s1 + $0xbc] sm:$0xf]
    %v74 = vld [vmem:[%s1 + $0xc0] sm:$0xf]
    %v75 = vld [vmem:[%s1 + $0xc4] sm:$0xf]
    %v76 = vld [vmem:[%s1 + $0xc8] sm:$0xf]
    %v77 = vld [vmem:[%s1 + $0xcc] sm:$0xf]
    %v78 = vld [vmem:[%s1 + $0xd0] sm:$0xf]
    %v79 = vld [vmem:[%s1 + $0xd4] sm:$0xf]
    %v80 = vld [vmem:[%s1 + $0xd8] sm:$0xf]
    %v81 = vld [vmem:[%s1 + $0xdc] sm:$0xf]
    %v82 = vld [vmem:[%s1 + $0xe0] sm:$0xf]
    %v83 = vld [vmem:[%s1 + $0xe4] sm:$0xf]
    %v84 = vld [vmem:[%s1 + $0xe8] sm:$0xf]
    %v85 = vld [vmem:[%s1 + $0xec] sm:$0xf]
    %v86 = vld [vmem:[%s1 + $0xf0] sm:$0xf]
    %v87 = vld [vmem:[%s1 + $0xf4] sm:$0xf]
    %v88 = vld [vmem:[%s1 + $0xf8] sm:$0xf]
    %v89 = vld [vmem:[%s1 + $0xfc] sm:$0xf]
    %v90 = vld [vmem:[%s1 + $0x100] sm:$0xf]
    %v91 = vld [vmem:[%s1 + $0x104] sm:$0xf]
    %v92 = vld [vmem:[%s1 + $0x108] sm:$0xf]
    %v93 = vld [vmem:[%s1 + $0x10c] sm:$0xf]
    %v94 = vld [vmem:[%s1 + $0x110] sm:$0xf]
    %v95 = vld [vmem:[%s1 + $0x114] sm:$0xf]
    %v96 = vld [vmem:[%s1 + $0x118] sm:$0xf]
    %v97 = vld [vmem:[%s1 + $0x11c] sm:$0xf]
    %v98 = vld [vmem:[%s1 + $0x120] sm:$0xf]
    %v99 = vld [vmem:[%s1 + $0x124] sm:$0xf]
    %v100 = vld [vmem:[%s1 + $0x128] sm:$0xf]
    %v101 = vld [vmem:[%s1 + $0x12c] sm:$0xf]
    %v102 = vld [vmem:[%s1 + $0x130] sm:$0xf]
    %v103 = vld [vmem:[%s1 + $0x134] sm:$0xf]
    %v104 = vld [vmem:[%s1 + $0x138] sm:$0xf]
    %v105 = vld [vmem:[%s1 + $0x13c] sm:$0xf]
    %v106 = vld [vmem:[%s1 + $0x140] sm:$0xf]
    %v107 = vld [vmem:[%s1 + $0x144] sm:$0xf]
    %v108 = vld [vmem:[%s1 + $0x148] sm:$0xf]
    %v109 = vld [vmem:[%s1 + $0x14c] sm:$0xf]
    %v110 = vld [vmem:[%s1 + $0x150] sm:$0xf]
    %v111 = vld [vmem:[%s1 + $0x154] sm:$0xf]
    %v112 = vld [vmem:[%s1 + $0x158] sm:$0xf]
    %v113 = vld [vmem:[%s1 + $0x15c] sm:$0xf]
    %v114 = vld [vmem:[%s1 + $0x160] sm:$0xf]
    %v115 = vld [vmem:[%s1 + $0x164] sm:$0xf]
    %v116 = vld [vmem:[%s1 + $0x168] sm:$0xf]
    %v117 = vld [vmem:[%s1 + $0x16c] sm:$0xf]
    %v118 = vld [vmem:[%s1 + $0x170] sm:$0xf]
    %v119 = vld [vmem:[%s1 + $0x174] sm:$0xf]
    %v120 = vld [vmem:[%s1 + $0x178] sm:$0xf]
    %v121 = vld [vmem:[%s1 + $0x17c] sm:$0xf]
    %v122 = vld [vmem:[%s1 + $0x180] sm:$0xf]
    %v123 = vld [vmem:[%s1 + $0x184] sm:$0xf]
    %v124 = vld [vmem:[%s1 + $0x188] sm:$0xf]
    %v125 = vld [vmem:[%s1 + $0x18c] sm:$0xf]
    %v126 = vld [vmem:[%s1 + $0x190] sm:$0xf]
    %v127 = vld [vmem:[%s1 + $0x194] sm:$0xf]
    %v128 = vld [vmem:[%s1 + $0x198] sm:$0xf]
    %v129 = vld [vmem:[%s1 + $0x19c] sm:$0xf]
    %v130 = vld [vmem:[%s1 + $0x1a0] sm:$0xf]
    %v131 = vld [vmem:[%s1 + $0x1a4] sm:$0xf]
    %v132 = vld [vmem:[%s1 + $0x1a8] sm:$0xf]
    %v133 = vld [vmem:[%s1 + $0x1ac] sm:$0xf]
    %v134 = vld [vmem:[%s1 + $0x1b0] sm:$0xf]
    %v135 = vld [vmem:[%s1 + $0x1b4] sm:$0xf]
    %v136 = vld [vmem:[%s1 + $0x1b8] sm:$0xf]
    %v137 = vld [vmem:[%s1 + $0x1bc] sm:$0xf]
    %v138 = vld [vmem:[%s1 + $0x1c0] sm:$0xf]
    %v139 = vld [vmem:[%s1 + $0x1c4] sm:$0xf]
    %v140 = vld [vmem:[%s1 + $0x1c8] sm:$0xf]
    %v141 = vld [vmem:[%s1 + $0x1cc] sm:$0xf]
    %v142 = vld [vmem:[%s1 + $0x1d0] sm:$0xf]
    %v143 = vld [vmem:[%s1 + $0x1d4] sm:$0xf]
    %v144 = vld [vmem:[%s1 + $0x1d8] sm:$0xf]
    %v145 = vld [vmem:[%s1 + $0x1dc] sm:$0xf]
    %v146 = vld [vmem:[%s1 + $0x1e0] sm:$0xf]
    %v147 = vld [vmem:[%s1 + $0x1e4] sm:$0xf]
    %v148 = vld [vmem:[%s1 + $0x1e8] sm:$0xf]
    %v149 = vld [vmem:[%s1 + $0x1ec] sm:$0xf]
    %v150 = vld [vmem:[%s1 + $0x1f0] sm:$0xf]
    %v151 = vld [vmem:[%s1 + $0x1f4] sm:$0xf]
    %v152 = vld [vmem:[%s1 + $0x1f8] sm:$0xf]
    %v153 = vld [vmem:[%s1 + $0x1fc] sm:$0xf]
    %v154 = vld [vmem:[%s1 + $0x200] sm:$0xf]
    %v155 = vld [vmem:[%s1 + $0x204] sm:$0xf]
    %v156 = vld [vmem:[%s1 + $0x208] sm:$0xf]
    %v157 = vld [vmem:[%s1 + $0x20c] sm:$0xf]
    %v158 = vld [vmem:[%s1 + $0x210] sm:$0xf]
    %v159 = vld [vmem:[%s1 + $0x214] sm:$0xf]
    %v160 = vld [vmem:[%s1 + $0x218] sm:$0xf]
    %v161 = vld [vmem:[%s1 + $0x21c] sm:$0xf]
    %v162 = vld [vmem:[%s1 + $0x220] sm:$0xf]
    %v163 = vld [vmem:[%s1 + $0x224] sm:$0xf]
    %v164 = vld [vmem:[%s1 + $0x228] sm:$0xf]
    %v165 = vld [vmem:[%s1 + $0x22c] sm:$0xf]
    %v166 = vld [vmem:[%s1 + $0x230] sm:$0xf]
    %v167 = vld [vmem:[%s1 + $0x234] sm:$0xf]
    %v168 = vld [vmem:[%s1 + $0x238] sm:$0xf]
    %v169 = vld [vmem:[%s1 + $0x23c] sm:$0xf]
    %v170 = vld [vmem:[%s1 + $0x240] sm:$0xf]
    %v171 = vld [vmem:[%s1 + $0x244] sm:$0xf]
    %v172 = vld [vmem:[%s1 + $0x248] sm:$0xf]
    %v173 = vld [vmem:[%s1 + $0x24c] sm:$0xf]
    %v174 = vld [vmem:[%s1 + $0x250] sm:$0xf]
    %v175 = vld [vmem:[%s1 + $0x254] sm:$0xf]
    %v176 = vld [vmem:[%s1 + $0x258] sm:$0xf]
    %v177 = vld [vmem:[%s1 + $0x25c] sm:$0xf]
    %v178 = vld [vmem:[%s1 + $0x260] sm:$0xf]
    %v179 = vld [vmem:[%s1 + $0x264] sm:$0xf]
    %v180 = vld [vmem:[%s1 + $0x268] sm:$0xf]
    %v181 = vld [vmem:[%s1 + $0x26c] sm:$0xf]
    %v182 = vld [vmem:[%s1 + $0x270] sm:$0xf]
    %v183 = vld [vmem:[%s1 + $0x274] sm:$0xf]
    %v184 = vld [vmem:[%s1 + $0x278] sm:$0xf]
    %v185 = vld [vmem:[%s1 + $0x27c] sm:$0xf]
    %v186 = vld [vmem:[%s1 + $0x280] sm:$0xf]
    %v187 = vld [vmem:[%s1 + $0x284] sm:$0xf]
    %v188 = vld [vmem:[%s1 + $0x288] sm:$0xf]
    %v189 = vld [vmem:[%s1 + $0x28c] sm:$0xf]
    %v190 = vld [vmem:[%s1 + $0x290] sm:$0xf]
    %v191 = vld [vmem:[%s1 + $0x294] sm:$0xf]
    %v192 = vld [vmem:[%s1 + $0x298] sm:$0xf]
    %v193 = vld [vmem:[%s1 + $0x29c] sm:$0xf]
    %v194 = vld [vmem:[%s1 + $0x2a0] sm:$0xf]
    %v195 = vld [vmem:[%s1 + $0x2a4] sm:$0xf]
    %v196 = vld [vmem:[%s1 + $0x2a8] sm:$0xf]
    %v197 = vld [vmem:[%s1 + $0x2ac] sm:$0xf]
    %v198 = vld [vmem:[%s1 + $0x2b0] sm:$0xf]
    %v199 = vld [vmem:[%s1 + $0x2b4] sm:$0xf]
    %v200 = vld [vmem:[%s1 + $0x2b8] sm:$0xf]
    %v201 = vld [vmem:[%s1 + $0x2bc] sm:$0xf]
    %v202 = vld [vmem:[%s1 + $0x2c0] sm:$0xf]
    %v203 = vld [vmem:[%s1 + $0x2c4] sm:$0xf]
    %v204 = vld [vmem:[%s1 + $0x2c8] sm:$0xf]
    %v205 = vld [vmem:[%s1 + $0x2cc] sm:$0xf]
    %v206 = vld [vmem:[%s1 + $0x2d0] sm:$0xf]
    %v207 = vld [vmem:[%s1 + $0x2d4] sm:$0xf]
    %v208 = vld [vmem:[%s1 + $0x2d8] sm:$0xf]
    %v209 = vld [vmem:[%s1 + $0x2dc] sm:$0xf]
    %v210 = vld [vmem:[%s1 + $0x2e0] sm:$0xf]
    %v211 = vld [vmem:[%s1 + $0x2e4] sm:$0xf]
    %v212 = vld [vmem:[%s1 + $0x2e8] sm:$0xf]
    %v213 = vld [vmem:[%s1 + $0x2ec] sm:$0xf]
    %v214 = vld [vmem:[%s1 + $0x2f0] sm:$0xf]
    %v215 = vld [vmem:[%s1 + $0x2f4] sm:$0xf]
    %v216 = vld [vmem:[%s1 + $0x2f8] sm:$0xf]
    %v217 = vld [vmem:[%s1 + $0x2fc] sm:$0xf]
    %v218 = vld [vmem:[%s1 + $0x300] sm:$0xf]
    %v219 = vld [vmem:[%s1 + $0x304] sm:$0xf]
    %v220 = vld [vmem:[%s1 + $0x308] sm:$0xf]
    %v221 = vld [vmem:[%s1 + $0x30c] sm:$0xf]
    %v222 = vld [vmem:[%s1 + $0x310] sm:$0xf]
    %v223 = vld [vmem:[%s1 + $0x314] sm:$0xf]
    %v224 = vld [vmem:[%s1 + $0x318] sm:$0xf]
    %v225 = vld [vmem:[%s1 + $0x31c] sm:$0xf]
    %v226 = vld [vmem:[%s1 + $0x320] sm:$0xf]
    %v227 = vld [vmem:[%s1 + $0x324] sm:$0xf]
    %v228 = vld [vmem:[%s1 + $0x328] sm:$0xf]
    %v229 = vld [vmem:[%s1 + $0x32c] sm:$0xf]
    %v230 = vld [vmem:[%s1 + $0x330] sm:$0xf]
    %v231 = vld [vmem:[%s1 + $0x334] sm:$0xf]
    %v232 = vld [vmem:[%s1 + $0x338] sm:$0xf]
    %v233 = vld [vmem:[%s1 + $0x33c] sm:$0xf]
    %v234 = vld [vmem:[%s1 + $0x340] sm:$0xf]
    %v235 = vld [vmem:[%s1 + $0x344] sm:$0xf]
    %v236 = vld [vmem:[%s1 + $0x348] sm:$0xf]
    %v237 = vld [vmem:[%s1 + $0x34c] sm:$0xf]
    %v238 = vld [vmem:[%s1 + $0x350] sm:$0xf]
    %v239 = vld [vmem:[%s1 + $0x354] sm:$0xf]
    %v240 = vld [vmem:[%s1 + $0x358] sm:$0xf]
    %v241 = vld [vmem:[%s1 + $0x35c] sm:$0xf]
    %v242 = vld [vmem:[%s1 + $0x360] sm:$0xf]
    %v243 = vld [vmem:[%s1 + $0x364] sm:$0xf]
    %v244 = vld [vmem:[%s1 + $0x368] sm:$0xf]
    %v245 = vld [vmem:[%s1 + $0x36c] sm:$0xf]
    %v246 = vld [vmem:[%s1 + $0x370] sm:$0xf]
    %v247 = vld [vmem:[%s1 + $0x374] sm:$0xf]
    %v248 = vld [vmem:[%s1 + $0x378] sm:$0xf]
    %v249 = vld [vmem:[%s1 + $0x37c] sm:$0xf]
    %v250 = vld [vmem:[%s1 + $0x380] sm:$0xf]
    %v251 = vld [vmem:[%s1 + $0x384] sm:$0xf]
    %v252 = vld [vmem:[%s1 + $0x388] sm:$0xf]
    %v253 = vld [vmem:[%s1 + $0x38c] sm:$0xf]
    %v254 = vld [vmem:[%s1 + $0x390] sm:$0xf]
    %v255 = vld [vmem:[%s1 + $0x394] sm:$0xf]
    %v256 = vld [vmem:[%s1 + $0x398] sm:$0xf]
    %v257 = vld [vmem:[%s1 + $0x39c] sm:$0xf]
    %v258 = vld [vmem:[%s1 + $0x3a0] sm:$0xf]
    %v259 = vld [vmem:[%s1 + $0x3a4] sm:$0xf]
    %v260 = vld [vmem:[%s1 + $0x3a8] sm:$0xf]
    %v261 = vld [vmem:[%s1 + $0x3ac] sm:$0xf]
    %v262 = vld [vmem:[%s1 + $0x3b0] sm:$0xf]
    %v263 = vld [vmem:[%s1 + $0x3b4] sm:$0xf]
    %v264 = vld [vmem:[%s1 + $0x3b8] sm:$0xf]
    %v265 = vld [vmem:[%s1 + $0x3bc] sm:$0xf]
    %v266 = vld [vmem:[%s1 + $0x3c0] sm:$0xf]
    %v267 = vld [vmem:[%s1 + $0x3c4] sm:$0xf]
    %v268 = vld [vmem:[%s1 + $0x3c8] sm:$0xf]
    %v269 = vld [vmem:[%s1 + $0x3cc] sm:$0xf]
    %v270 = vld [vmem:[%s1 + $0x3d0] sm:$0xf]
    %v271 = vld [vmem:[%s1 + $0x3d4] sm:$0xf]
    %v272 = vld [vmem:[%s1 + $0x3d8] sm:$0xf]
    %v273 = vld [vmem:[%s1 + $0x3dc] sm:$0xf]
    %v274 = vld [vmem:[%s1 + $0x3e0] sm:$0xf]
    %v275 = vld [vmem:[%s1 + $0x3e4] sm:$0xf]
    %v276 = vld [vmem:[%s1 + $0x3e8] sm:$0xf]
    %v277 = vld [vmem:[%s1 + $0x3ec] sm:$0xf]
    %v278 = vld [vmem:[%s1 + $0x3f0] sm:$0xf]
    %v279 = vld [vmem:[%s1 + $0x3f4] sm:$0xf]
    %v280 = vld [vmem:[%s1 + $0x3f8] sm:$0xf]
    %v281 = vld [vmem:[%s1 + $0x3fc] sm:$0xf]
    %v282 = vld [vmem:[%s1 + $0x400] sm:$0xf]
    %v283 = vld [vmem:[%s1 + $0x404] sm:$0xf]
    %v284 = vld [vmem:[%s1 + $0x408] sm:$0xf]
    %v285 = vld [vmem:[%s1 + $0x40c] sm:$0xf]
    %v286 = vld [vmem:[%s1 + $0x410] sm:$0xf]
    %v287 = vld [vmem:[%s1 + $0x414] sm:$0xf]
    %v288 = vld [vmem:[%s1 + $0x418] sm:$0xf]
    %v289 = vld [vmem:[%s1 + $0x41c] sm:$0xf]
    %v290 = vld [vmem:[%s1 + $0x420] sm:$0xf]
    %v291 = vld [vmem:[%s1 + $0x424] sm:$0xf]
    %v292 = vld [vmem:[%s1 + $0x428] sm:$0xf]
    %v293 = vld [vmem:[%s1 + $0x42c] sm:$0xf]
    %v294 = vld [vmem:[%s1 + $0x430] sm:$0xf]
    %v295 = vld [vmem:[%s1 + $0x434] sm:$0xf]
    %v296 = vld [vmem:[%s1 + $0x438] sm:$0xf]
    %v297 = vld [vmem:[%s1 + $0x43c] sm:$0xf]
    %v298 = vld [vmem:[%s1 + $0x440] sm:$0xf]
    %v299 = vld [vmem:[%s1 + $0x444] sm:$0xf]
    %v300 = vld [vmem:[%s1 + $0x448] sm:$0xf]
    %v301 = vld [vmem:[%s1 + $0x44c] sm:$0xf]
    %v302 = vld [vmem:[%s1 + $0x450] sm:$0xf]
    %v303 = vld [vmem:[%s1 + $0x454] sm:$0xf]
    %v304 = vld [vmem:[%s1 + $0x458] sm:$0xf]
    %v305 = vld [vmem:[%s1 + $0x45c] sm:$0xf]
    %v306 = vld [vmem:[%s1 + $0x460] sm:$0xf]
    %v307 = vld [vmem:[%s1 + $0x464] sm:$0xf]
    %v308 = vld [vmem:[%s1 + $0x468] sm:$0xf]
    %v309 = vld [vmem:[%s1 + $0x46c] sm:$0xf]
    %v310 = vld [vmem:[%s1 + $0x470] sm:$0xf]
    %v311 = vld [vmem:[%s1 + $0x474] sm:$0xf]
    %v312 = vld [vmem:[%s1 + $0x478] sm:$0xf]
    %v313 = vld [vmem:[%s1 + $0x47c] sm:$0xf]
    %v314 = vld [vmem:[%s1 + $0x480] sm:$0xf]
    %v315 = vld [vmem:[%s1 + $0x484] sm:$0xf]
    %v316 = vld [vmem:[%s1 + $0x488] sm:$0xf]
    %v317 = vld [vmem:[%s1 + $0x48c] sm:$0xf]
    %v318 = vld [vmem:[%s1 + $0x490] sm:$0xf]
    %v319 = vld [vmem:[%s1 + $0x494] sm:$0xf]
    %v320 = vld [vmem:[%s1 + $0x498] sm:$0xf]
    %v321 = vld [vmem:[%s1 + $0x49c] sm:$0xf]
    %v322 = vld [vmem:[%s1 + $0x4a0] sm:$0xf]
    %v323 = vld [vmem:[%s1 + $0x4a4] sm:$0xf]
    %v324 = vld [vmem:[%s1 + $0x4a8] sm:$0xf]
    %v325 = vld [vmem:[%s1 + $0x4ac] sm:$0xf]
    %v326 = vld [vmem:[%s1 + $0x4b0] sm:$0xf]
    %v327 = vld [vmem:[%s1 + $0x4b4] sm:$0xf]
    %v328 = vld [vmem:[%s1 + $0x4b8] sm:$0xf]
    %v329 = vld [vmem:[%s1 + $0x4bc] sm:$0xf]
    %v330 = vld [vmem:[%s1 + $0x4c0] sm:$0xf]
    %v331 = vld [vmem:[%s1 + $0x4c4] sm:$0xf]
    %v332 = vld [vmem:[%s1 + $0x4c8] sm:$0xf]
    %v333 = vld [vmem:[%s1 + $0x4cc] sm:$0xf]
    %v334 = vld [vmem:[%s1 + $0x4d0] sm:$0xf]
    %v335 = vld [vmem:[%s1 + $0x4d4] sm:$0xf]
    %v336 = vld [vmem:[%s1 + $0x4d8] sm:$0xf]
    %v337 = vld [vmem:[%s1 + $0x4dc] sm:$0xf]
    %v338 = vld [vmem:[%s1 + $0x4e0] sm:$0xf]
    %v339 = vld [vmem:[%s1 + $0x4e4] sm:$0xf]
    %v340 = vld [vmem:[%s1 + $0x4e8] sm:$0xf]
    %v341 = vld [vmem:[%s1 + $0x4ec] sm:$0xf]
    %v342 = vld [vmem:[%s1 + $0x4f0] sm:$0xf]
    %v343 = vld [vmem:[%s1 + $0x4f4] sm:$0xf]
    %v344 = vld [vmem:[%s1 + $0x4f8] sm:$0xf]
    %v345 = vld [vmem:[%s1 + $0x4fc] sm:$0xf]
    %v346 = vld [vmem:[%s1 + $0x500] sm:$0xf]
    %v347 = vld [vmem:[%s1 + $0x504] sm:$0xf]
    %v348 = vld [vmem:[%s1 + $0x508] sm:$0xf]
    %v349 = vld [vmem:[%s1 + $0x50c] sm:$0xf]
    %v350 = vld [vmem:[%s1 + $0x510] sm:$0xf]
    %v351 = vld [vmem:[%s1 + $0x514] sm:$0xf]
    %v352 = vld [vmem:[%s1 + $0x518] sm:$0xf]
    %v353 = vld [vmem:[%s1 + $0x51c] sm:$0xf]
    %v354 = vld [vmem:[%s1 + $0x520] sm:$0xf]
    %v355 = vld [vmem:[%s1 + $0x524] sm:$0xf]
    %v356 = vld [vmem:[%s1 + $0x528] sm:$0xf]
    %v357 = vld [vmem:[%s1 + $0x52c] sm:$0xf]
    %v358 = vld [vmem:[%s1 + $0x530] sm:$0xf]
    %v359 = vld [vmem:[%s1 + $0x534] sm:$0xf]
    %v360 = vld [vmem:[%s1 + $0x538] sm:$0xf]
    %v361 = vld [vmem:[%s1 + $0x53c] sm:$0xf]
    %v362 = vld [vmem:[%s1 + $0x540] sm:$0xf]
    %v363 = vld [vmem:[%s1 + $0x544] sm:$0xf]
    %v364 = vld [vmem:[%s1 + $0x548] sm:$0xf]
    %v365 = vld [vmem:[%s1 + $0x54c] sm:$0xf]
    %v366 = vld [vmem:[%s1 + $0x550] sm:$0xf]
    %v367 = vld [vmem:[%s1 + $0x554] sm:$0xf]
    %v368 = vld [vmem:[%s1 + $0x558] sm:$0xf]
    %v369 = vld [vmem:[%s1 + $0x55c] sm:$0xf]
    %v370 = vld [vmem:[%s1 + $0x560] sm:$0xf]
    %v371 = vld [vmem:[%s1 + $0x564] sm:$0xf]
    %v372 = vld [vmem:[%s1 + $0x568] sm:$0xf]
    %v373 = vld [vmem:[%s1 + $0x56c] sm:$0xf]
    %v374 = vld [vmem:[%s1 + $0x570] sm:$0xf]
    %v375 = vld [vmem:[%s1 + $0x574] sm:$0xf]
    %v376 = vld [vmem:[%s1 + $0x578] sm:$0xf]
    %v377 = vld [vmem:[%s1 + $0x57c] sm:$0xf]
    %v378 = vld [vmem:[%s1 + $0x580] sm:$0xf]
    %v379 = vld [vmem:[%s1 + $0x584] sm:$0xf]
    %v380 = vld [vmem:[%s1 + $0x588] sm:$0xf]
    %v381 = vld [vmem:[%s1 + $0x58c] sm:$0xf]
    %v382 = vld [vmem:[%s1 + $0x590] sm:$0xf]
    %v383 = vld [vmem:[%s1 + $0x594] sm:$0xf]
    %v384 = vld [vmem:[%s1 + $0x598] sm:$0xf]
    %v385 = vld [vmem:[%s1 + $0x59c] sm:$0xf]
    %v386 = vld [vmem:[%s1 + $0x5a0] sm:$0xf]
    %v387 = vld [vmem:[%s1 + $0x5a4] sm:$0xf]
    %v388 = vld [vmem:[%s1 + $0x5a8] sm:$0xf]
    %v389 = vld [vmem:[%s1 + $0x5ac] sm:$0xf]
    %v390 = vld [vmem:[%s1 + $0x5b0] sm:$0xf]
    %v391 = vld [vmem:[%s1 + $0x5b4] sm:$0xf]
    %v392 = vld [vmem:[%s1 + $0x5b8] sm:$0xf]
    %v393 = vld [vmem:[%s1 + $0x5bc] sm:$0xf]
    %v394 = vld [vmem:[%s1 + $0x5c0] sm:$0xf]
    %v395 = vld [vmem:[%s1 + $0x5c4] sm:$0xf]
    %v396 = vld [vmem:[%s1 + $0x5c8] sm:$0xf]
    %v397 = vld [vmem:[%s1 + $0x5cc] sm:$0xf]
    %v398 = vld [vmem:[%s1 + $0x5d0] sm:$0xf]
    %v399 = vld [vmem:[%s1 + $0x5d4] sm:$0xf]
    %v400 = vld [vmem:[%s1 + $0x5d8] sm:$0xf]
    %v401 = vld [vmem:[%s1 + $0x5dc] sm:$0xf]
    %v402 = vld [vmem:[%s1 + $0x5e0] sm:$0xf]
    %v403 = vld [vmem:[%s1 + $0x5e4] sm:$0xf]
    %v404 = vld [vmem:[%s1 + $0x5e8] sm:$0xf]
    %v405 = vld [vmem:[%s1 + $0x5ec] sm:$0xf]
    %v406 = vld [vmem:[%s1 + $0x5f0] sm:$0xf]
    %v407 = vld [vmem:[%s1 + $0x5f4] sm:$0xf]
    %v408 = vld [vmem:[%s1 + $0x5f8] sm:$0xf]
    %v409 = vld [vmem:[%s1 + $0x5fc] sm:$0xf]
    %v410 = vld [vmem:[%s1 + $0x600] sm:$0xf]
    %v411 = vld [vmem:[%s1 + $0x604] sm:$0xf]
    %v412 = vld [vmem:[%s1 + $0x608] sm:$0xf]
    %v413 = vld [vmem:[%s1 + $0x60c] sm:$0xf]
    %v414 = vld [vmem:[%s1 + $0x610] sm:$0xf]
    %v415 = vld [vmem:[%s1 + $0x614] sm:$0xf]
    %v416 = vld [vmem:[%s1 + $0x618] sm:$0xf]
    %v417 = vld [vmem:[%s1 + $0x61c] sm:$0xf]
    %v418 = vld [vmem:[%s2] sm:$0x1]
    %v420 = vlaneseq
    %v421 = vshrl.u32 %v420, 7
    %v422 = vsub.s32 0, %v421
    %v423 = vrot.slane %v418, %v422
    %v429 = vcombine.high %v22, %v22
    %v431 = vunpack.c.l.s4 1966171168
    %v432 = vunpack.c.0.s8 %v431
    %v433 = vlaneseq
    %v434 = vshrl.u32 %v433, 7
    %v435 = vsub.s32 %v432, %v434
    %v436 = vrot.slane %v22, %v435
    %v438 = vunpack.c.l.s4 1966171168
    %v439 = vunpack.c.0.s8 %v438
    %v440 = vlaneseq
    %v441 = vshrl.u32 %v440, 7
    %v442 = vsub.s32 %v439, %v441
    %v443 = vrot.slane %v429, %v442
    %v444 = vcombine.high %v436, %v436
    %v445 = vcombine.high %v443, %v443
    %v447 = vunpack.c.l.s4 1966171168
    %v448 = vunpack.c.0.s8 %v447
    %v449 = vlaneseq
    %v450 = vshrl.u32 %v449, 7
    %v451 = vsub.s32 %v448, %v450
    %v452 = vrot.slane %v436, %v451
    %v454 = vunpack.c.l.s4 1966171168
    %v455 = vunpack.c.0.s8 %v454
    %v456 = vlaneseq
    %v457 = vshrl.u32 %v456, 7
    %v458 = vsub.s32 %v455, %v457
    %v459 = vrot.slane %v443, %v458
    %v461 = vunpack.c.l.s4 1966171168
    %v462 = vunpack.c.0.s8 %v461
    %v463 = vlaneseq
    %v464 = vshrl.u32 %v463, 7
    %v465 = vsub.s32 %v462, %v464
    %v466 = vrot.slane %v444, %v465
    %v468 = vunpack.c.l.s4 1966171168
    %v469 = vunpack.c.0.s8 %v468
    %v470 = vlaneseq
    %v471 = vshrl.u32 %v470, 7
    %v472 = vsub.s32 %v469, %v471
    %v473 = vrot.slane %v445, %v472
    %v474 = vcombine.high %v452, %v452
    %v475 = vcombine.high %v459, %v459
    %v476 = vcombine.high %v466, %v466
    %v477 = vcombine.high %v473, %v473
    %v478 = vcombine.high %v23, %v23
    %v480 = vunpack.c.l.s4 1966171168
    %v481 = vunpack.c.0.s8 %v480
    %v482 = vlaneseq
    %v483 = vshrl.u32 %v482, 7
    %v484 = vsub.s32 %v481, %v483
    %v485 = vrot.slane %v23, %v484
    %v487 = vunpack.c.l.s4 1966171168
    %v488 = vunpack.c.0.s8 %v487
    %v489 = vlaneseq
    %v490 = vshrl.u32 %v489, 7
    %v491 = vsub.s32 %v488, %v490
    %v492 = vrot.slane %v478, %v491
    %v493 = vcombine.high %v485, %v485
    %v494 = vcombine.high %v492, %v492
    %v496 = vunpack.c.l.s4 1966171168
    %v497 = vunpack.c.0.s8 %v496
    %v498 = vlaneseq
    %v499 = vshrl.u32 %v498, 7
    %v500 = vsub.s32 %v497, %v499
    %v501 = vrot.slane %v485, %v500
    %v503 = vunpack.c.l.s4 1966171168
    %v504 = vunpack.c.0.s8 %v503
    %v505 = vlaneseq
    %v506 = vshrl.u32 %v505, 7
    %v507 = vsub.s32 %v504, %v506
    %v508 = vrot.slane %v492, %v507
    %v510 = vunpack.c.l.s4 1966171168
    %v511 = vunpack.c.0.s8 %v510
    %v512 = vlaneseq
    %v513 = vshrl.u32 %v512, 7
    %v514 = vsub.s32 %v511, %v513
    %v515 = vrot.slane %v493, %v514
    %v517 = vunpack.c.l.s4 1966171168
    %v518 = vunpack.c.0.s8 %v517
    %v519 = vlaneseq
    %v520 = vshrl.u32 %v519, 7
    %v521 = vsub.s32 %v518, %v520
    %v522 = vrot.slane %v494, %v521
    %v523 = vcombine.high %v501, %v501
    %v524 = vcombine.high %v508, %v508
    %v525 = vcombine.high %v515, %v515
    %v526 = vcombine.high %v522, %v522
    %v527 = vcombine.high %v24, %v24
    %v529 = vunpack.c.l.s4 1966171168
    %v530 = vunpack.c.0.s8 %v529
    %v531 = vlaneseq
    %v532 = vshrl.u32 %v531, 7
    %v533 = vsub.s32 %v530, %v532
    %v534 = vrot.slane %v24, %v533
    %v536 = vunpack.c.l.s4 1966171168
    %v537 = vunpack.c.0.s8 %v536
    %v538 = vlaneseq
    %v539 = vshrl.u32 %v538, 7
    %v540 = vsub.s32 %v537, %v539
    %v541 = vrot.slane %v527, %v540
    %v542 = vcombine.high %v534, %v534
    %v543 = vcombine.high %v541, %v541
    %v545 = vunpack.c.l.s4 1966171168
    %v546 = vunpack.c.0.s8 %v545
    %v547 = vlaneseq
    %v548 = vshrl.u32 %v547, 7
    %v549 = vsub.s32 %v546, %v548
    %v550 = vrot.slane %v534, %v549
    %v552 = vunpack.c.l.s4 1966171168
    %v553 = vunpack.c.0.s8 %v552
    %v554 = vlaneseq
    %v555 = vshrl.u32 %v554, 7
    %v556 = vsub.s32 %v553, %v555
    %v557 = vrot.slane %v541, %v556
    %v559 = vunpack.c.l.s4 1966171168
    %v560 = vunpack.c.0.s8 %v559
    %v561 = vlaneseq
    %v562 = vshrl.u32 %v561, 7
    %v563 = vsub.s32 %v560, %v562
    %v564 = vrot.slane %v542, %v563
    %v566 = vunpack.c.l.s4 1966171168
    %v567 = vunpack.c.0.s8 %v566
    %v568 = vlaneseq
    %v569 = vshrl.u32 %v568, 7
    %v570 = vsub.s32 %v567, %v569
    %v571 = vrot.slane %v543, %v570
    %v572 = vcombine.high %v550, %v550
    %v573 = vcombine.high %v557, %v557
    %v574 = vcombine.high %v564, %v564
    %v575 = vcombine.high %v571, %v571
    %v577 = vunpack.c.l.s4 1966171168
    %v578 = vunpack.c.0.s8 %v577
    %v579 = vlaneseq
    %v580 = vshrl.u32 %v579, 7
    %v581 = vsub.s32 %v578, %v580
    %v582 = vrot.slane %v25, %v581
    %v584 = vunpack.c.l.s4 1966171168
    %v585 = vunpack.c.0.s8 %v584
    %v586 = vlaneseq
    %v587 = vshrl.u32 %v586, 7
    %v588 = vsub.s32 %v585, %v587
    %v589 = vrot.slane %v582, %v588
    %v1006 = vunpack.c.l.b16 %v26
    %v1007 = vunpack.c.l.b16 %v27
    %v1008 = vunpack.c.l.b16 %v28
    %v1009 = vunpack.c.l.b16 %v29
    %v1010 = vunpack.c.l.b16 %v30
    %v1011 = vunpack.c.l.b16 %v31
    %v1012 = vunpack.c.l.b16 %v32
    %v1013 = vunpack.c.l.b16 %v33
    %v1014 = vunpack.c.l.b16 %v34
    %v1015 = vunpack.c.l.b16 %v35
    %v1016 = vunpack.c.l.b16 %v36
    %v1017 = vunpack.c.l.b16 %v37
    %v1018 = vunpack.c.l.b16 %v38
    %v1019 = vunpack.c.l.b16 %v39
    %v1020 = vunpack.c.l.b16 %v40
    %v1021 = vunpack.c.l.b16 %v41
    %v1022 = vunpack.c.l.b16 %v42
    %v1023 = vunpack.c.l.b16 %v43
    %v1024 = vunpack.c.l.b16 %v44
    %v1025 = vunpack.c.l.b16 %v45
    %v1026 = vunpack.c.l.b16 %v46
    %v1027 = vunpack.c.l.b16 %v47
    %v1028 = vunpack.c.l.b16 %v48
    %v1029 = vunpack.c.l.b16 %v49
    %v1030 = vunpack.c.l.b16 %v50
    %v1031 = vunpack.c.l.b16 %v51
    %v1032 = vunpack.c.l.b16 %v52
    %v1033 = vunpack.c.l.b16 %v53
    %v1034 = vunpack.c.l.b16 %v54
    %v1035 = vunpack.c.l.b16 %v55
    %v1036 = vunpack.c.l.b16 %v56
    %v1037 = vunpack.c.l.b16 %v57
    %v1038 = vunpack.c.l.b16 %v58
    %v1039 = vunpack.c.l.b16 %v59
    %v1040 = vunpack.c.l.b16 %v60
    %v1041 = vunpack.c.l.b16 %v61
    %v1042 = vunpack.c.l.b16 %v62
    %v1043 = vunpack.c.l.b16 %v63
    %v1044 = vunpack.c.l.b16 %v64
    %v1045 = vunpack.c.l.b16 %v65
    %v1046 = vunpack.c.l.b16 %v66
    %v1047 = vunpack.c.l.b16 %v67
    %v1048 = vunpack.c.l.b16 %v68
    %v1049 = vunpack.c.l.b16 %v69
    %v1050 = vunpack.c.l.b16 %v70
    %v1051 = vunpack.c.l.b16 %v71
    %v1052 = vunpack.c.l.b16 %v72
    %v1053 = vunpack.c.l.b16 %v73
    %v1054 = vunpack.c.l.b16 %v74
    %v1055 = vunpack.c.l.b16 %v75
    %v1056 = vunpack.c.l.b16 %v76
    %v1057 = vunpack.c.l.b16 %v77
    %v1058 = vunpack.c.l.b16 %v78
    %v1059 = vunpack.c.l.b16 %v79
    %v1060 = vunpack.c.l.b16 %v80
    %v1061 = vunpack.c.l.b16 %v81
    %v1062 = vunpack.c.l.b16 %v82
    %v1063 = vunpack.c.l.b16 %v83
    %v1064 = vunpack.c.l.b16 %v84
    %v1065 = vunpack.c.l.b16 %v85
    %v1066 = vunpack.c.l.b16 %v86
    %v1067 = vunpack.c.l.b16 %v87
    %v1068 = vunpack.c.l.b16 %v88
    %v1069 = vunpack.c.l.b16 %v89
    %v1070 = vunpack.c.l.b16 %v90
    %v1071 = vunpack.c.l.b16 %v91
    %v1072 = vunpack.c.l.b16 %v92
    %v1073 = vunpack.c.l.b16 %v93
    %v1074 = vunpack.c.l.b16 %v94
    %v1075 = vunpack.c.l.b16 %v95
    %v1076 = vunpack.c.l.b16 %v96
    %v1077 = vunpack.c.l.b16 %v97
    %v1078 = vunpack.c.l.b16 %v98
    %v1079 = vunpack.c.l.b16 %v99
    %v1080 = vunpack.c.l.b16 %v100
    %v1081 = vunpack.c.l.b16 %v101
    %v1082 = vunpack.c.l.b16 %v102
    %v1083 = vunpack.c.l.b16 %v103
    %v1084 = vunpack.c.l.b16 %v104
    %v1085 = vunpack.c.l.b16 %v105
    %v1086 = vunpack.c.l.b16 %v106
    %v1087 = vunpack.c.l.b16 %v107
    %v1088 = vunpack.c.l.b16 %v108
    %v1089 = vunpack.c.l.b16 %v109
    %v1090 = vunpack.c.l.b16 %v110
    %v1091 = vunpack.c.l.b16 %v111
    %v1092 = vunpack.c.l.b16 %v112
    %v1093 = vunpack.c.l.b16 %v113
    %v1094 = vunpack.c.l.b16 %v114
    %v1095 = vunpack.c.l.b16 %v115
    %v1096 = vunpack.c.l.b16 %v116
    %v1097 = vunpack.c.l.b16 %v117
    %v1098 = vunpack.c.l.b16 %v118
    %v1099 = vunpack.c.l.b16 %v119
    %v1100 = vunpack.c.l.b16 %v120
    %v1101 = vunpack.c.l.b16 %v121
    %v1102 = vunpack.c.l.b16 %v122
    %v1103 = vunpack.c.l.b16 %v123
    %v1104 = vunpack.c.l.b16 %v124
    %v1105 = vunpack.c.l.b16 %v125
    %v1106 = vunpack.c.l.b16 %v126
    %v1107 = vunpack.c.l.b16 %v127
    %v1108 = vunpack.c.l.b16 %v128
    %v1109 = vunpack.c.l.b16 %v129
    %v1110 = vunpack.c.l.b16 %v130
    %v1111 = vunpack.c.l.b16 %v131
    %v1112 = vunpack.c.l.b16 %v132
    %v1113 = vunpack.c.l.b16 %v133
    %v1114 = vunpack.c.l.b16 %v134
    %v1115 = vunpack.c.l.b16 %v135
    %v1116 = vunpack.c.l.b16 %v136
    %v1117 = vunpack.c.l.b16 %v137
    %v1118 = vunpack.c.l.b16 %v138
    %v1119 = vunpack.c.l.b16 %v139
    %v1120 = vunpack.c.l.b16 %v140
    %v1121 = vunpack.c.l.b16 %v141
    %v1122 = vunpack.c.l.b16 %v142
    %v1123 = vunpack.c.l.b16 %v143
    %v1124 = vunpack.c.l.b16 %v144
    %v1125 = vunpack.c.l.b16 %v145
    %v1126 = vunpack.c.l.b16 %v146
    %v1127 = vunpack.c.l.b16 %v147
    %v1128 = vunpack.c.l.b16 %v148
    %v1129 = vunpack.c.l.b16 %v149
    %v1130 = vunpack.c.l.b16 %v150
    %v1131 = vunpack.c.l.b16 %v151
    %v1132 = vunpack.c.l.b16 %v152
    %v1133 = vunpack.c.l.b16 %v153
    %v1134 = vunpack.c.l.b16 %v154
    %v1135 = vunpack.c.l.b16 %v155
    %v1136 = vunpack.c.l.b16 %v156
    %v1137 = vunpack.c.l.b16 %v157
    %v1138 = vunpack.c.l.b16 %v158
    %v1139 = vunpack.c.l.b16 %v159
    %v1140 = vunpack.c.l.b16 %v160
    %v1141 = vunpack.c.l.b16 %v161
    %v1142 = vunpack.c.l.b16 %v162
    %v1143 = vunpack.c.l.b16 %v163
    %v1144 = vunpack.c.l.b16 %v164
    %v1145 = vunpack.c.l.b16 %v165
    %v1146 = vunpack.c.l.b16 %v166
    %v1147 = vunpack.c.l.b16 %v167
    %v1148 = vunpack.c.l.b16 %v168
    %v1149 = vunpack.c.l.b16 %v169
    %v1150 = vunpack.c.l.b16 %v170
    %v1151 = vunpack.c.l.b16 %v171
    %v1152 = vunpack.c.l.b16 %v172
    %v1153 = vunpack.c.l.b16 %v173
    %v1154 = vunpack.c.l.b16 %v174
    %v1155 = vunpack.c.l.b16 %v175
    %v1156 = vunpack.c.l.b16 %v176
    %v1157 = vunpack.c.l.b16 %v177
    %v1158 = vunpack.c.l.b16 %v178
    %v1159 = vunpack.c.l.b16 %v179
    %v1160 = vunpack.c.l.b16 %v180
    %v1161 = vunpack.c.l.b16 %v181
    %v1162 = vunpack.c.l.b16 %v182
    %v1163 = vunpack.c.l.b16 %v183
    %v1164 = vunpack.c.l.b16 %v184
    %v1165 = vunpack.c.l.b16 %v185
    %v1166 = vunpack.c.l.b16 %v186
    %v1167 = vunpack.c.l.b16 %v187
    %v1168 = vunpack.c.l.b16 %v188
    %v1169 = vunpack.c.l.b16 %v189
    %v1170 = vunpack.c.l.b16 %v190
    %v1171 = vunpack.c.l.b16 %v191
    %v1172 = vunpack.c.l.b16 %v192
    %v1173 = vunpack.c.l.b16 %v193
    %v1174 = vunpack.c.l.b16 %v194
    %v1175 = vunpack.c.l.b16 %v195
    %v1176 = vunpack.c.l.b16 %v196
    %v1177 = vunpack.c.l.b16 %v197
    %v1178 = vunpack.c.l.b16 %v198
    %v1179 = vunpack.c.l.b16 %v199
    %v1180 = vunpack.c.l.b16 %v200
    %v1181 = vunpack.c.l.b16 %v201
    %v1182 = vunpack.c.l.b16 %v202
    %v1183 = vunpack.c.l.b16 %v203
    %v1184 = vunpack.c.l.b16 %v204
    %v1185 = vunpack.c.l.b16 %v205
    %v1186 = vunpack.c.l.b16 %v206
    %v1187 = vunpack.c.l.b16 %v207
    %v1188 = vunpack.c.l.b16 %v208
    %v1189 = vunpack.c.l.b16 %v209
    %v1190 = vunpack.c.l.b16 %v210
    %v1191 = vunpack.c.l.b16 %v211
    %v1192 = vunpack.c.l.b16 %v212
    %v1193 = vunpack.c.l.b16 %v213
    %v1194 = vunpack.c.l.b16 %v214
    %v1195 = vunpack.c.l.b16 %v215
    %v1196 = vunpack.c.l.b16 %v216
    %v1197 = vunpack.c.l.b16 %v217
    %v1198 = vunpack.c.l.b16 %v218
    %v1199 = vunpack.c.l.b16 %v219
    %v1200 = vunpack.c.l.b16 %v220
    %v1201 = vunpack.c.l.b16 %v221
    %v1202 = vunpack.c.l.b16 %v222
    %v1203 = vunpack.c.l.b16 %v223
    %v1204 = vunpack.c.l.b16 %v224
    %v1205 = vunpack.c.l.b16 %v225
    %v1206 = vunpack.c.l.b16 %v226
    %v1207 = vunpack.c.l.b16 %v227
    %v1208 = vunpack.c.l.b16 %v228
    %v1209 = vunpack.c.l.b16 %v229
    %v1210 = vunpack.c.l.b16 %v230
    %v1211 = vunpack.c.l.b16 %v231
    %v1212 = vunpack.c.l.b16 %v232
    %v1213 = vunpack.c.l.b16 %v233
    %v1214 = vunpack.c.l.b16 %v234
    %v1215 = vunpack.c.l.b16 %v235
    %v1216 = vunpack.c.l.b16 %v236
    %v1217 = vunpack.c.l.b16 %v237
    %v1218 = vunpack.c.l.b16 %v238
    %v1219 = vunpack.c.l.b16 %v239
    %v1220 = vunpack.c.l.b16 %v240
    %v1221 = vunpack.c.l.b16 %v241
    %v1222 = vunpack.c.l.b16 %v242
    %v1223 = vunpack.c.l.b16 %v243
    %v1224 = vunpack.c.l.b16 %v244
    %v1225 = vunpack.c.l.b16 %v245
    %v1226 = vunpack.c.l.b16 %v246
    %v1227 = vunpack.c.l.b16 %v247
    %v1228 = vunpack.c.l.b16 %v248
    %v1229 = vunpack.c.l.b16 %v249
    %v1230 = vunpack.c.l.b16 %v250
    %v1231 = vunpack.c.l.b16 %v251
    %v1232 = vunpack.c.l.b16 %v252
    %v1233 = vunpack.c.l.b16 %v253
    %v1234 = vunpack.c.l.b16 %v254
    %v1235 = vunpack.c.l.b16 %v255
    %v1236 = vunpack.c.l.b16 %v256
    %v1237 = vunpack.c.l.b16 %v257
    %v1238 = vunpack.c.l.b16 %v258
    %v1239 = vunpack.c.l.b16 %v259
    %v1240 = vunpack.c.l.b16 %v260
    %v1241 = vunpack.c.l.b16 %v261
    %v1242 = vunpack.c.l.b16 %v262
    %v1243 = vunpack.c.l.b16 %v263
    %v1244 = vunpack.c.l.b16 %v264
    %v1245 = vunpack.c.l.b16 %v265
    %v1246 = vunpack.c.l.b16 %v266
    %v1247 = vunpack.c.l.b16 %v267
    %v1248 = vunpack.c.l.b16 %v268
    %v1249 = vunpack.c.l.b16 %v269
    %v1250 = vunpack.c.l.b16 %v270
    %v1251 = vunpack.c.l.b16 %v271
    %v1252 = vunpack.c.l.b16 %v272
    %v1253 = vunpack.c.l.b16 %v273
    %v1254 = vunpack.c.l.b16 %v274
    %v1255 = vunpack.c.l.b16 %v275
    %v1256 = vunpack.c.l.b16 %v276
    %v1257 = vunpack.c.l.b16 %v277
    %v1258 = vunpack.c.l.b16 %v278
    %v1259 = vunpack.c.l.b16 %v279
    %v1260 = vunpack.c.l.b16 %v280
    %v1261 = vunpack.c.l.b16 %v281
    %v1262 = vunpack.c.l.b16 %v282
    %v1263 = vunpack.c.l.b16 %v283
    %v1264 = vunpack.c.l.b16 %v284
    %v1265 = vunpack.c.l.b16 %v285
    %v1266 = vunpack.c.l.b16 %v286
    %v1267 = vunpack.c.l.b16 %v287
    %v1268 = vunpack.c.l.b16 %v288
    %v1269 = vunpack.c.l.b16 %v289
    %v1270 = vunpack.c.l.b16 %v290
    %v1271 = vunpack.c.l.b16 %v291
    %v1272 = vunpack.c.l.b16 %v292
    %v1273 = vunpack.c.l.b16 %v293
    %v1274 = vunpack.c.l.b16 %v294
    %v1275 = vunpack.c.l.b16 %v295
    %v1276 = vunpack.c.l.b16 %v296
    %v1277 = vunpack.c.l.b16 %v297
    %v1278 = vunpack.c.l.b16 %v298
    %v1279 = vunpack.c.l.b16 %v299
    %v1280 = vunpack.c.l.b16 %v300
    %v1281 = vunpack.c.l.b16 %v301
    %v1282 = vunpack.c.l.b16 %v302
    %v1283 = vunpack.c.l.b16 %v303
    %v1284 = vunpack.c.l.b16 %v304
    %v1285 = vunpack.c.l.b16 %v305
    %v1286 = vunpack.c.l.b16 %v306
    %v1287 = vunpack.c.l.b16 %v307
    %v1288 = vunpack.c.l.b16 %v308
    %v1289 = vunpack.c.l.b16 %v309
    %v1290 = vunpack.c.l.b16 %v310
    %v1291 = vunpack.c.l.b16 %v311
    %v1292 = vunpack.c.l.b16 %v312
    %v1293 = vunpack.c.l.b16 %v313
    %v1294 = vunpack.c.l.b16 %v314
    %v1295 = vunpack.c.l.b16 %v315
    %v1296 = vunpack.c.l.b16 %v316
    %v1297 = vunpack.c.l.b16 %v317
    %v1298 = vunpack.c.l.b16 %v318
    %v1299 = vunpack.c.l.b16 %v319
    %v1300 = vunpack.c.l.b16 %v320
    %v1301 = vunpack.c.l.b16 %v321
    %v1302 = vunpack.c.l.b16 %v322
    %v1303 = vunpack.c.l.b16 %v323
    %v1304 = vunpack.c.l.b16 %v324
    %v1305 = vunpack.c.l.b16 %v325
    %v1306 = vunpack.c.l.b16 %v326
    %v1307 = vunpack.c.l.b16 %v327
    %v1308 = vunpack.c.l.b16 %v328
    %v1309 = vunpack.c.l.b16 %v329
    %v1310 = vunpack.c.l.b16 %v330
    %v1311 = vunpack.c.l.b16 %v331
    %v1312 = vunpack.c.l.b16 %v332
    %v1313 = vunpack.c.l.b16 %v333
    %v1314 = vunpack.c.l.b16 %v334
    %v1315 = vunpack.c.l.b16 %v335
    %v1316 = vunpack.c.l.b16 %v336
    %v1317 = vunpack.c.l.b16 %v337
    %v1318 = vunpack.c.l.b16 %v338
    %v1319 = vunpack.c.l.b16 %v339
    %v1320 = vunpack.c.l.b16 %v340
    %v1321 = vunpack.c.l.b16 %v341
    %v1322 = vunpack.c.l.b16 %v342
    %v1323 = vunpack.c.l.b16 %v343
    %v1324 = vunpack.c.l.b16 %v344
    %v1325 = vunpack.c.l.b16 %v345
    %v1326 = vunpack.c.l.b16 %v346
    %v1327 = vunpack.c.l.b16 %v347
    %v1328 = vunpack.c.l.b16 %v348
    %v1329 = vunpack.c.l.b16 %v349
    %v1330 = vunpack.c.l.b16 %v350
    %v1331 = vunpack.c.l.b16 %v351
    %v1332 = vunpack.c.l.b16 %v352
    %v1333 = vunpack.c.l.b16 %v353
    %v1334 = vunpack.c.l.b16 %v354
    %v1335 = vunpack.c.l.b16 %v355
    %v1336 = vunpack.c.l.b16 %v356
    %v1337 = vunpack.c.l.b16 %v357
    %v1338 = vunpack.c.l.b16 %v358
    %v1339 = vunpack.c.l.b16 %v359
    %v1340 = vunpack.c.l.b16 %v360
    %v1341 = vunpack.c.l.b16 %v361
    %v1342 = vunpack.c.l.b16 %v362
    %v1343 = vunpack.c.l.b16 %v363
    %v1344 = vunpack.c.l.b16 %v364
    %v1345 = vunpack.c.l.b16 %v365
    %v1346 = vunpack.c.l.b16 %v366
    %v1347 = vunpack.c.l.b16 %v367
    %v1348 = vunpack.c.l.b16 %v368
    %v1349 = vunpack.c.l.b16 %v369
    %v1350 = vunpack.c.l.b16 %v370
    %v1351 = vunpack.c.l.b16 %v371
    %v1352 = vunpack.c.l.b16 %v372
    %v1353 = vunpack.c.l.b16 %v373
    %v1354 = vunpack.c.l.b16 %v374
    %v1355 = vunpack.c.l.b16 %v375
    %v1356 = vunpack.c.l.b16 %v376
    %v1357 = vunpack.c.l.b16 %v377
    %v1358 = vunpack.c.l.b16 %v378
    %v1359 = vunpack.c.l.b16 %v379
    %v1360 = vunpack.c.l.b16 %v380
    %v1361 = vunpack.c.l.b16 %v381
    %v1362 = vunpack.c.l.b16 %v382
    %v1363 = vunpack.c.l.b16 %v383
    %v1364 = vunpack.c.l.b16 %v384
    %v1365 = vunpack.c.l.b16 %v385
    %v1366 = vunpack.c.l.b16 %v386
    %v1367 = vunpack.c.l.b16 %v387
    %v1368 = vunpack.c.l.b16 %v388
    %v1369 = vunpack.c.l.b16 %v389
    %v1370 = vunpack.c.l.b16 %v390
    %v1371 = vunpack.c.l.b16 %v391
    %v1372 = vunpack.c.l.b16 %v392
    %v1373 = vunpack.c.l.b16 %v393
    %v1374 = vunpack.c.l.b16 %v394
    %v1375 = vunpack.c.l.b16 %v395
    %v1376 = vunpack.c.l.b16 %v396
    %v1377 = vunpack.c.l.b16 %v397
    %v1378 = vunpack.c.l.b16 %v398
    %v1379 = vunpack.c.l.b16 %v399
    %v1380 = vunpack.c.l.b16 %v400
    %v1381 = vunpack.c.l.b16 %v401
    %v1382 = vunpack.c.l.b16 %v402
    %v1383 = vunpack.c.l.b16 %v403
    %v1384 = vunpack.c.l.b16 %v404
    %v1385 = vunpack.c.l.b16 %v405
    %v1386 = vunpack.c.l.b16 %v406
    %v1387 = vunpack.c.l.b16 %v407
    %v1388 = vunpack.c.l.b16 %v408
    %v1389 = vunpack.c.l.b16 %v409
    %v1390 = vunpack.c.l.b16 %v410
    %v1391 = vunpack.c.l.b16 %v411
    %v1392 = vunpack.c.l.b16 %v412
    %v1393 = vunpack.c.l.b16 %v413
    %v1394 = vunpack.c.l.b16 %v414
    %v1395 = vunpack.c.l.b16 %v415
    %v1396 = vunpack.c.l.b16 %v416
    %v1397 = vunpack.c.l.b16 %v417
    %v1398 = vpack.c.b16 %v1007, %v1006
    %v1399 = vpack.c.b16 %v1009, %v1008
    %v1400 = vpack.c.b16 %v1011, %v1010
    %v1401 = vpack.c.b16 %v1013, %v1012
    %v1402 = vpack.c.b16 %v1015, %v1014
    %v1403 = vpack.c.b16 %v1017, %v1016
    %v1404 = vpack.c.b16 %v1019, %v1018
    %v1405 = vpack.c.b16 %v1021, %v1020
    %v1406 = vpack.c.b16 %v1023, %v1022
    %v1407 = vpack.c.b16 %v1025, %v1024
    %v1408 = vpack.c.b16 %v1027, %v1026
    %v1409 = vpack.c.b16 %v1029, %v1028
    %v1410 = vpack.c.b16 %v1031, %v1030
    %v1411 = vpack.c.b16 %v1033, %v1032
    %v1412 = vpack.c.b16 %v1035, %v1034
    %v1413 = vpack.c.b16 %v1037, %v1036
    %v1414 = vpack.c.b16 %v1039, %v1038
    %v1415 = vpack.c.b16 %v1041, %v1040
    %v1416 = vpack.c.b16 %v1043, %v1042
    %v1417 = vpack.c.b16 %v1045, %v1044
    %v1418 = vpack.c.b16 %v1047, %v1046
    %v1419 = vpack.c.b16 %v1049, %v1048
    %v1420 = vpack.c.b16 %v1051, %v1050
    %v1421 = vpack.c.b16 %v1053, %v1052
    %v1422 = vpack.c.b16 %v1055, %v1054
    %v1423 = vpack.c.b16 %v1057, %v1056
    %v1424 = vpack.c.b16 %v1059, %v1058
    %v1425 = vpack.c.b16 %v1061, %v1060
    %v1426 = vpack.c.b16 %v1063, %v1062
    %v1427 = vpack.c.b16 %v1065, %v1064
    %v1428 = vpack.c.b16 %v1067, %v1066
    %v1429 = vpack.c.b16 %v1069, %v1068
    %v1430 = vpack.c.b16 %v1071, %v1070
    %v1431 = vpack.c.b16 %v1073, %v1072
    %v1432 = vpack.c.b16 %v1075, %v1074
    %v1433 = vpack.c.b16 %v1077, %v1076
    %v1434 = vpack.c.b16 %v1079, %v1078
    %v1435 = vpack.c.b16 %v1081, %v1080
    %v1436 = vpack.c.b16 %v1083, %v1082
    %v1437 = vpack.c.b16 %v1085, %v1084
    %v1438 = vpack.c.b16 %v1087, %v1086
    %v1439 = vpack.c.b16 %v1089, %v1088
    %v1440 = vpack.c.b16 %v1091, %v1090
    %v1441 = vpack.c.b16 %v1093, %v1092
    %v1442 = vpack.c.b16 %v1095, %v1094
    %v1443 = vpack.c.b16 %v1097, %v1096
    %v1444 = vpack.c.b16 %v1099, %v1098
    %v1445 = vpack.c.b16 %v1101, %v1100
    %v1446 = vpack.c.b16 %v1103, %v1102
    %v1447 = vpack.c.b16 %v1105, %v1104
    %v1448 = vpack.c.b16 %v1107, %v1106
    %v1449 = vpack.c.b16 %v1109, %v1108
    %v1450 = vpack.c.b16 %v1111, %v1110
    %v1451 = vpack.c.b16 %v1113, %v1112
    %v1452 = vpack.c.b16 %v1115, %v1114
    %v1453 = vpack.c.b16 %v1117, %v1116
    %v1454 = vpack.c.b16 %v1119, %v1118
    %v1455 = vpack.c.b16 %v1121, %v1120
    %v1456 = vpack.c.b16 %v1123, %v1122
    %v1457 = vpack.c.b16 %v1125, %v1124
    %v1458 = vpack.c.b16 %v1127, %v1126
    %v1459 = vpack.c.b16 %v1129, %v1128
    %v1460 = vpack.c.b16 %v1131, %v1130
    %v1461 = vpack.c.b16 %v1133, %v1132
    %v1462 = vpack.c.b16 %v1135, %v1134
    %v1463 = vpack.c.b16 %v1137, %v1136
    %v1464 = vpack.c.b16 %v1139, %v1138
    %v1465 = vpack.c.b16 %v1141, %v1140
    %v1466 = vpack.c.b16 %v1143, %v1142
    %v1467 = vpack.c.b16 %v1145, %v1144
    %v1468 = vpack.c.b16 %v1147, %v1146
    %v1469 = vpack.c.b16 %v1149, %v1148
    %v1470 = vpack.c.b16 %v1151, %v1150
    %v1471 = vpack.c.b16 %v1153, %v1152
    %v1472 = vpack.c.b16 %v1155, %v1154
    %v1473 = vpack.c.b16 %v1157, %v1156
    %v1474 = vpack.c.b16 %v1159, %v1158
    %v1475 = vpack.c.b16 %v1161, %v1160
    %v1476 = vpack.c.b16 %v1163, %v1162
    %v1477 = vpack.c.b16 %v1165, %v1164
    %v1478 = vpack.c.b16 %v1167, %v1166
    %v1479 = vpack.c.b16 %v1169, %v1168
    %v1480 = vpack.c.b16 %v1171, %v1170
    %v1481 = vpack.c.b16 %v1173, %v1172
    %v1482 = vpack.c.b16 %v1175, %v1174
    %v1483 = vpack.c.b16 %v1177, %v1176
    %v1484 = vpack.c.b16 %v1179, %v1178
    %v1485 = vpack.c.b16 %v1181, %v1180
    %v1486 = vpack.c.b16 %v1183, %v1182
    %v1487 = vpack.c.b16 %v1185, %v1184
    %v1488 = vpack.c.b16 %v1187, %v1186
    %v1489 = vpack.c.b16 %v1189, %v1188
    %v1490 = vpack.c.b16 %v1191, %v1190
    %v1491 = vpack.c.b16 %v1193, %v1192
    %v1492 = vpack.c.b16 %v1195, %v1194
    %v1493 = vpack.c.b16 %v1197, %v1196
    %v1494 = vpack.c.b16 %v1199, %v1198
    %v1495 = vpack.c.b16 %v1201, %v1200
    %v1496 = vpack.c.b16 %v1203, %v1202
    %v1497 = vpack.c.b16 %v1205, %v1204
    %v1498 = vpack.c.b16 %v1207, %v1206
    %v1499 = vpack.c.b16 %v1209, %v1208
    %v1500 = vpack.c.b16 %v1211, %v1210
    %v1501 = vpack.c.b16 %v1213, %v1212
    %v1502 = vpack.c.b16 %v1215, %v1214
    %v1503 = vpack.c.b16 %v1217, %v1216
    %v1504 = vpack.c.b16 %v1219, %v1218
    %v1505 = vpack.c.b16 %v1221, %v1220
    %v1506 = vpack.c.b16 %v1223, %v1222
    %v1507 = vpack.c.b16 %v1225, %v1224
    %v1508 = vpack.c.b16 %v1227, %v1226
    %v1509 = vpack.c.b16 %v1229, %v1228
    %v1510 = vpack.c.b16 %v1231, %v1230
    %v1511 = vpack.c.b16 %v1233, %v1232
    %v1512 = vpack.c.b16 %v1235, %v1234
    %v1513 = vpack.c.b16 %v1237, %v1236
    %v1514 = vpack.c.b16 %v1239, %v1238
    %v1515 = vpack.c.b16 %v1241, %v1240
    %v1516 = vpack.c.b16 %v1243, %v1242
    %v1517 = vpack.c.b16 %v1245, %v1244
    %v1518 = vpack.c.b16 %v1247, %v1246
    %v1519 = vpack.c.b16 %v1249, %v1248
    %v1520 = vpack.c.b16 %v1251, %v1250
    %v1521 = vpack.c.b16 %v1253, %v1252
    %v1522 = vpack.c.b16 %v1255, %v1254
    %v1523 = vpack.c.b16 %v1257, %v1256
    %v1524 = vpack.c.b16 %v1259, %v1258
    %v1525 = vpack.c.b16 %v1261, %v1260
    %v1526 = vpack.c.b16 %v1263, %v1262
    %v1527 = vpack.c.b16 %v1265, %v1264
    %v1528 = vpack.c.b16 %v1267, %v1266
    %v1529 = vpack.c.b16 %v1269, %v1268
    %v1530 = vpack.c.b16 %v1271, %v1270
    %v1531 = vpack.c.b16 %v1273, %v1272
    %v1532 = vpack.c.b16 %v1275, %v1274
    %v1533 = vpack.c.b16 %v1277, %v1276
    %v1534 = vpack.c.b16 %v1279, %v1278
    %v1535 = vpack.c.b16 %v1281, %v1280
    %v1536 = vpack.c.b16 %v1283, %v1282
    %v1537 = vpack.c.b16 %v1285, %v1284
    %v1538 = vpack.c.b16 %v1287, %v1286
    %v1539 = vpack.c.b16 %v1289, %v1288
    %v1540 = vpack.c.b16 %v1291, %v1290
    %v1541 = vpack.c.b16 %v1293, %v1292
    %v1542 = vpack.c.b16 %v1295, %v1294
    %v1543 = vpack.c.b16 %v1297, %v1296
    %v1544 = vpack.c.b16 %v1299, %v1298
    %v1545 = vpack.c.b16 %v1301, %v1300
    %v1546 = vpack.c.b16 %v1303, %v1302
    %v1547 = vpack.c.b16 %v1305, %v1304
    %v1548 = vpack.c.b16 %v1307, %v1306
    %v1549 = vpack.c.b16 %v1309, %v1308
    %v1550 = vpack.c.b16 %v1311, %v1310
    %v1551 = vpack.c.b16 %v1313, %v1312
    %v1552 = vpack.c.b16 %v1315, %v1314
    %v1553 = vpack.c.b16 %v1317, %v1316
    %v1554 = vpack.c.b16 %v1319, %v1318
    %v1555 = vpack.c.b16 %v1321, %v1320
    %v1556 = vpack.c.b16 %v1323, %v1322
    %v1557 = vpack.c.b16 %v1325, %v1324
    %v1558 = vpack.c.b16 %v1327, %v1326
    %v1559 = vpack.c.b16 %v1329, %v1328
    %v1560 = vpack.c.b16 %v1331, %v1330
    %v1561 = vpack.c.b16 %v1333, %v1332
    %v1562 = vpack.c.b16 %v1335, %v1334
    %v1563 = vpack.c.b16 %v1337, %v1336
    %v1564 = vpack.c.b16 %v1339, %v1338
    %v1565 = vpack.c.b16 %v1341, %v1340
    %v1566 = vpack.c.b16 %v1343, %v1342
    %v1567 = vpack.c.b16 %v1345, %v1344
    %v1568 = vpack.c.b16 %v1347, %v1346
    %v1569 = vpack.c.b16 %v1349, %v1348
    %v1570 = vpack.c.b16 %v1351, %v1350
    %v1571 = vpack.c.b16 %v1353, %v1352
    %v1572 = vpack.c.b16 %v1355, %v1354
    %v1573 = vpack.c.b16 %v1357, %v1356
    %v1574 = vpack.c.b16 %v1359, %v1358
    %v1575 = vpack.c.b16 %v1361, %v1360
    %v1576 = vpack.c.b16 %v1363, %v1362
    %v1577 = vpack.c.b16 %v1365, %v1364
    %v1578 = vpack.c.b16 %v1367, %v1366
    %v1579 = vpack.c.b16 %v1369, %v1368
    %v1580 = vpack.c.b16 %v1371, %v1370
    %v1581 = vpack.c.b16 %v1373, %v1372
    %v1582 = vpack.c.b16 %v1375, %v1374
    %v1583 = vpack.c.b16 %v1377, %v1376
    %v1584 = vpack.c.b16 %v1379, %v1378
    %v1585 = vpack.c.b16 %v1381, %v1380
    %v1586 = vpack.c.b16 %v1383, %v1382
    %v1587 = vpack.c.b16 %v1385, %v1384
    %v1588 = vpack.c.b16 %v1387, %v1386
    %v1589 = vpack.c.b16 %v1389, %v1388
    %v1590 = vpack.c.b16 %v1391, %v1390
    %v1591 = vpack.c.b16 %v1393, %v1392
    %v1592 = vpack.c.b16 %v1395, %v1394
    %v1593 = vpack.c.b16 %v1397, %v1396
    %vm1790 = vcmask 523264
    %v1792 = vsel %vm1790, %v589, 0
    %1794 = vmatprep.subr.bf16.mxu0 0
    %1795 = vmatpush1.bf16.msra.mxu0 %v1398
    %1796 = vmatprep.subr.bf16.mxu0 0
    %1797 = vmatpush1.bf16.msra.mxu0 %v1399
    %1798 = vmatprep.subr.bf16.mxu0 0
    %1799 = vmatpush1.bf16.msra.mxu0 %v1400
    %1800 = vmatprep.subr.bf16.mxu0 0
    %1801 = vmatpush1.bf16.msra.mxu0 %v1401
    %1802 = vmatprep.subr.bf16.mxu0 0
    %1803 = vmatpush1.bf16.msra.mxu0 %v1402
    %1804 = vmatprep.subr.bf16.mxu0 0
    %1805 = vmatpush1.bf16.msra.mxu0 %v1403
    %1806 = vmatprep.subr.bf16.mxu0 0
    %1807 = vmatpush1.bf16.msra.mxu0 %v1404
    %1808 = vmatprep.subr.bf16.mxu0 0
    %1809 = vmatpush1.bf16.msra.mxu0 %v1405
    %1810 = vmatprep.subr.bf16.mxu0 0
    %1811 = vmatpush1.bf16.msra.mxu0 %v1406
    %1812 = vmatprep.subr.bf16.mxu0 0
    %1813 = vmatpush1.bf16.msra.mxu0 %v1407
    %1814 = vmatprep.subr.bf16.mxu0 0
    %1815 = vmatpush1.bf16.msra.mxu0 %v1408
    %1816 = vmatprep.subr.bf16.mxu0 0
    %1817 = vmatpush1.bf16.msra.mxu0 %v1409
    %1818 = vmatprep.subr.bf16.mxu0 0
    %1819 = vmatpush1.bf16.msra.mxu0 %v1410
    %1820 = vmatprep.subr.bf16.mxu0 0
    %1821 = vmatpush1.bf16.msra.mxu0 %v1411
    %1822 = vmatprep.subr.bf16.mxu0 0
    %1823 = vmatpush1.bf16.msra.mxu0 %v1412
    %1824 = vmatprep.subr.bf16.mxu0 0
    %1825 = vmatpush1.bf16.msra.mxu0 %v1413
    %1826 = vmatprep.mubr.bf16.mxu0 %v466
    %1827 = vmatmul.mubr.bf16.gmra.mrb[0].mxu0 %v452
    %v1828 = vpop.f32.mrb[0].mxu0
    %v1829 = vadd.f32 %v423, %v1828
    %v1830 = vpop.f32.mrb[0].mxu0
    %v1831 = vpop.f32.mrb[0].mxu0
    %v1832 = vpop.f32.mrb[0].mxu0
    %1833 = vdwg.mxu0
    %1834 = vmatprep.subr.bf16.mxu0 0
    %1835 = vmatpush1.bf16.msra.mxu0 %v1414
    %1836 = vmatprep.subr.bf16.mxu0 0
    %1837 = vmatpush1.bf16.msra.mxu0 %v1415
    %1838 = vmatprep.subr.bf16.mxu0 0
    %1839 = vmatpush1.bf16.msra.mxu0 %v1416
    %1840 = vmatprep.subr.bf16.mxu0 0
    %1841 = vmatpush1.bf16.msra.mxu0 %v1417
    %1842 = vmatprep.subr.bf16.mxu0 0
    %1843 = vmatpush1.bf16.msra.mxu0 %v1418
    %1844 = vmatprep.subr.bf16.mxu0 0
    %1845 = vmatpush1.bf16.msra.mxu0 %v1419
    %1846 = vmatprep.subr.bf16.mxu0 0
    %1847 = vmatpush1.bf16.msra.mxu0 %v1420
    %1848 = vmatprep.subr.bf16.mxu0 0
    %1849 = vmatpush1.bf16.msra.mxu0 %v1421
    %1850 = vmatprep.subr.bf16.mxu0 0
    %1851 = vmatpush1.bf16.msra.mxu0 %v1422
    %1852 = vmatprep.subr.bf16.mxu0 0
    %1853 = vmatpush1.bf16.msra.mxu0 %v1423
    %1854 = vmatprep.subr.bf16.mxu0 0
    %1855 = vmatpush1.bf16.msra.mxu0 %v1424
    %1856 = vmatprep.subr.bf16.mxu0 0
    %1857 = vmatpush1.bf16.msra.mxu0 %v1425
    %1858 = vmatprep.subr.bf16.mxu0 0
    %1859 = vmatpush1.bf16.msra.mxu0 %v1426
    %1860 = vmatprep.subr.bf16.mxu0 0
    %1861 = vmatpush1.bf16.msra.mxu0 %v1427
    %1862 = vmatprep.subr.bf16.mxu0 0
    %1863 = vmatpush1.bf16.msra.mxu0 %v1428
    %1864 = vmatprep.subr.bf16.mxu0 0
    %1865 = vmatpush1.bf16.msra.mxu0 %v1429
    %1866 = vmatprep.mubr.bf16.mxu0 %v476
    %1867 = vmatmul.mubr.bf16.gmra.mrb[0].mxu0 %v474
    %v1868 = vpop.f32.mrb[0].mxu0
    %v1869 = vadd.f32 %v1829, %v1868
    %v1870 = vpop.f32.mrb[0].mxu0
    %v1871 = vpop.f32.mrb[0].mxu0
    %v1872 = vpop.f32.mrb[0].mxu0
    %1873 = vdwg.mxu0
    %1874 = vmatprep.subr.bf16.mxu0 0
    %1875 = vmatpush1.bf16.msra.mxu0 %v1430
    %1876 = vmatprep.subr.bf16.mxu0 0
    %1877 = vmatpush1.bf16.msra.mxu0 %v1431
    %1878 = vmatprep.subr.bf16.mxu0 0
    %1879 = vmatpush1.bf16.msra.mxu0 %v1432
    %1880 = vmatprep.subr.bf16.mxu0 0
    %1881 = vmatpush1.bf16.msra.mxu0 %v1433
    %1882 = vmatprep.subr.bf16.mxu0 0
    %1883 = vmatpush1.bf16.msra.mxu0 %v1434
    %1884 = vmatprep.subr.bf16.mxu0 0
    %1885 = vmatpush1.bf16.msra.mxu0 %v1435
    %1886 = vmatprep.subr.bf16.mxu0 0
    %1887 = vmatpush1.bf16.msra.mxu0 %v1436
    %1888 = vmatprep.subr.bf16.mxu0 0
    %1889 = vmatpush1.bf16.msra.mxu0 %v1437
    %1890 = vmatprep.subr.bf16.mxu0 0
    %1891 = vmatpush1.bf16.msra.mxu0 %v1438
    %1892 = vmatprep.subr.bf16.mxu0 0
    %1893 = vmatpush1.bf16.msra.mxu0 %v1439
    %1894 = vmatprep.subr.bf16.mxu0 0
    %1895 = vmatpush1.bf16.msra.mxu0 %v1440
    %1896 = vmatprep.subr.bf16.mxu0 0
    %1897 = vmatpush1.bf16.msra.mxu0 %v1441
    %1898 = vmatprep.subr.bf16.mxu0 0
    %1899 = vmatpush1.bf16.msra.mxu0 %v1442
    %1900 = vmatprep.subr.bf16.mxu0 0
    %1901 = vmatpush1.bf16.msra.mxu0 %v1443
    %1902 = vmatprep.subr.bf16.mxu0 0
    %1903 = vmatpush1.bf16.msra.mxu0 %v1444
    %1904 = vmatprep.subr.bf16.mxu0 0
    %1905 = vmatpush1.bf16.msra.mxu0 %v1445
    %1906 = vmatprep.mubr.bf16.mxu0 %v473
    %1907 = vmatmul.mubr.bf16.gmra.mrb[0].mxu0 %v459
    %v1908 = vpop.f32.mrb[0].mxu0
    %v1909 = vadd.f32 %v1869, %v1908
    %v1910 = vpop.f32.mrb[0].mxu0
    %v1911 = vpop.f32.mrb[0].mxu0
    %v1912 = vpop.f32.mrb[0].mxu0
    %1913 = vdwg.mxu0
    %1914 = vmatprep.subr.bf16.mxu0 0
    %1915 = vmatpush1.bf16.msra.mxu0 %v1446
    %1916 = vmatprep.subr.bf16.mxu0 0
    %1917 = vmatpush1.bf16.msra.mxu0 %v1447
    %1918 = vmatprep.subr.bf16.mxu0 0
    %1919 = vmatpush1.bf16.msra.mxu0 %v1448
    %1920 = vmatprep.subr.bf16.mxu0 0
    %1921 = vmatpush1.bf16.msra.mxu0 %v1449
    %1922 = vmatprep.subr.bf16.mxu0 0
    %1923 = vmatpush1.bf16.msra.mxu0 %v1450
    %1924 = vmatprep.subr.bf16.mxu0 0
    %1925 = vmatpush1.bf16.msra.mxu0 %v1451
    %1926 = vmatprep.subr.bf16.mxu0 0
    %1927 = vmatpush1.bf16.msra.mxu0 %v1452
    %1928 = vmatprep.subr.bf16.mxu0 0
    %1929 = vmatpush1.bf16.msra.mxu0 %v1453
    %1930 = vmatprep.subr.bf16.mxu0 0
    %1931 = vmatpush1.bf16.msra.mxu0 %v1454
    %1932 = vmatprep.subr.bf16.mxu0 0
    %1933 = vmatpush1.bf16.msra.mxu0 %v1455
    %1934 = vmatprep.subr.bf16.mxu0 0
    %1935 = vmatpush1.bf16.msra.mxu0 %v1456
    %1936 = vmatprep.subr.bf16.mxu0 0
    %1937 = vmatpush1.bf16.msra.mxu0 %v1457
    %1938 = vmatprep.subr.bf16.mxu0 0
    %1939 = vmatpush1.bf16.msra.mxu0 %v1458
    %1940 = vmatprep.subr.bf16.mxu0 0
    %1941 = vmatpush1.bf16.msra.mxu0 %v1459
    %1942 = vmatprep.subr.bf16.mxu0 0
    %1943 = vmatpush1.bf16.msra.mxu0 %v1460
    %1944 = vmatprep.subr.bf16.mxu0 0
    %1945 = vmatpush1.bf16.msra.mxu0 %v1461
    %1946 = vmatprep.mubr.bf16.mxu0 %v477
    %1947 = vmatmul.mubr.bf16.gmra.mrb[0].mxu0 %v475
    %v1948 = vpop.f32.mrb[0].mxu0
    %v1949 = vadd.f32 %v1909, %v1948
    %v1950 = vpop.f32.mrb[0].mxu0
    %v1951 = vpop.f32.mrb[0].mxu0
    %v1952 = vpop.f32.mrb[0].mxu0
    %1953 = vdwg.mxu0
    %1954 = vmatprep.subr.bf16.mxu0 0
    %1955 = vmatpush1.bf16.msra.mxu0 %v1462
    %1956 = vmatprep.subr.bf16.mxu0 0
    %1957 = vmatpush1.bf16.msra.mxu0 %v1463
    %1958 = vmatprep.subr.bf16.mxu0 0
    %1959 = vmatpush1.bf16.msra.mxu0 %v1464
    %1960 = vmatprep.subr.bf16.mxu0 0
    %1961 = vmatpush1.bf16.msra.mxu0 %v1465
    %1962 = vmatprep.subr.bf16.mxu0 0
    %1963 = vmatpush1.bf16.msra.mxu0 %v1466
    %1964 = vmatprep.subr.bf16.mxu0 0
    %1965 = vmatpush1.bf16.msra.mxu0 %v1467
    %1966 = vmatprep.subr.bf16.mxu0 0
    %1967 = vmatpush1.bf16.msra.mxu0 %v1468
    %1968 = vmatprep.subr.bf16.mxu0 0
    %1969 = vmatpush1.bf16.msra.mxu0 %v1469
    %1970 = vmatprep.subr.bf16.mxu0 0
    %1971 = vmatpush1.bf16.msra.mxu0 %v1470
    %1972 = vmatprep.subr.bf16.mxu0 0
    %1973 = vmatpush1.bf16.msra.mxu0 %v1471
    %1974 = vmatprep.subr.bf16.mxu0 0
    %1975 = vmatpush1.bf16.msra.mxu0 %v1472
    %1976 = vmatprep.subr.bf16.mxu0 0
    %1977 = vmatpush1.bf16.msra.mxu0 %v1473
    %1978 = vmatprep.subr.bf16.mxu0 0
    %1979 = vmatpush1.bf16.msra.mxu0 %v1474
    %1980 = vmatprep.subr.bf16.mxu0 0
    %1981 = vmatpush1.bf16.msra.mxu0 %v1475
    %1982 = vmatprep.subr.bf16.mxu0 0
    %1983 = vmatpush1.bf16.msra.mxu0 %v1476
    %1984 = vmatprep.subr.bf16.mxu0 0
    %1985 = vmatpush1.bf16.msra.mxu0 %v1477
    %1986 = vmatprep.mubr.bf16.mxu0 %v515
    %1987 = vmatmul.mubr.bf16.gmra.mrb[0].mxu0 %v501
    %v1988 = vpop.f32.mrb[0].mxu0
    %v1989 = vadd.f32 %v1949, %v1988
    %v1990 = vpop.f32.mrb[0].mxu0
    %v1991 = vpop.f32.mrb[0].mxu0
    %v1992 = vpop.f32.mrb[0].mxu0
    %1993 = vdwg.mxu0
    %1994 = vmatprep.subr.bf16.mxu0 0
    %1995 = vmatpush1.bf16.msra.mxu0 %v1478
    %1996 = vmatprep.subr.bf16.mxu0 0
    %1997 = vmatpush1.bf16.msra.mxu0 %v1479
    %1998 = vmatprep.subr.bf16.mxu0 0
    %1999 = vmatpush1.bf16.msra.mxu0 %v1480
    %2000 = vmatprep.subr.bf16.mxu0 0
    %2001 = vmatpush1.bf16.msra.mxu0 %v1481
    %2002 = vmatprep.subr.bf16.mxu0 0
    %2003 = vmatpush1.bf16.msra.mxu0 %v1482
    %2004 = vmatprep.subr.bf16.mxu0 0
    %2005 = vmatpush1.bf16.msra.mxu0 %v1483
    %2006 = vmatprep.subr.bf16.mxu0 0
    %2007 = vmatpush1.bf16.msra.mxu0 %v1484
    %2008 = vmatprep.subr.bf16.mxu0 0
    %2009 = vmatpush1.bf16.msra.mxu0 %v1485
    %2010 = vmatprep.subr.bf16.mxu0 0
    %2011 = vmatpush1.bf16.msra.mxu0 %v1486
    %2012 = vmatprep.subr.bf16.mxu0 0
    %2013 = vmatpush1.bf16.msra.mxu0 %v1487
    %2014 = vmatprep.subr.bf16.mxu0 0
    %2015 = vmatpush1.bf16.msra.mxu0 %v1488
    %2016 = vmatprep.subr.bf16.mxu0 0
    %2017 = vmatpush1.bf16.msra.mxu0 %v1489
    %2018 = vmatprep.subr.bf16.mxu0 0
    %2019 = vmatpush1.bf16.msra.mxu0 %v1490
    %2020 = vmatprep.subr.bf16.mxu0 0
    %2021 = vmatpush1.bf16.msra.mxu0 %v1491
    %2022 = vmatprep.subr.bf16.mxu0 0
    %2023 = vmatpush1.bf16.msra.mxu0 %v1492
    %2024 = vmatprep.subr.bf16.mxu0 0
    %2025 = vmatpush1.bf16.msra.mxu0 %v1493
    %2026 = vmatprep.mubr.bf16.mxu0 %v525
    %2027 = vmatmul.mubr.bf16.gmra.mrb[0].mxu0 %v523
    %v2028 = vpop.f32.mrb[0].mxu0
    %v2029 = vadd.f32 %v1989, %v2028
    %v2030 = vpop.f32.mrb[0].mxu0
    %v2031 = vpop.f32.mrb[0].mxu0
    %v2032 = vpop.f32.mrb[0].mxu0
    %2033 = vdwg.mxu0
    %2034 = vmatprep.subr.bf16.mxu0 0
    %2035 = vmatpush1.bf16.msra.mxu0 %v1494
    %2036 = vmatprep.subr.bf16.mxu0 0
    %2037 = vmatpush1.bf16.msra.mxu0 %v1495
    %2038 = vmatprep.subr.bf16.mxu0 0
    %2039 = vmatpush1.bf16.msra.mxu0 %v1496
    %2040 = vmatprep.subr.bf16.mxu0 0
    %2041 = vmatpush1.bf16.msra.mxu0 %v1497
    %2042 = vmatprep.subr.bf16.mxu0 0
    %2043 = vmatpush1.bf16.msra.mxu0 %v1498
    %2044 = vmatprep.subr.bf16.mxu0 0
    %2045 = vmatpush1.bf16.msra.mxu0 %v1499
    %2046 = vmatprep.subr.bf16.mxu0 0
    %2047 = vmatpush1.bf16.msra.mxu0 %v1500
    %2048 = vmatprep.subr.bf16.mxu0 0
    %2049 = vmatpush1.bf16.msra.mxu0 %v1501
    %2050 = vmatprep.subr.bf16.mxu0 0
    %2051 = vmatpush1.bf16.msra.mxu0 %v1502
    %2052 = vmatprep.subr.bf16.mxu0 0
    %2053 = vmatpush1.bf16.msra.mxu0 %v1503
    %2054 = vmatprep.subr.bf16.mxu0 0
    %2055 = vmatpush1.bf16.msra.mxu0 %v1504
    %2056 = vmatprep.subr.bf16.mxu0 0
    %2057 = vmatpush1.bf16.msra.mxu0 %v1505
    %2058 = vmatprep.subr.bf16.mxu0 0
    %2059 = vmatpush1.bf16.msra.mxu0 %v1506
    %2060 = vmatprep.subr.bf16.mxu0 0
    %2061 = vmatpush1.bf16.msra.mxu0 %v1507
    %2062 = vmatprep.subr.bf16.mxu0 0
    %2063 = vmatpush1.bf16.msra.mxu0 %v1508
    %2064 = vmatprep.subr.bf16.mxu0 0
    %2065 = vmatpush1.bf16.msra.mxu0 %v1509
    %2066 = vmatprep.mubr.bf16.mxu0 %v522
    %2067 = vmatmul.mubr.bf16.gmra.mrb[0].mxu0 %v508
    %v2068 = vpop.f32.mrb[0].mxu0
    %v2069 = vadd.f32 %v2029, %v2068
    %v2070 = vpop.f32.mrb[0].mxu0
    %v2071 = vpop.f32.mrb[0].mxu0
    %v2072 = vpop.f32.mrb[0].mxu0
    %2073 = vdwg.mxu0
    %2074 = vmatprep.subr.bf16.mxu0 0
    %2075 = vmatpush1.bf16.msra.mxu0 %v1510
    %2076 = vmatprep.subr.bf16.mxu0 0
    %2077 = vmatpush1.bf16.msra.mxu0 %v1511
    %2078 = vmatprep.subr.bf16.mxu0 0
    %2079 = vmatpush1.bf16.msra.mxu0 %v1512
    %2080 = vmatprep.subr.bf16.mxu0 0
    %2081 = vmatpush1.bf16.msra.mxu0 %v1513
    %2082 = vmatprep.subr.bf16.mxu0 0
    %2083 = vmatpush1.bf16.msra.mxu0 %v1514
    %2084 = vmatprep.subr.bf16.mxu0 0
    %2085 = vmatpush1.bf16.msra.mxu0 %v1515
    %2086 = vmatprep.subr.bf16.mxu0 0
    %2087 = vmatpush1.bf16.msra.mxu0 %v1516
    %2088 = vmatprep.subr.bf16.mxu0 0
    %2089 = vmatpush1.bf16.msra.mxu0 %v1517
    %2090 = vmatprep.subr.bf16.mxu0 0
    %2091 = vmatpush1.bf16.msra.mxu0 %v1518
    %2092 = vmatprep.subr.bf16.mxu0 0
    %2093 = vmatpush1.bf16.msra.mxu0 %v1519
    %2094 = vmatprep.subr.bf16.mxu0 0
    %2095 = vmatpush1.bf16.msra.mxu0 %v1520
    %2096 = vmatprep.subr.bf16.mxu0 0
    %2097 = vmatpush1.bf16.msra.mxu0 %v1521
    %2098 = vmatprep.subr.bf16.mxu0 0
    %2099 = vmatpush1.bf16.msra.mxu0 %v1522
    %2100 = vmatprep.subr.bf16.mxu0 0
    %2101 = vmatpush1.bf16.msra.mxu0 %v1523
    %2102 = vmatprep.subr.bf16.mxu0 0
    %2103 = vmatpush1.bf16.msra.mxu0 %v1524
    %2104 = vmatprep.subr.bf16.mxu0 0
    %2105 = vmatpush1.bf16.msra.mxu0 %v1525
    %2106 = vmatprep.mubr.bf16.mxu0 %v526
    %2107 = vmatmul.mubr.bf16.gmra.mrb[0].mxu0 %v524
    %v2108 = vpop.f32.mrb[0].mxu0
    %v2109 = vadd.f32 %v2069, %v2108
    %v2110 = vpop.f32.mrb[0].mxu0
    %v2111 = vpop.f32.mrb[0].mxu0
    %v2112 = vpop.f32.mrb[0].mxu0
    %2113 = vdwg.mxu0
    %2114 = vmatprep.subr.bf16.mxu0 0
    %2115 = vmatpush1.bf16.msra.mxu0 %v1526
    %2116 = vmatprep.subr.bf16.mxu0 0
    %2117 = vmatpush1.bf16.msra.mxu0 %v1527
    %2118 = vmatprep.subr.bf16.mxu0 0
    %2119 = vmatpush1.bf16.msra.mxu0 %v1528
    %2120 = vmatprep.subr.bf16.mxu0 0
    %2121 = vmatpush1.bf16.msra.mxu0 %v1529
    %2122 = vmatprep.subr.bf16.mxu0 0
    %2123 = vmatpush1.bf16.msra.mxu0 %v1530
    %2124 = vmatprep.subr.bf16.mxu0 0
    %2125 = vmatpush1.bf16.msra.mxu0 %v1531
    %2126 = vmatprep.subr.bf16.mxu0 0
    %2127 = vmatpush1.bf16.msra.mxu0 %v1532
    %2128 = vmatprep.subr.bf16.mxu0 0
    %2129 = vmatpush1.bf16.msra.mxu0 %v1533
    %2130 = vmatprep.subr.bf16.mxu0 0
    %2131 = vmatpush1.bf16.msra.mxu0 %v1534
    %2132 = vmatprep.subr.bf16.mxu0 0
    %2133 = vmatpush1.bf16.msra.mxu0 %v1535
    %2134 = vmatprep.subr.bf16.mxu0 0
    %2135 = vmatpush1.bf16.msra.mxu0 %v1536
    %2136 = vmatprep.subr.bf16.mxu0 0
    %2137 = vmatpush1.bf16.msra.mxu0 %v1537
    %2138 = vmatprep.subr.bf16.mxu0 0
    %2139 = vmatpush1.bf16.msra.mxu0 %v1538
    %2140 = vmatprep.subr.bf16.mxu0 0
    %2141 = vmatpush1.bf16.msra.mxu0 %v1539
    %2142 = vmatprep.subr.bf16.mxu0 0
    %2143 = vmatpush1.bf16.msra.mxu0 %v1540
    %2144 = vmatprep.subr.bf16.mxu0 0
    %2145 = vmatpush1.bf16.msra.mxu0 %v1541
    %2146 = vmatprep.mubr.bf16.mxu0 %v564
    %2147 = vmatmul.mubr.bf16.gmra.mrb[0].mxu0 %v550
    %v2148 = vpop.f32.mrb[0].mxu0
    %v2149 = vadd.f32 %v2109, %v2148
    %v2150 = vpop.f32.mrb[0].mxu0
    %v2151 = vpop.f32.mrb[0].mxu0
    %v2152 = vpop.f32.mrb[0].mxu0
    %2153 = vdwg.mxu0
    %2154 = vmatprep.subr.bf16.mxu0 0
    %2155 = vmatpush1.bf16.msra.mxu0 %v1542
    %2156 = vmatprep.subr.bf16.mxu0 0
    %2157 = vmatpush1.bf16.msra.mxu0 %v1543
    %2158 = vmatprep.subr.bf16.mxu0 0
    %2159 = vmatpush1.bf16.msra.mxu0 %v1544
    %2160 = vmatprep.subr.bf16.mxu0 0
    %2161 = vmatpush1.bf16.msra.mxu0 %v1545
    %2162 = vmatprep.subr.bf16.mxu0 0
    %2163 = vmatpush1.bf16.msra.mxu0 %v1546
    %2164 = vmatprep.subr.bf16.mxu0 0
    %2165 = vmatpush1.bf16.msra.mxu0 %v1547
    %2166 = vmatprep.subr.bf16.mxu0 0
    %2167 = vmatpush1.bf16.msra.mxu0 %v1548
    %2168 = vmatprep.subr.bf16.mxu0 0
    %2169 = vmatpush1.bf16.msra.mxu0 %v1549
    %2170 = vmatprep.subr.bf16.mxu0 0
    %2171 = vmatpush1.bf16.msra.mxu0 %v1550
    %2172 = vmatprep.subr.bf16.mxu0 0
    %2173 = vmatpush1.bf16.msra.mxu0 %v1551
    %2174 = vmatprep.subr.bf16.mxu0 0
    %2175 = vmatpush1.bf16.msra.mxu0 %v1552
    %2176 = vmatprep.subr.bf16.mxu0 0
    %2177 = vmatpush1.bf16.msra.mxu0 %v1553
    %2178 = vmatprep.subr.bf16.mxu0 0
    %2179 = vmatpush1.bf16.msra.mxu0 %v1554
    %2180 = vmatprep.subr.bf16.mxu0 0
    %2181 = vmatpush1.bf16.msra.mxu0 %v1555
    %2182 = vmatprep.subr.bf16.mxu0 0
    %2183 = vmatpush1.bf16.msra.mxu0 %v1556
    %2184 = vmatprep.subr.bf16.mxu0 0
    %2185 = vmatpush1.bf16.msra.mxu0 %v1557
    %2186 = vmatprep.mubr.bf16.mxu0 %v574
    %2187 = vmatmul.mubr.bf16.gmra.mrb[0].mxu0 %v572
    %v2188 = vpop.f32.mrb[0].mxu0
    %v2189 = vadd.f32 %v2149, %v2188
    %v2190 = vpop.f32.mrb[0].mxu0
    %v2191 = vpop.f32.mrb[0].mxu0
    %v2192 = vpop.f32.mrb[0].mxu0
    %2193 = vdwg.mxu0
    %2194 = vmatprep.subr.bf16.mxu0 0
    %2195 = vmatpush1.bf16.msra.mxu0 %v1558
    %2196 = vmatprep.subr.bf16.mxu0 0
    %2197 = vmatpush1.bf16.msra.mxu0 %v1559
    %2198 = vmatprep.subr.bf16.mxu0 0
    %2199 = vmatpush1.bf16.msra.mxu0 %v1560
    %2200 = vmatprep.subr.bf16.mxu0 0
    %2201 = vmatpush1.bf16.msra.mxu0 %v1561
    %2202 = vmatprep.subr.bf16.mxu0 0
    %2203 = vmatpush1.bf16.msra.mxu0 %v1562
    %2204 = vmatprep.subr.bf16.mxu0 0
    %2205 = vmatpush1.bf16.msra.mxu0 %v1563
    %2206 = vmatprep.subr.bf16.mxu0 0
    %2207 = vmatpush1.bf16.msra.mxu0 %v1564
    %2208 = vmatprep.subr.bf16.mxu0 0
    %2209 = vmatpush1.bf16.msra.mxu0 %v1565
    %2210 = vmatprep.subr.bf16.mxu0 0
    %2211 = vmatpush1.bf16.msra.mxu0 %v1566
    %2212 = vmatprep.subr.bf16.mxu0 0
    %2213 = vmatpush1.bf16.msra.mxu0 %v1567
    %2214 = vmatprep.subr.bf16.mxu0 0
    %2215 = vmatpush1.bf16.msra.mxu0 %v1568
    %2216 = vmatprep.subr.bf16.mxu0 0
    %2217 = vmatpush1.bf16.msra.mxu0 %v1569
    %2218 = vmatprep.subr.bf16.mxu0 0
    %2219 = vmatpush1.bf16.msra.mxu0 %v1570
    %2220 = vmatprep.subr.bf16.mxu0 0
    %2221 = vmatpush1.bf16.msra.mxu0 %v1571
    %2222 = vmatprep.subr.bf16.mxu0 0
    %2223 = vmatpush1.bf16.msra.mxu0 %v1572
    %2224 = vmatprep.subr.bf16.mxu0 0
    %2225 = vmatpush1.bf16.msra.mxu0 %v1573
    %2226 = vmatprep.mubr.bf16.mxu0 %v571
    %2227 = vmatmul.mubr.bf16.gmra.mrb[0].mxu0 %v557
    %v2228 = vpop.f32.mrb[0].mxu0
    %v2229 = vadd.f32 %v2189, %v2228
    %v2230 = vpop.f32.mrb[0].mxu0
    %v2231 = vpop.f32.mrb[0].mxu0
    %v2232 = vpop.f32.mrb[0].mxu0
    %2233 = vdwg.mxu0
    %2234 = vmatprep.subr.bf16.mxu0 0
    %2235 = vmatpush1.bf16.msra.mxu0 %v1574
    %2236 = vmatprep.subr.bf16.mxu0 0
    %2237 = vmatpush1.bf16.msra.mxu0 %v1575
    %2238 = vmatprep.subr.bf16.mxu0 0
    %2239 = vmatpush1.bf16.msra.mxu0 %v1576
    %2240 = vmatprep.subr.bf16.mxu0 0
    %2241 = vmatpush1.bf16.msra.mxu0 %v1577
    %2242 = vmatprep.subr.bf16.mxu0 0
    %2243 = vmatpush1.bf16.msra.mxu0 %v1578
    %2244 = vmatprep.subr.bf16.mxu0 0
    %2245 = vmatpush1.bf16.msra.mxu0 %v1579
    %2246 = vmatprep.subr.bf16.mxu0 0
    %2247 = vmatpush1.bf16.msra.mxu0 %v1580
    %2248 = vmatprep.subr.bf16.mxu0 0
    %2249 = vmatpush1.bf16.msra.mxu0 %v1581
    %2250 = vmatprep.subr.bf16.mxu0 0
    %2251 = vmatpush1.bf16.msra.mxu0 %v1582
    %2252 = vmatprep.subr.bf16.mxu0 0
    %2253 = vmatpush1.bf16.msra.mxu0 %v1583
    %2254 = vmatprep.subr.bf16.mxu0 0
    %2255 = vmatpush1.bf16.msra.mxu0 %v1584
    %2256 = vmatprep.subr.bf16.mxu0 0
    %2257 = vmatpush1.bf16.msra.mxu0 %v1585
    %2258 = vmatprep.subr.bf16.mxu0 0
    %2259 = vmatpush1.bf16.msra.mxu0 %v1586
    %2260 = vmatprep.subr.bf16.mxu0 0
    %2261 = vmatpush1.bf16.msra.mxu0 %v1587
    %2262 = vmatprep.subr.bf16.mxu0 0
    %2263 = vmatpush1.bf16.msra.mxu0 %v1588
    %2264 = vmatprep.subr.bf16.mxu0 0
    %2265 = vmatpush1.bf16.msra.mxu0 %v1589
    %2266 = vmatprep.mubr.bf16.mxu0 %v575
    %2267 = vmatmul.mubr.bf16.gmra.mrb[0].mxu0 %v573
    %v2268 = vpop.f32.mrb[0].mxu0
    %v2269 = vadd.f32 %v2229, %v2268
    %v2270 = vpop.f32.mrb[0].mxu0
    %v2271 = vpop.f32.mrb[0].mxu0
    %v2272 = vpop.f32.mrb[0].mxu0
    %2273 = vdwg.mxu0
    %2274 = vmatprep.subr.bf16.mxu0 0
    %2275 = vmatpush1.bf16.msra.mxu0 %v1590
    %2276 = vmatprep.subr.bf16.mxu0 0
    %2277 = vmatpush1.bf16.msra.mxu0 %v1591
    %2278 = vmatprep.subr.bf16.mxu0 0
    %2279 = vmatpush1.bf16.msra.mxu0 %v1592
    %2280 = vmatprep.subr.bf16.mxu0 0
    %2281 = vmatpush1.bf16.msra.mxu0 %v1593
    %2282 = vmatprep.subr.bf16.mxu0 0
    %2283 = vmatpush1.bf16.msra.mxu0 0
    %2284 = vmatprep.subr.bf16.mxu0 0
    %2285 = vmatpush1.bf16.msra.mxu0 0
    %2286 = vmatprep.subr.bf16.mxu0 0
    %2287 = vmatpush1.bf16.msra.mxu0 0
    %2288 = vmatprep.subr.bf16.mxu0 0
    %2289 = vmatpush1.bf16.msra.mxu0 0
    %2290 = vmatprep.subr.bf16.mxu0 0
    %2291 = vmatpush1.bf16.msra.mxu0 0
    %2292 = vmatprep.subr.bf16.mxu0 0
    %2293 = vmatpush1.bf16.msra.mxu0 0
    %2294 = vmatprep.subr.bf16.mxu0 0
    %2295 = vmatpush1.bf16.msra.mxu0 0
    %2296 = vmatprep.subr.bf16.mxu0 0
    %2297 = vmatpush1.bf16.msra.mxu0 0
    %2298 = vmatprep.subr.bf16.mxu0 0
    %2299 = vmatpush1.bf16.msra.mxu0 0
    %2300 = vmatprep.subr.bf16.mxu0 0
    %2301 = vmatpush1.bf16.msra.mxu0 0
    %2302 = vmatprep.subr.bf16.mxu0 0
    %2303 = vmatpush1.bf16.msra.mxu0 0
    %2304 = vmatprep.subr.bf16.mxu0 0
    %2305 = vmatpush1.bf16.msra.mxu0 0
    %2306 = vmatprep.mubr.bf16.mxu0 0
    %2307 = vmatmul.mubr.bf16.gmra.mrb[0].mxu0 %v1792
    %v2308 = vpop.f32.mrb[0].mxu0
    %v2309 = vadd.f32 %v2269, %v2308
    %v2310 = vpop.f32.mrb[0].mxu0
    %v2311 = vpop.f32.mrb[0].mxu0
    %v2312 = vpop.f32.mrb[0].mxu0
    %2313 = vdwg.mxu0
    %v2314 = vmax.f32 %v2309, 0.0
    %v2315 = vpack.c.bf16 %v2314, %v2314
    %v2316 = vld [vmem:[%s3] sm:$0xf]
    %v2317 = vld [vmem:[%s3 + $0x4] sm:$0xf]
    %v2318 = vld [vmem:[%s3 + $0x8] sm:$0xf]
    %v2319 = vld [vmem:[%s3 + $0xc] sm:$0xf]
    %v2320 = vld [vmem:[%s3 + $0x10] sm:$0xf]
    %v2321 = vld [vmem:[%s3 + $0x14] sm:$0xf]
    %v2322 = vld [vmem:[%s3 + $0x18] sm:$0xf]
    %v2323 = vld [vmem:[%s3 + $0x1c] sm:$0xf]
    %v2324 = vld [vmem:[%s3 + $0x20] sm:$0xf]
    %v2325 = vld [vmem:[%s3 + $0x24] sm:$0xf]
    %v2326 = vld [vmem:[%s3 + $0x28] sm:$0xf]
    %v2327 = vld [vmem:[%s3 + $0x2c] sm:$0xf]
    %v2328 = vld [vmem:[%s3 + $0x30] sm:$0x3]
    %v2329 = vld [vmem:[%s4] sm:$0x1]
    %v2331 = vlaneseq
    %v2332 = vshrl.u32 %v2331, 7
    %v2333 = vsub.s32 0, %v2332
    %v2334 = vrot.slane %v2329, %v2333
    %v2349 = vunpack.c.l.b16 %v2316
    %v2350 = vunpack.c.l.b16 %v2317
    %v2351 = vunpack.c.l.b16 %v2318
    %v2352 = vunpack.c.l.b16 %v2319
    %v2353 = vunpack.c.l.b16 %v2320
    %v2354 = vunpack.c.l.b16 %v2321
    %v2355 = vunpack.c.l.b16 %v2322
    %v2356 = vunpack.c.l.b16 %v2323
    %v2357 = vunpack.c.l.b16 %v2324
    %v2358 = vunpack.c.l.b16 %v2325
    %v2359 = vunpack.c.l.b16 %v2326
    %v2360 = vunpack.c.l.b16 %v2327
    %v2361 = vunpack.c.l.b16 %v2328
    %v2362 = vpack.c.b16 %v2350, %v2349
    %v2363 = vpack.c.b16 %v2352, %v2351
    %v2364 = vpack.c.b16 %v2354, %v2353
    %v2365 = vpack.c.b16 %v2356, %v2355
    %v2366 = vpack.c.b16 %v2358, %v2357
    %v2367 = vpack.c.b16 %v2360, %v2359
    %v2368 = vpack.c.b16 %v2361, %v2361
    %vm2375 = vcmask 818176
    %v2377 = vsel %vm2375, %v2315, 0
    %vm2379 = vcmask 1041408
    %v2381 = vsel %vm2379, %v2368, 0
    %2383 = vmatprep.subr.bf16.mxu0 0
    %2384 = vmatpush1.bf16.msra.mxu0 %v2362
    %2385 = vmatprep.subr.bf16.mxu0 0
    %2386 = vmatpush1.bf16.msra.mxu0 %v2363
    %2387 = vmatprep.subr.bf16.mxu0 0
    %2388 = vmatpush1.bf16.msra.mxu0 %v2364
    %2389 = vmatprep.subr.bf16.mxu0 0
    %2390 = vmatpush1.bf16.msra.mxu0 %v2365
    %2391 = vmatprep.subr.bf16.mxu0 0
    %2392 = vmatpush1.bf16.msra.mxu0 %v2366
    %2393 = vmatprep.subr.bf16.mxu0 0
    %2394 = vmatpush1.bf16.msra.mxu0 %v2367
    %2395 = vmatprep.subr.bf16.mxu0 0
    %2396 = vmatpush1.bf16.msra.mxu0 %v2381
    %2397 = vmatprep.subr.bf16.mxu0 0
    %2398 = vmatpush1.bf16.msra.mxu0 0
    %2399 = vmatprep.subr.bf16.mxu0 0
    %2400 = vmatpush1.bf16.msra.mxu0 0
    %2401 = vmatprep.subr.bf16.mxu0 0
    %2402 = vmatpush1.bf16.msra.mxu0 0
    %2403 = vmatprep.subr.bf16.mxu0 0
    %2404 = vmatpush1.bf16.msra.mxu0 0
    %2405 = vmatprep.subr.bf16.mxu0 0
    %2406 = vmatpush1.bf16.msra.mxu0 0
    %2407 = vmatprep.subr.bf16.mxu0 0
    %2408 = vmatpush1.bf16.msra.mxu0 0
    %2409 = vmatprep.subr.bf16.mxu0 0
    %2410 = vmatpush1.bf16.msra.mxu0 0
    %2411 = vmatprep.subr.bf16.mxu0 0
    %2412 = vmatpush1.bf16.msra.mxu0 0
    %2413 = vmatprep.subr.bf16.mxu0 0
    %2414 = vmatpush1.bf16.msra.mxu0 0
    %2415 = vmatprep.mubr.bf16.mxu0 0
    %2416 = vmatmul.mubr.bf16.gmra.mrb[0].mxu0 %v2377
    %v2417 = vpop.f32.mrb[0].mxu0
    %v2418 = vadd.f32 %v2334, %v2417
    %v2419 = vpop.f32.mrb[0].mxu0
    %v2420 = vpop.f32.mrb[0].mxu0
    %v2421 = vpop.f32.mrb[0].mxu0
    %2422 = vdwg.mxu0
    %vm2423 = vcmask 74752
    %2424 = vst.msk [vmem:[#allocation2] sm:$0x3] %vm2423, %v2418
    // Predicated region
    $region22: #{forward.5} parent=1 // pred_check
      _
    $region23: #{forward.5} parent=1 // pred_check_branch
      %2426 = sbr.rel (0) target = $region25
    $region24: #{forward.5} parent=1 // pred_region
      %s2428 = ssub.s32 32, 32
      %2429 = vsyncadd [#allocation3], %s2428
      %s2431 = sshll.u32 [#allocation2], 4
      %s2432 = int_to_ptr.vmem [resolvable:$true] %s2431
      %2434 = dma.vmem_to_hbm [thread:$0]  %s2432, 32, %s5, [#allocation3]
    $region25: #{forward.5} parent=1 // pred_fallthru
      _
    // Predicated region
    $region26: #{forward.5} parent=1 // pred_check
      _
    $region27: #{forward.5} parent=1 // pred_check_branch
      %2436 = sbr.rel (0) target = $region29
    $region28: #{forward.5} parent=1 // pred_region
      %2437 = dma.done [#allocation3], 32
    $region29: #{forward.5} parent=1 // pred_fallthru
      _
    %2438 = vsyncpa [#allocation3], 1

</llo_original>
